<compile_context>
chip_gen: v7x
topology: tpu7x:2x2x1
jax: 0.10.0
libtpu: 0.0.40
codegen_flags: <defaults>
</compile_context>

<pallas_src>
import functools

import numpy as np
import jax
import jax.numpy as jnp
from jax import lax
from jax.experimental import pallas as pl
from jax.experimental.pallas import tpu as pltpu

K = 5          # conv kernel size
LANE = 128     # TPU lane width
BT = 8         # images per grid step (batch tile)
H1, SR1 = 32, 16           # conv1 input rows / super-rows (2 rows per super-row)
POH1, POW1 = 14, 14        # conv1 pooled output height/width
POH2, POW2 = 5, 5          # conv2 pooled output height/width
VMEM_LIMIT = 32 * 1024 * 1024


# ---------------------------------------------------------------------------
# The fused kernel (one batch tile of BT images per grid step)
# ---------------------------------------------------------------------------

def _lenet_kernel(x_ref, c1w_ref, c1b_ref, c2w_ref, c2b_ref,
                  w1_ref, b1_ref, w2_ref, b2_ref, w3_ref, b3_ref, o_ref):
    f32 = jnp.float32

    # ---- conv1 + bias + ReLU + 2x2 maxpool ---------------------------------
    # x_ref[0]: (SR1*BT, 256) bf16, row = superrow*BT + image, lane = rp*128 + c*32 + w
    X = x_ref[0]
    pooled1 = None
    for dh in range(2):                      # pooled-row parity (vertical pool half)
        acc = None
        for p in range(3):                   # super-row window offset (banded conv)
            y = jnp.dot(X, c1w_ref[dh, p], preferred_element_type=f32)  # (SR1*BT, 256)
            yw = y[p * BT:(p + POH1) * BT, :]                            # (POH1*BT, 256)
            acc = yw if acc is None else acc + yw
        q = jnp.maximum(acc[:, :LANE], acc[:, LANE:])   # horizontal pool (dw halves)
        pooled1 = q if pooled1 is None else jnp.maximum(pooled1, q)
    # relu(max(conv)+b) == maxpool(relu(conv+b)): relu and (+b) are monotone.
    act1 = jnp.maximum(pooled1 + c1b_ref[...], 0.0)     # (POH1*BT, 128) f32
    # act1 row = pooled_row*BT + image, lane = c*14 + w  (lanes 84..127 are zero)

    # ---- conv2 + bias + ReLU + 2x2 maxpool ---------------------------------
    acc0 = None   # even conv rows (dh = 0)
    acc1 = None   # odd  conv rows (dh = 1)
    for s in range(K + 1):                   # absolute row offset s = dh + kh
        lhs = jnp.concatenate(
            [act1[(s + 2 * j) * BT:(s + 2 * j + 1) * BT, :] for j in range(POH2)],
            axis=0).astype(jnp.bfloat16)     # (POH2*BT, 128)
        if s < K:
            y = jnp.dot(lhs, c2w_ref[s], preferred_element_type=f32)      # kh = s
            acc0 = y if acc0 is None else acc0 + y
        if s > 0:
            y = jnp.dot(lhs, c2w_ref[s - 1], preferred_element_type=f32)  # kh = s-1
            acc1 = y if acc1 is None else acc1 + y
    pooled2 = jnp.maximum(jnp.maximum(acc0[:, :LANE], acc0[:, LANE:]),
                          jnp.maximum(acc1[:, :LANE], acc1[:, LANE:]))
    act2 = jnp.maximum(pooled2 + c2b_ref[...], 0.0).astype(jnp.bfloat16)  # (POH2*BT,128)
    # act2 row = pooled_row*BT + image, lane = f*5 + w

    # ---- MLP head: fc1 + relu, fc2 + relu, fc3 -----------------------------
    h = None
    for r in range(POH2):                    # banded fc1 (flatten folded into weights)
        t = jnp.dot(act2[r * BT:(r + 1) * BT, :], w1_ref[r],
                    preferred_element_type=f32)          # (BT, 128)
        h = t if h is None else h + t
    h = jnp.maximum(h + b1_ref[...], 0.0).astype(jnp.bfloat16)
    h = jnp.dot(h, w2_ref[...], preferred_element_type=f32) + b2_ref[...]
    h = jnp.maximum(h, 0.0).astype(jnp.bfloat16)
    o_ref[...] = jnp.dot(h, w3_ref[...], preferred_element_type=f32) + b3_ref[...]


# ---------------------------------------------------------------------------
# pallas_call wrapper
# ---------------------------------------------------------------------------

def lenet_pallas(xt, kp, ntiles):
    return pl.pallas_call(
        _lenet_kernel,
        out_shape=jax.ShapeDtypeStruct((ntiles * BT, LANE), jnp.float32),
        grid=(ntiles,),
        in_specs=[
            pl.BlockSpec((1, SR1 * BT, 2 * LANE), lambda i: (i, 0, 0)),
            # all weights/biases: constant index_map -> VMEM-resident across the grid
            pl.BlockSpec(kp["c1_w"].shape, lambda i: (0, 0, 0, 0)),
            pl.BlockSpec(kp["c1_b"].shape, lambda i: (0, 0)),
            pl.BlockSpec(kp["c2_w"].shape, lambda i: (0, 0, 0)),
            pl.BlockSpec(kp["c2_b"].shape, lambda i: (0, 0)),
            pl.BlockSpec(kp["fc1_w"].shape, lambda i: (0, 0, 0)),
            pl.BlockSpec(kp["fc1_b"].shape, lambda i: (0, 0)),
            pl.BlockSpec(kp["fc2_w"].shape, lambda i: (0, 0)),
            pl.BlockSpec(kp["fc2_b"].shape, lambda i: (0, 0)),
            pl.BlockSpec(kp["fc3_w"].shape, lambda i: (0, 0)),
            pl.BlockSpec(kp["fc3_b"].shape, lambda i: (0, 0)),
        ],
        out_specs=pl.BlockSpec((BT, LANE), lambda i: (i, 0)),
        compiler_params=pltpu.CompilerParams(
            dimension_semantics=("parallel",),
            vmem_limit_bytes=VMEM_LIMIT,
        ),
    )(xt, kp["c1_w"], kp["c1_b"], kp["c2_w"], kp["c2_b"],
      kp["fc1_w"], kp["fc1_b"], kp["fc2_w"], kp["fc2_b"],
      kp["fc3_w"], kp["fc3_b"])


# ---------------------------------------------------------------------------
# One-time (host-side) parameter preparation from PyTorch-layout weights
# ---------------------------------------------------------------------------

def _conv1_banded(w, b):
    """conv1 banded weights: (dh, p, in_lane, out_lane).

    in_lane  = rp*128 + c*32 + w_col   (super-row layout, two image rows per row)
    out_lane = dw*128 + f*14 + pw      (pool-column parity folded into lanes)
    entry    = w[f, c, 2p+rp-dh, w_col-(2pw+dw)]   when both kernel indices are valid.
    """
    w = np.asarray(w, np.float32)
    b = np.asarray(b, np.float32)
    cout, cin = w.shape[0], w.shape[1]
    wb = np.zeros((2, 3, 2 * LANE, 2 * LANE), np.float32)
    for dh in range(2):
        for p in range(3):
            for rp in range(2):
                kh = 2 * p + rp - dh
                if not (0 <= kh < K):
                    continue
                for f in range(cout):
                    for c in range(cin):
                        for kw in range(K):
                            for dw in range(2):
                                for pw in range(POW1):
                                    wcol = 2 * pw + dw + kw
                                    wb[dh, p, rp * LANE + c * 32 + wcol,
                                       dw * LANE + f * POW1 + pw] = w[f, c, kh, kw]
    bt = np.zeros((1, LANE), np.float32)
    for f in range(cout):
        bt[0, f * POW1:(f + 1) * POW1] = b[f]
    return jnp.asarray(wb, jnp.bfloat16), jnp.asarray(bt)


def _conv2_banded(w, b):
    """conv2 banded weights: (kh, in_lane=c*14+w_col, out_lane=dw*128+f*5+pw)."""
    w = np.asarray(w, np.float32)
    b = np.asarray(b, np.float32)
    cout, cin = w.shape[0], w.shape[1]
    wb = np.zeros((K, LANE, 2 * LANE), np.float32)
    for kh in range(K):
        for f in range(cout):
            for c in range(cin):
                for kw in range(K):
                    for dw in range(2):
                        for pw in range(POW2):
                            wcol = 2 * pw + dw + kw
                            wb[kh, c * POW1 + wcol,
                               dw * LANE + f * POW2 + pw] = w[f, c, kh, kw]
    bt = np.zeros((1, LANE), np.float32)
    for f in range(cout):
        bt[0, f * POW2:(f + 1) * POW2] = b[f]
    return jnp.asarray(wb, jnp.bfloat16), jnp.asarray(bt)


def _prepare_head(p, num_classes):
    assert num_classes <= LANE
    d1, d2 = 120, 84
    w1t = np.asarray(p["fc1_w"], np.float32)     # (120, 400), torch idx = f*25 + h*5 + w
    # Fold the NCHW .view(N,-1) flatten permutation + conv2 lane layout into fc1 rows:
    # kernel layout uses (h, lane=f*5+w), so fc1 becomes 5 banded (128,128) matmuls.
    w1 = np.zeros((POH2, LANE, LANE), np.float32)
    for h in range(POH2):
        for f in range(16):
            for w in range(5):
                w1[h, f * POW2 + w, :d1] = w1t[:, f * 25 + h * 5 + w]
    b1 = np.zeros((1, LANE), np.float32); b1[0, :d1] = np.asarray(p["fc1_b"], np.float32)
    w2 = np.zeros((LANE, LANE), np.float32)
    w2[:d1, :d2] = np.asarray(p["fc2_w"], np.float32).T
    b2 = np.zeros((1, LANE), np.float32); b2[0, :d2] = np.asarray(p["fc2_b"], np.float32)
    w3 = np.zeros((LANE, LANE), np.float32)
    w3[:d2, :num_classes] = np.asarray(p["fc3_w"], np.float32).T
    b3 = np.zeros((1, LANE), np.float32)
    b3[0, :num_classes] = np.asarray(p["fc3_b"], np.float32)
    return (jnp.asarray(w1, jnp.bfloat16), jnp.asarray(b1),
            jnp.asarray(w2, jnp.bfloat16), jnp.asarray(b2),
            jnp.asarray(w3, jnp.bfloat16), jnp.asarray(b3))


def prepare_kernel_params(p, num_classes):
    c1_w, c1_b = _conv1_banded(p["conv1_w"], p["conv1_b"])
    c2_w, c2_b = _conv2_banded(p["conv2_w"], p["conv2_b"])
    fc1_w, fc1_b, fc2_w, fc2_b, fc3_w, fc3_b = _prepare_head(p, num_classes)
    return dict(c1_w=c1_w, c1_b=c1_b, c2_w=c2_w, c2_b=c2_b,
                fc1_w=fc1_w, fc1_b=fc1_b, fc2_w=fc2_w, fc2_b=fc2_b,
                fc3_w=fc3_w, fc3_b=fc3_b)


# ---------------------------------------------------------------------------
# Forward pass
# ---------------------------------------------------------------------------

@functools.partial(jax.jit, static_argnames=("num_classes",))
def lenet_forward(x_nchw, kp, num_classes):
    n = x_nchw.shape[0]
    ntiles = (n + BT - 1) // BT
    npad = ntiles * BT
    x = x_nchw.astype(jnp.float32)
    if npad != n:                               # pad batch to the tile size
        x = jnp.pad(x, ((0, npad - n), (0, 0), (0, 0), (0, 0)))
    # NCHW -> super-row layout: block row = superrow*BT + image, lane = rp*128 + c*32 + w.
    xt = jnp.transpose(x, (2, 0, 1, 3)).reshape(H1, npad, 3 * 32)
    xt = jnp.pad(xt, ((0, 0), (0, 0), (0, LANE - 3 * 32)))        # pad lanes 96 -> 128
    xt = xt.reshape(SR1, 2, ntiles, BT, LANE)
    xt = jnp.transpose(xt, (2, 0, 3, 1, 4)).reshape(ntiles, SR1 * BT, 2 * LANE)
    xt = xt.astype(jnp.bfloat16)
    out = lenet_pallas(xt, kp, ntiles)
    return out[:n, :num_classes]


# ---------------------------------------------------------------------------
# PyTorch-layout init + pure-JAX reference (numerical sanity check)
# ---------------------------------------------------------------------------

def init_torch_params(key, num_classes):
    ks = jax.random.split(key, 10)

    def rn(k, shape, scale):
        return jax.random.normal(k, shape, dtype=jnp.float32) * scale

    return {
        "conv1_w": rn(ks[0], (6, 3, 5, 5), 0.1),
        "conv1_b": rn(ks[1], (6,), 0.1),
        "conv2_w": rn(ks[2], (16, 6, 5, 5), 0.05),
        "conv2_b": rn(ks[3], (16,), 0.1),
        "fc1_w":   rn(ks[4], (120, 16 * 5 * 5), 0.05),
        "fc1_b":   rn(ks[5], (120,), 0.1),
        "fc2_w":   rn(ks[6], (84, 120), 0.05),
        "fc2_b":   rn(ks[7], (84,), 0.1),
        "fc3_w":   rn(ks[8], (num_classes, 84), 0.05),
        "fc3_b":   rn(ks[9], (num_classes,), 0.1),
    }


def lenet_reference(x, p):
    x = x.astype(jnp.float32)
    h = lax.conv_general_dilated(x, p["conv1_w"], (1, 1), "VALID",
                                 dimension_numbers=("NCHW", "OIHW", "NCHW"))
    h = jax.nn.relu(h + p["conv1_b"][None, :, None, None])
    h = lax.reduce_window(h, -jnp.inf, lax.max, (1, 1, 2, 2), (1, 1, 2, 2), "VALID")
    h = lax.conv_general_dilated(h, p["conv2_w"], (1, 1), "VALID",
                                 dimension_numbers=("NCHW", "OIHW", "NCHW"))
    h = jax.nn.relu(h + p["conv2_b"][None, :, None, None])
    h = lax.reduce_window(h, -jnp.inf, lax.max, (1, 1, 2, 2), (1, 1, 2, 2), "VALID")
    h = h.reshape(h.shape[0], -1)
    h = jax.nn.relu(h @ p["fc1_w"].T + p["fc1_b"])
    h = jax.nn.relu(h @ p["fc2_w"].T + p["fc2_b"])
    return h @ p["fc3_w"].T + p["fc3_b"]


if __name__ == "__main__":
    num_classes = 10
    key = jax.random.PRNGKey(0)
    k_in, k_par = jax.random.split(key)

    # LeNet's fc1 (16*5*5) fixes the input to 3x32x32.
    x = jax.random.normal(k_in, (2, 3, 32, 32), dtype=jnp.float32)
    torch_params = init_torch_params(k_par, num_classes)
    kparams = prepare_kernel_params(torch_params, num_classes)

    out = lenet_forward(x, kparams, num_classes)
    out = jax.block_until_ready(out)
    assert out.shape == (2, num_classes), out.shape

    # Numerical sanity check against a pure-JAX (XLA, f32) LeNet reference.
    ref = jax.block_until_ready(lenet_reference(x, torch_params))
    np.testing.assert_allclose(np.asarray(out), np.asarray(ref), rtol=5e-2, atol=5e-2)

    print("KERNEL_OK")
</pallas_src>

<mosaic_0001>
module attributes {stable_mosaic.version = 11 : i64} {
  func.func @_lenet_kernel(%arg0: i32, %arg1: memref<1x128x256xbf16, #tpu.memory_space<vmem>>, %arg2: memref<2x3x256x256xbf16, #tpu.memory_space<vmem>>, %arg3: memref<1x128xf32, #tpu.memory_space<vmem>>, %arg4: memref<5x128x256xbf16, #tpu.memory_space<vmem>>, %arg5: memref<1x128xf32, #tpu.memory_space<vmem>>, %arg6: memref<5x128x128xbf16, #tpu.memory_space<vmem>>, %arg7: memref<1x128xf32, #tpu.memory_space<vmem>>, %arg8: memref<128x128xbf16, #tpu.memory_space<vmem>>, %arg9: memref<1x128xf32, #tpu.memory_space<vmem>>, %arg10: memref<128x128xbf16, #tpu.memory_space<vmem>>, %arg11: memref<1x128xf32, #tpu.memory_space<vmem>>, %arg12: memref<8x128xf32, #tpu.memory_space<vmem>>) attributes {dimension_semantics = [#tpu.dimension_semantics<parallel>], iteration_bounds = array<i64: 1>, scalar_prefetch = 0 : i64, scratch_operands = 0 : i64, tpu.core_type = #tpu.core_type<tc>, window_params = [{transform_indices = @transform_0, window_bounds = array<i64: 1, 128, 256>}, {pipeline_mode = #tpu.pipeline_mode<synchronous>, transform_indices = @transform_1, window_bounds = array<i64: 2, 3, 256, 256>}, {pipeline_mode = #tpu.pipeline_mode<synchronous>, transform_indices = @transform_2, window_bounds = array<i64: 1, 128>}, {pipeline_mode = #tpu.pipeline_mode<synchronous>, transform_indices = @transform_3, window_bounds = array<i64: 5, 128, 256>}, {pipeline_mode = #tpu.pipeline_mode<synchronous>, transform_indices = @transform_4, window_bounds = array<i64: 1, 128>}, {pipeline_mode = #tpu.pipeline_mode<synchronous>, transform_indices = @transform_5, window_bounds = array<i64: 5, 128, 128>}, {pipeline_mode = #tpu.pipeline_mode<synchronous>, transform_indices = @transform_6, window_bounds = array<i64: 1, 128>}, {pipeline_mode = #tpu.pipeline_mode<synchronous>, transform_indices = @transform_7, window_bounds = array<i64: 128, 128>}, {pipeline_mode = #tpu.pipeline_mode<synchronous>, transform_indices = @transform_8, window_bounds = array<i64: 1, 128>}, {pipeline_mode = #tpu.pipeline_mode<synchronous>, transform_indices = @transform_9, window_bounds = array<i64: 128, 128>}, {pipeline_mode = #tpu.pipeline_mode<synchronous>, transform_indices = @transform_10, window_bounds = array<i64: 1, 128>}, {transform_indices = @transform_11, window_bounds = array<i64: 8, 128>}]} {
    %c0 = arith.constant 0 : index
    %c0_0 = arith.constant 0 : index
    %c0_1 = arith.constant 0 : index
    %0 = vector.load %arg1[%c0, %c0_0, %c0_1] : memref<1x128x256xbf16, #tpu.memory_space<vmem>>, vector<1x128x256xbf16>
    %1 = vector.shape_cast %0 : vector<1x128x256xbf16> to vector<128x256xbf16>
    %c0_2 = arith.constant 0 : index
    %c0_3 = arith.constant 0 : index
    %c0_4 = arith.constant 0 : index
    %c0_5 = arith.constant 0 : index
    %2 = vector.load %arg2[%c0_2, %c0_3, %c0_4, %c0_5] : memref<2x3x256x256xbf16, #tpu.memory_space<vmem>>, vector<1x1x256x256xbf16>
    %3 = vector.shape_cast %2 : vector<1x1x256x256xbf16> to vector<256x256xbf16>
    %cst = arith.constant dense<0.000000e+00> : vector<128x256xf32>
    %4 = tpu.matmul %1, %3, %cst {dimension_numbers = #tpu.dot_dimension_numbers<[1], [0], [0], [1], [0, 0, 1, 1], [], []>} : vector<128x256xbf16>, vector<256x256xbf16>, vector<128x256xf32> -> vector<128x256xf32>
    %5 = vector.extract_strided_slice %4 {offsets = [0, 0], sizes = [112, 256], strides = [1, 1]} : vector<128x256xf32> to vector<112x256xf32>
    %c0_6 = arith.constant 0 : index
    %c1 = arith.constant 1 : index
    %c0_7 = arith.constant 0 : index
    %c0_8 = arith.constant 0 : index
    %6 = vector.load %arg2[%c0_6, %c1, %c0_7, %c0_8] : memref<2x3x256x256xbf16, #tpu.memory_space<vmem>>, vector<1x1x256x256xbf16>
    %7 = vector.shape_cast %6 : vector<1x1x256x256xbf16> to vector<256x256xbf16>
    %cst_9 = arith.constant dense<0.000000e+00> : vector<128x256xf32>
    %8 = tpu.matmul %1, %7, %cst_9 {dimension_numbers = #tpu.dot_dimension_numbers<[1], [0], [0], [1], [0, 0, 1, 1], [], []>} : vector<128x256xbf16>, vector<256x256xbf16>, vector<128x256xf32> -> vector<128x256xf32>
    %9 = vector.extract_strided_slice %8 {offsets = [8, 0], sizes = [112, 256], strides = [1, 1]} : vector<128x256xf32> to vector<112x256xf32>
    %10 = arith.addf %5, %9 : vector<112x256xf32>
    %c0_10 = arith.constant 0 : index
    %c2 = arith.constant 2 : index
    %c0_11 = arith.constant 0 : index
    %c0_12 = arith.constant 0 : index
    %11 = vector.load %arg2[%c0_10, %c2, %c0_11, %c0_12] : memref<2x3x256x256xbf16, #tpu.memory_space<vmem>>, vector<1x1x256x256xbf16>
    %12 = vector.shape_cast %11 : vector<1x1x256x256xbf16> to vector<256x256xbf16>
    %cst_13 = arith.constant dense<0.000000e+00> : vector<128x256xf32>
    %13 = tpu.matmul %1, %12, %cst_13 {dimension_numbers = #tpu.dot_dimension_numbers<[1], [0], [0], [1], [0, 0, 1, 1], [], []>} : vector<128x256xbf16>, vector<256x256xbf16>, vector<128x256xf32> -> vector<128x256xf32>
    %14 = vector.extract_strided_slice %13 {offsets = [16, 0], sizes = [112, 256], strides = [1, 1]} : vector<128x256xf32> to vector<112x256xf32>
    %15 = arith.addf %10, %14 : vector<112x256xf32>
    %16 = vector.extract_strided_slice %15 {offsets = [0, 0], sizes = [112, 128], strides = [1, 1]} : vector<112x256xf32> to vector<112x128xf32>
    %17 = vector.extract_strided_slice %15 {offsets = [0, 128], sizes = [112, 128], strides = [1, 1]} : vector<112x256xf32> to vector<112x128xf32>
    %18 = arith.maximumf %16, %17 : vector<112x128xf32>
    %c1_14 = arith.constant 1 : index
    %c0_15 = arith.constant 0 : index
    %c0_16 = arith.constant 0 : index
    %c0_17 = arith.constant 0 : index
    %19 = vector.load %arg2[%c1_14, %c0_15, %c0_16, %c0_17] : memref<2x3x256x256xbf16, #tpu.memory_space<vmem>>, vector<1x1x256x256xbf16>
    %20 = vector.shape_cast %19 : vector<1x1x256x256xbf16> to vector<256x256xbf16>
    %cst_18 = arith.constant dense<0.000000e+00> : vector<128x256xf32>
    %21 = tpu.matmul %1, %20, %cst_18 {dimension_numbers = #tpu.dot_dimension_numbers<[1], [0], [0], [1], [0, 0, 1, 1], [], []>} : vector<128x256xbf16>, vector<256x256xbf16>, vector<128x256xf32> -> vector<128x256xf32>
    %22 = vector.extract_strided_slice %21 {offsets = [0, 0], sizes = [112, 256], strides = [1, 1]} : vector<128x256xf32> to vector<112x256xf32>
    %c1_19 = arith.constant 1 : index
    %c1_20 = arith.constant 1 : index
    %c0_21 = arith.constant 0 : index
    %c0_22 = arith.constant 0 : index
    %23 = vector.load %arg2[%c1_19, %c1_20, %c0_21, %c0_22] : memref<2x3x256x256xbf16, #tpu.memory_space<vmem>>, vector<1x1x256x256xbf16>
    %24 = vector.shape_cast %23 : vector<1x1x256x256xbf16> to vector<256x256xbf16>
    %cst_23 = arith.constant dense<0.000000e+00> : vector<128x256xf32>
    %25 = tpu.matmul %1, %24, %cst_23 {dimension_numbers = #tpu.dot_dimension_numbers<[1], [0], [0], [1], [0, 0, 1, 1], [], []>} : vector<128x256xbf16>, vector<256x256xbf16>, vector<128x256xf32> -> vector<128x256xf32>
    %26 = vector.extract_strided_slice %25 {offsets = [8, 0], sizes = [112, 256], strides = [1, 1]} : vector<128x256xf32> to vector<112x256xf32>
    %27 = arith.addf %22, %26 : vector<112x256xf32>
    %c1_24 = arith.constant 1 : index
    %c2_25 = arith.constant 2 : index
    %c0_26 = arith.constant 0 : index
    %c0_27 = arith.constant 0 : index
    %28 = vector.load %arg2[%c1_24, %c2_25, %c0_26, %c0_27] : memref<2x3x256x256xbf16, #tpu.memory_space<vmem>>, vector<1x1x256x256xbf16>
    %29 = vector.shape_cast %28 : vector<1x1x256x256xbf16> to vector<256x256xbf16>
    %cst_28 = arith.constant dense<0.000000e+00> : vector<128x256xf32>
    %30 = tpu.matmul %1, %29, %cst_28 {dimension_numbers = #tpu.dot_dimension_numbers<[1], [0], [0], [1], [0, 0, 1, 1], [], []>} : vector<128x256xbf16>, vector<256x256xbf16>, vector<128x256xf32> -> vector<128x256xf32>
    %31 = vector.extract_strided_slice %30 {offsets = [16, 0], sizes = [112, 256], strides = [1, 1]} : vector<128x256xf32> to vector<112x256xf32>
    %32 = arith.addf %27, %31 : vector<112x256xf32>
    %33 = vector.extract_strided_slice %32 {offsets = [0, 0], sizes = [112, 128], strides = [1, 1]} : vector<112x256xf32> to vector<112x128xf32>
    %34 = vector.extract_strided_slice %32 {offsets = [0, 128], sizes = [112, 128], strides = [1, 1]} : vector<112x256xf32> to vector<112x128xf32>
    %35 = arith.maximumf %33, %34 : vector<112x128xf32>
    %36 = arith.maximumf %18, %35 : vector<112x128xf32>
    %c0_29 = arith.constant 0 : index
    %c0_30 = arith.constant 0 : index
    %37 = vector.load %arg3[%c0_29, %c0_30] : memref<1x128xf32, #tpu.memory_space<vmem>>, vector<1x128xf32>
    %38 = vector.broadcast %37 : vector<1x128xf32> to vector<112x128xf32>
    %39 = arith.addf %36, %38 : vector<112x128xf32>
    %cst_31 = arith.constant 0.000000e+00 : f32
    %40 = vector.broadcast %cst_31 : f32 to vector<112x128xf32>
    %41 = arith.maximumf %39, %40 : vector<112x128xf32>
    %42 = vector.extract_strided_slice %41 {offsets = [0, 0], sizes = [8, 128], strides = [1, 1]} : vector<112x128xf32> to vector<8x128xf32>
    %43 = vector.extract_strided_slice %41 {offsets = [16, 0], sizes = [8, 128], strides = [1, 1]} : vector<112x128xf32> to vector<8x128xf32>
    %44 = vector.extract_strided_slice %41 {offsets = [32, 0], sizes = [8, 128], strides = [1, 1]} : vector<112x128xf32> to vector<8x128xf32>
    %45 = vector.extract_strided_slice %41 {offsets = [48, 0], sizes = [8, 128], strides = [1, 1]} : vector<112x128xf32> to vector<8x128xf32>
    %46 = vector.extract_strided_slice %41 {offsets = [64, 0], sizes = [8, 128], strides = [1, 1]} : vector<112x128xf32> to vector<8x128xf32>
    %47 = tpu.concatenate %42, %43, %44, %45, %46 in 0 : vector<8x128xf32>, vector<8x128xf32>, vector<8x128xf32>, vector<8x128xf32>, vector<8x128xf32> -> vector<40x128xf32>
    %48 = arith.truncf %47 : vector<40x128xf32> to vector<40x128xbf16>
    %c0_32 = arith.constant 0 : index
    %c0_33 = arith.constant 0 : index
    %c0_34 = arith.constant 0 : index
    %49 = vector.load %arg4[%c0_32, %c0_33, %c0_34] : memref<5x128x256xbf16, #tpu.memory_space<vmem>>, vector<1x128x256xbf16>
    %50 = vector.shape_cast %49 : vector<1x128x256xbf16> to vector<128x256xbf16>
    %cst_35 = arith.constant dense<0.000000e+00> : vector<40x256xf32>
    %51 = tpu.matmul %48, %50, %cst_35 {dimension_numbers = #tpu.dot_dimension_numbers<[1], [0], [0], [1], [0, 0, 1, 1], [], []>} : vector<40x128xbf16>, vector<128x256xbf16>, vector<40x256xf32> -> vector<40x256xf32>
    %52 = vector.extract_strided_slice %41 {offsets = [8, 0], sizes = [8, 128], strides = [1, 1]} : vector<112x128xf32> to vector<8x128xf32>
    %53 = vector.extract_strided_slice %41 {offsets = [24, 0], sizes = [8, 128], strides = [1, 1]} : vector<112x128xf32> to vector<8x128xf32>
    %54 = vector.extract_strided_slice %41 {offsets = [40, 0], sizes = [8, 128], strides = [1, 1]} : vector<112x128xf32> to vector<8x128xf32>
    %55 = vector.extract_strided_slice %41 {offsets = [56, 0], sizes = [8, 128], strides = [1, 1]} : vector<112x128xf32> to vector<8x128xf32>
    %56 = vector.extract_strided_slice %41 {offsets = [72, 0], sizes = [8, 128], strides = [1, 1]} : vector<112x128xf32> to vector<8x128xf32>
    %57 = tpu.concatenate %52, %53, %54, %55, %56 in 0 : vector<8x128xf32>, vector<8x128xf32>, vector<8x128xf32>, vector<8x128xf32>, vector<8x128xf32> -> vector<40x128xf32>
    %58 = arith.truncf %57 : vector<40x128xf32> to vector<40x128xbf16>
    %c1_36 = arith.constant 1 : index
    %c0_37 = arith.constant 0 : index
    %c0_38 = arith.constant 0 : index
    %59 = vector.load %arg4[%c1_36, %c0_37, %c0_38] : memref<5x128x256xbf16, #tpu.memory_space<vmem>>, vector<1x128x256xbf16>
    %60 = vector.shape_cast %59 : vector<1x128x256xbf16> to vector<128x256xbf16>
    %cst_39 = arith.constant dense<0.000000e+00> : vector<40x256xf32>
    %61 = tpu.matmul %58, %60, %cst_39 {dimension_numbers = #tpu.dot_dimension_numbers<[1], [0], [0], [1], [0, 0, 1, 1], [], []>} : vector<40x128xbf16>, vector<128x256xbf16>, vector<40x256xf32> -> vector<40x256xf32>
    %62 = arith.addf %51, %61 : vector<40x256xf32>
    %c0_40 = arith.constant 0 : index
    %c0_41 = arith.constant 0 : index
    %c0_42 = arith.constant 0 : index
    %63 = vector.load %arg4[%c0_40, %c0_41, %c0_42] : memref<5x128x256xbf16, #tpu.memory_space<vmem>>, vector<1x128x256xbf16>
    %64 = vector.shape_cast %63 : vector<1x128x256xbf16> to vector<128x256xbf16>
    %cst_43 = arith.constant dense<0.000000e+00> : vector<40x256xf32>
    %65 = tpu.matmul %58, %64, %cst_43 {dimension_numbers = #tpu.dot_dimension_numbers<[1], [0], [0], [1], [0, 0, 1, 1], [], []>} : vector<40x128xbf16>, vector<128x256xbf16>, vector<40x256xf32> -> vector<40x256xf32>
    %66 = vector.extract_strided_slice %41 {offsets = [16, 0], sizes = [8, 128], strides = [1, 1]} : vector<112x128xf32> to vector<8x128xf32>
    %67 = vector.extract_strided_slice %41 {offsets = [32, 0], sizes = [8, 128], strides = [1, 1]} : vector<112x128xf32> to vector<8x128xf32>
    %68 = vector.extract_strided_slice %41 {offsets = [48, 0], sizes = [8, 128], strides = [1, 1]} : vector<112x128xf32> to vector<8x128xf32>
    %69 = vector.extract_strided_slice %41 {offsets = [64, 0], sizes = [8, 128], strides = [1, 1]} : vector<112x128xf32> to vector<8x128xf32>
    %70 = vector.extract_strided_slice %41 {offsets = [80, 0], sizes = [8, 128], strides = [1, 1]} : vector<112x128xf32> to vector<8x128xf32>
    %71 = tpu.concatenate %66, %67, %68, %69, %70 in 0 : vector<8x128xf32>, vector<8x128xf32>, vector<8x128xf32>, vector<8x128xf32>, vector<8x128xf32> -> vector<40x128xf32>
    %72 = arith.truncf %71 : vector<40x128xf32> to vector<40x128xbf16>
    %c2_44 = arith.constant 2 : index
    %c0_45 = arith.constant 0 : index
    %c0_46 = arith.constant 0 : index
    %73 = vector.load %arg4[%c2_44, %c0_45, %c0_46] : memref<5x128x256xbf16, #tpu.memory_space<vmem>>, vector<1x128x256xbf16>
    %74 = vector.shape_cast %73 : vector<1x128x256xbf16> to vector<128x256xbf16>
    %cst_47 = arith.constant dense<0.000000e+00> : vector<40x256xf32>
    %75 = tpu.matmul %72, %74, %cst_47 {dimension_numbers = #tpu.dot_dimension_numbers<[1], [0], [0], [1], [0, 0, 1, 1], [], []>} : vector<40x128xbf16>, vector<128x256xbf16>, vector<40x256xf32> -> vector<40x256xf32>
    %76 = arith.addf %62, %75 : vector<40x256xf32>
    %c1_48 = arith.constant 1 : index
    %c0_49 = arith.constant 0 : index
    %c0_50 = arith.constant 0 : index
    %77 = vector.load %arg4[%c1_48, %c0_49, %c0_50] : memref<5x128x256xbf16, #tpu.memory_space<vmem>>, vector<1x128x256xbf16>
    %78 = vector.shape_cast %77 : vector<1x128x256xbf16> to vector<128x256xbf16>
    %cst_51 = arith.constant dense<0.000000e+00> : vector<40x256xf32>
    %79 = tpu.matmul %72, %78, %cst_51 {dimension_numbers = #tpu.dot_dimension_numbers<[1], [0], [0], [1], [0, 0, 1, 1], [], []>} : vector<40x128xbf16>, vector<128x256xbf16>, vector<40x256xf32> -> vector<40x256xf32>
    %80 = arith.addf %65, %79 : vector<40x256xf32>
    %81 = vector.extract_strided_slice %41 {offsets = [24, 0], sizes = [8, 128], strides = [1, 1]} : vector<112x128xf32> to vector<8x128xf32>
    %82 = vector.extract_strided_slice %41 {offsets = [40, 0], sizes = [8, 128], strides = [1, 1]} : vector<112x128xf32> to vector<8x128xf32>
    %83 = vector.extract_strided_slice %41 {offsets = [56, 0], sizes = [8, 128], strides = [1, 1]} : vector<112x128xf32> to vector<8x128xf32>
    %84 = vector.extract_strided_slice %41 {offsets = [72, 0], sizes = [8, 128], strides = [1, 1]} : vector<112x128xf32> to vector<8x128xf32>
    %85 = vector.extract_strided_slice %41 {offsets = [88, 0], sizes = [8, 128], strides = [1, 1]} : vector<112x128xf32> to vector<8x128xf32>
    %86 = tpu.concatenate %81, %82, %83, %84, %85 in 0 : vector<8x128xf32>, vector<8x128xf32>, vector<8x128xf32>, vector<8x128xf32>, vector<8x128xf32> -> vector<40x128xf32>
    %87 = arith.truncf %86 : vector<40x128xf32> to vector<40x128xbf16>
    %c3 = arith.constant 3 : index
    %c0_52 = arith.constant 0 : index
    %c0_53 = arith.constant 0 : index
    %88 = vector.load %arg4[%c3, %c0_52, %c0_53] : memref<5x128x256xbf16, #tpu.memory_space<vmem>>, vector<1x128x256xbf16>
    %89 = vector.shape_cast %88 : vector<1x128x256xbf16> to vector<128x256xbf16>
    %cst_54 = arith.constant dense<0.000000e+00> : vector<40x256xf32>
    %90 = tpu.matmul %87, %89, %cst_54 {dimension_numbers = #tpu.dot_dimension_numbers<[1], [0], [0], [1], [0, 0, 1, 1], [], []>} : vector<40x128xbf16>, vector<128x256xbf16>, vector<40x256xf32> -> vector<40x256xf32>
    %91 = arith.addf %76, %90 : vector<40x256xf32>
    %c2_55 = arith.constant 2 : index
    %c0_56 = arith.constant 0 : index
    %c0_57 = arith.constant 0 : index
    %92 = vector.load %arg4[%c2_55, %c0_56, %c0_57] : memref<5x128x256xbf16, #tpu.memory_space<vmem>>, vector<1x128x256xbf16>
    %93 = vector.shape_cast %92 : vector<1x128x256xbf16> to vector<128x256xbf16>
    %cst_58 = arith.constant dense<0.000000e+00> : vector<40x256xf32>
    %94 = tpu.matmul %87, %93, %cst_58 {dimension_numbers = #tpu.dot_dimension_numbers<[1], [0], [0], [1], [0, 0, 1, 1], [], []>} : vector<40x128xbf16>, vector<128x256xbf16>, vector<40x256xf32> -> vector<40x256xf32>
    %95 = arith.addf %80, %94 : vector<40x256xf32>
    %96 = vector.extract_strided_slice %41 {offsets = [32, 0], sizes = [8, 128], strides = [1, 1]} : vector<112x128xf32> to vector<8x128xf32>
    %97 = vector.extract_strided_slice %41 {offsets = [48, 0], sizes = [8, 128], strides = [1, 1]} : vector<112x128xf32> to vector<8x128xf32>
    %98 = vector.extract_strided_slice %41 {offsets = [64, 0], sizes = [8, 128], strides = [1, 1]} : vector<112x128xf32> to vector<8x128xf32>
    %99 = vector.extract_strided_slice %41 {offsets = [80, 0], sizes = [8, 128], strides = [1, 1]} : vector<112x128xf32> to vector<8x128xf32>
    %100 = vector.extract_strided_slice %41 {offsets = [96, 0], sizes = [8, 128], strides = [1, 1]} : vector<112x128xf32> to vector<8x128xf32>
    %101 = tpu.concatenate %96, %97, %98, %99, %100 in 0 : vector<8x128xf32>, vector<8x128xf32>, vector<8x128xf32>, vector<8x128xf32>, vector<8x128xf32> -> vector<40x128xf32>
    %102 = arith.truncf %101 : vector<40x128xf32> to vector<40x128xbf16>
    %c4 = arith.constant 4 : index
    %c0_59 = arith.constant 0 : index
    %c0_60 = arith.constant 0 : index
    %103 = vector.load %arg4[%c4, %c0_59, %c0_60] : memref<5x128x256xbf16, #tpu.memory_space<vmem>>, vector<1x128x256xbf16>
    %104 = vector.shape_cast %103 : vector<1x128x256xbf16> to vector<128x256xbf16>
    %cst_61 = arith.constant dense<0.000000e+00> : vector<40x256xf32>
    %105 = tpu.matmul %102, %104, %cst_61 {dimension_numbers = #tpu.dot_dimension_numbers<[1], [0], [0], [1], [0, 0, 1, 1], [], []>} : vector<40x128xbf16>, vector<128x256xbf16>, vector<40x256xf32> -> vector<40x256xf32>
    %106 = arith.addf %91, %105 : vector<40x256xf32>
    %c3_62 = arith.constant 3 : index
    %c0_63 = arith.constant 0 : index
    %c0_64 = arith.constant 0 : index
    %107 = vector.load %arg4[%c3_62, %c0_63, %c0_64] : memref<5x128x256xbf16, #tpu.memory_space<vmem>>, vector<1x128x256xbf16>
    %108 = vector.shape_cast %107 : vector<1x128x256xbf16> to vector<128x256xbf16>
    %cst_65 = arith.constant dense<0.000000e+00> : vector<40x256xf32>
    %109 = tpu.matmul %102, %108, %cst_65 {dimension_numbers = #tpu.dot_dimension_numbers<[1], [0], [0], [1], [0, 0, 1, 1], [], []>} : vector<40x128xbf16>, vector<128x256xbf16>, vector<40x256xf32> -> vector<40x256xf32>
    %110 = arith.addf %95, %109 : vector<40x256xf32>
    %111 = vector.extract_strided_slice %41 {offsets = [40, 0], sizes = [8, 128], strides = [1, 1]} : vector<112x128xf32> to vector<8x128xf32>
    %112 = vector.extract_strided_slice %41 {offsets = [56, 0], sizes = [8, 128], strides = [1, 1]} : vector<112x128xf32> to vector<8x128xf32>
    %113 = vector.extract_strided_slice %41 {offsets = [72, 0], sizes = [8, 128], strides = [1, 1]} : vector<112x128xf32> to vector<8x128xf32>
    %114 = vector.extract_strided_slice %41 {offsets = [88, 0], sizes = [8, 128], strides = [1, 1]} : vector<112x128xf32> to vector<8x128xf32>
    %115 = vector.extract_strided_slice %41 {offsets = [104, 0], sizes = [8, 128], strides = [1, 1]} : vector<112x128xf32> to vector<8x128xf32>
    %116 = tpu.concatenate %111, %112, %113, %114, %115 in 0 : vector<8x128xf32>, vector<8x128xf32>, vector<8x128xf32>, vector<8x128xf32>, vector<8x128xf32> -> vector<40x128xf32>
    %117 = arith.truncf %116 : vector<40x128xf32> to vector<40x128xbf16>
    %c4_66 = arith.constant 4 : index
    %c0_67 = arith.constant 0 : index
    %c0_68 = arith.constant 0 : index
    %118 = vector.load %arg4[%c4_66, %c0_67, %c0_68] : memref<5x128x256xbf16, #tpu.memory_space<vmem>>, vector<1x128x256xbf16>
    %119 = vector.shape_cast %118 : vector<1x128x256xbf16> to vector<128x256xbf16>
    %cst_69 = arith.constant dense<0.000000e+00> : vector<40x256xf32>
    %120 = tpu.matmul %117, %119, %cst_69 {dimension_numbers = #tpu.dot_dimension_numbers<[1], [0], [0], [1], [0, 0, 1, 1], [], []>} : vector<40x128xbf16>, vector<128x256xbf16>, vector<40x256xf32> -> vector<40x256xf32>
    %121 = arith.addf %110, %120 : vector<40x256xf32>
    %122 = vector.extract_strided_slice %106 {offsets = [0, 0], sizes = [40, 128], strides = [1, 1]} : vector<40x256xf32> to vector<40x128xf32>
    %123 = vector.extract_strided_slice %106 {offsets = [0, 128], sizes = [40, 128], strides = [1, 1]} : vector<40x256xf32> to vector<40x128xf32>
    %124 = arith.maximumf %122, %123 : vector<40x128xf32>
    %125 = vector.extract_strided_slice %121 {offsets = [0, 0], sizes = [40, 128], strides = [1, 1]} : vector<40x256xf32> to vector<40x128xf32>
    %126 = vector.extract_strided_slice %121 {offsets = [0, 128], sizes = [40, 128], strides = [1, 1]} : vector<40x256xf32> to vector<40x128xf32>
    %127 = arith.maximumf %125, %126 : vector<40x128xf32>
    %128 = arith.maximumf %124, %127 : vector<40x128xf32>
    %c0_70 = arith.constant 0 : index
    %c0_71 = arith.constant 0 : index
    %129 = vector.load %arg5[%c0_70, %c0_71] : memref<1x128xf32, #tpu.memory_space<vmem>>, vector<1x128xf32>
    %130 = vector.broadcast %129 : vector<1x128xf32> to vector<40x128xf32>
    %131 = arith.addf %128, %130 : vector<40x128xf32>
    %cst_72 = arith.constant 0.000000e+00 : f32
    %132 = vector.broadcast %cst_72 : f32 to vector<40x128xf32>
    %133 = arith.maximumf %131, %132 : vector<40x128xf32>
    %134 = arith.truncf %133 : vector<40x128xf32> to vector<40x128xbf16>
    %135 = vector.extract_strided_slice %134 {offsets = [0, 0], sizes = [8, 128], strides = [1, 1]} : vector<40x128xbf16> to vector<8x128xbf16>
    %c0_73 = arith.constant 0 : index
    %c0_74 = arith.constant 0 : index
    %c0_75 = arith.constant 0 : index
    %136 = vector.load %arg6[%c0_73, %c0_74, %c0_75] : memref<5x128x128xbf16, #tpu.memory_space<vmem>>, vector<1x128x128xbf16>
    %137 = vector.shape_cast %136 : vector<1x128x128xbf16> to vector<128x128xbf16>
    %cst_76 = arith.constant dense<0.000000e+00> : vector<8x128xf32>
    %138 = tpu.matmul %135, %137, %cst_76 {dimension_numbers = #tpu.dot_dimension_numbers<[1], [0], [0], [1], [0, 0, 1, 1], [], []>} : vector<8x128xbf16>, vector<128x128xbf16>, vector<8x128xf32> -> vector<8x128xf32>
    %139 = vector.extract_strided_slice %134 {offsets = [8, 0], sizes = [8, 128], strides = [1, 1]} : vector<40x128xbf16> to vector<8x128xbf16>
    %c1_77 = arith.constant 1 : index
    %c0_78 = arith.constant 0 : index
    %c0_79 = arith.constant 0 : index
    %140 = vector.load %arg6[%c1_77, %c0_78, %c0_79] : memref<5x128x128xbf16, #tpu.memory_space<vmem>>, vector<1x128x128xbf16>
    %141 = vector.shape_cast %140 : vector<1x128x128xbf16> to vector<128x128xbf16>
    %cst_80 = arith.constant dense<0.000000e+00> : vector<8x128xf32>
    %142 = tpu.matmul %139, %141, %cst_80 {dimension_numbers = #tpu.dot_dimension_numbers<[1], [0], [0], [1], [0, 0, 1, 1], [], []>} : vector<8x128xbf16>, vector<128x128xbf16>, vector<8x128xf32> -> vector<8x128xf32>
    %143 = arith.addf %138, %142 : vector<8x128xf32>
    %144 = vector.extract_strided_slice %134 {offsets = [16, 0], sizes = [8, 128], strides = [1, 1]} : vector<40x128xbf16> to vector<8x128xbf16>
    %c2_81 = arith.constant 2 : index
    %c0_82 = arith.constant 0 : index
    %c0_83 = arith.constant 0 : index
    %145 = vector.load %arg6[%c2_81, %c0_82, %c0_83] : memref<5x128x128xbf16, #tpu.memory_space<vmem>>, vector<1x128x128xbf16>
    %146 = vector.shape_cast %145 : vector<1x128x128xbf16> to vector<128x128xbf16>
    %cst_84 = arith.constant dense<0.000000e+00> : vector<8x128xf32>
    %147 = tpu.matmul %144, %146, %cst_84 {dimension_numbers = #tpu.dot_dimension_numbers<[1], [0], [0], [1], [0, 0, 1, 1], [], []>} : vector<8x128xbf16>, vector<128x128xbf16>, vector<8x128xf32> -> vector<8x128xf32>
    %148 = arith.addf %143, %147 : vector<8x128xf32>
    %149 = vector.extract_strided_slice %134 {offsets = [24, 0], sizes = [8, 128], strides = [1, 1]} : vector<40x128xbf16> to vector<8x128xbf16>
    %c3_85 = arith.constant 3 : index
    %c0_86 = arith.constant 0 : index
    %c0_87 = arith.constant 0 : index
    %150 = vector.load %arg6[%c3_85, %c0_86, %c0_87] : memref<5x128x128xbf16, #tpu.memory_space<vmem>>, vector<1x128x128xbf16>
    %151 = vector.shape_cast %150 : vector<1x128x128xbf16> to vector<128x128xbf16>
    %cst_88 = arith.constant dense<0.000000e+00> : vector<8x128xf32>
    %152 = tpu.matmul %149, %151, %cst_88 {dimension_numbers = #tpu.dot_dimension_numbers<[1], [0], [0], [1], [0, 0, 1, 1], [], []>} : vector<8x128xbf16>, vector<128x128xbf16>, vector<8x128xf32> -> vector<8x128xf32>
    %153 = arith.addf %148, %152 : vector<8x128xf32>
    %154 = vector.extract_strided_slice %134 {offsets = [32, 0], sizes = [8, 128], strides = [1, 1]} : vector<40x128xbf16> to vector<8x128xbf16>
    %c4_89 = arith.constant 4 : index
    %c0_90 = arith.constant 0 : index
    %c0_91 = arith.constant 0 : index
    %155 = vector.load %arg6[%c4_89, %c0_90, %c0_91] : memref<5x128x128xbf16, #tpu.memory_space<vmem>>, vector<1x128x128xbf16>
    %156 = vector.shape_cast %155 : vector<1x128x128xbf16> to vector<128x128xbf16>
    %cst_92 = arith.constant dense<0.000000e+00> : vector<8x128xf32>
    %157 = tpu.matmul %154, %156, %cst_92 {dimension_numbers = #tpu.dot_dimension_numbers<[1], [0], [0], [1], [0, 0, 1, 1], [], []>} : vector<8x128xbf16>, vector<128x128xbf16>, vector<8x128xf32> -> vector<8x128xf32>
    %158 = arith.addf %153, %157 : vector<8x128xf32>
    %c0_93 = arith.constant 0 : index
    %c0_94 = arith.constant 0 : index
    %159 = vector.load %arg7[%c0_93, %c0_94] : memref<1x128xf32, #tpu.memory_space<vmem>>, vector<1x128xf32>
    %160 = vector.broadcast %159 : vector<1x128xf32> to vector<8x128xf32>
    %161 = arith.addf %158, %160 : vector<8x128xf32>
    %cst_95 = arith.constant 0.000000e+00 : f32
    %162 = vector.broadcast %cst_95 : f32 to vector<8x128xf32>
    %163 = arith.maximumf %161, %162 : vector<8x128xf32>
    %164 = arith.truncf %163 : vector<8x128xf32> to vector<8x128xbf16>
    %c0_96 = arith.constant 0 : index
    %c0_97 = arith.constant 0 : index
    %165 = vector.load %arg8[%c0_96, %c0_97] : memref<128x128xbf16, #tpu.memory_space<vmem>>, vector<128x128xbf16>
    %cst_98 = arith.constant dense<0.000000e+00> : vector<8x128xf32>
    %166 = tpu.matmul %164, %165, %cst_98 {dimension_numbers = #tpu.dot_dimension_numbers<[1], [0], [0], [1], [0, 0, 1, 1], [], []>} : vector<8x128xbf16>, vector<128x128xbf16>, vector<8x128xf32> -> vector<8x128xf32>
    %c0_99 = arith.constant 0 : index
    %c0_100 = arith.constant 0 : index
    %167 = vector.load %arg9[%c0_99, %c0_100] : memref<1x128xf32, #tpu.memory_space<vmem>>, vector<1x128xf32>
    %168 = vector.broadcast %167 : vector<1x128xf32> to vector<8x128xf32>
    %169 = arith.addf %166, %168 : vector<8x128xf32>
    %cst_101 = arith.constant 0.000000e+00 : f32
    %170 = vector.broadcast %cst_101 : f32 to vector<8x128xf32>
    %171 = arith.maximumf %169, %170 : vector<8x128xf32>
    %172 = arith.truncf %171 : vector<8x128xf32> to vector<8x128xbf16>
    %c0_102 = arith.constant 0 : index
    %c0_103 = arith.constant 0 : index
    %173 = vector.load %arg10[%c0_102, %c0_103] : memref<128x128xbf16, #tpu.memory_space<vmem>>, vector<128x128xbf16>
    %cst_104 = arith.constant dense<0.000000e+00> : vector<8x128xf32>
    %174 = tpu.matmul %172, %173, %cst_104 {dimension_numbers = #tpu.dot_dimension_numbers<[1], [0], [0], [1], [0, 0, 1, 1], [], []>} : vector<8x128xbf16>, vector<128x128xbf16>, vector<8x128xf32> -> vector<8x128xf32>
    %c0_105 = arith.constant 0 : index
    %c0_106 = arith.constant 0 : index
    %175 = vector.load %arg11[%c0_105, %c0_106] : memref<1x128xf32, #tpu.memory_space<vmem>>, vector<1x128xf32>
    %176 = vector.broadcast %175 : vector<1x128xf32> to vector<8x128xf32>
    %177 = arith.addf %174, %176 : vector<8x128xf32>
    %c0_107 = arith.constant 0 : index
    %c0_108 = arith.constant 0 : index
    %178 = vector.load %arg12[%c0_107, %c0_108] : memref<8x128xf32, #tpu.memory_space<vmem>>, vector<8x128xf32>
    tpu.vector_store %arg12[%c0_107, %c0_108], %177 {strides = array<i32>} : memref<8x128xf32, #tpu.memory_space<vmem>>, vector<8x128xf32>,
    return
  }
  func.func @transform_0(%arg0: i32) -> (i32, i32, i32) {
    %c0_i32 = arith.constant 0 : i32
    %c0_i32_0 = arith.constant 0 : i32
    %c0_i32_1 = arith.constant 0 : i32
    return %arg0, %c0_i32, %c0_i32_0 : i32, i32, i32
  }
  func.func @transform_1(%arg0: i32) -> (i32, i32, i32, i32) {
    %c0_i32 = arith.constant 0 : i32
    %c0_i32_0 = arith.constant 0 : i32
    %c0_i32_1 = arith.constant 0 : i32
    %c0_i32_2 = arith.constant 0 : i32
    %c0_i32_3 = arith.constant 0 : i32
    return %c0_i32, %c0_i32_0, %c0_i32_1, %c0_i32_2 : i32, i32, i32, i32
  }
  func.func @transform_2(%arg0: i32) -> (i32, i32) {
    %c0_i32 = arith.constant 0 : i32
    %c0_i32_0 = arith.constant 0 : i32
    %c0_i32_1 = arith.constant 0 : i32
    return %c0_i32, %c0_i32_0 : i32, i32
  }
  func.func @transform_3(%arg0: i32) -> (i32, i32, i32) {
    %c0_i32 = arith.constant 0 : i32
    %c0_i32_0 = arith.constant 0 : i32
    %c0_i32_1 = arith.constant 0 : i32
    %c0_i32_2 = arith.constant 0 : i32
    return %c0_i32, %c0_i32_0, %c0_i32_1 : i32, i32, i32
  }
  func.func @transform_4(%arg0: i32) -> (i32, i32) {
    %c0_i32 = arith.constant 0 : i32
    %c0_i32_0 = arith.constant 0 : i32
    %c0_i32_1 = arith.constant 0 : i32
    return %c0_i32, %c0_i32_0 : i32, i32
  }
  func.func @transform_5(%arg0: i32) -> (i32, i32, i32) {
    %c0_i32 = arith.constant 0 : i32
    %c0_i32_0 = arith.constant 0 : i32
    %c0_i32_1 = arith.constant 0 : i32
    %c0_i32_2 = arith.constant 0 : i32
    return %c0_i32, %c0_i32_0, %c0_i32_1 : i32, i32, i32
  }
  func.func @transform_6(%arg0: i32) -> (i32, i32) {
    %c0_i32 = arith.constant 0 : i32
    %c0_i32_0 = arith.constant 0 : i32
    %c0_i32_1 = arith.constant 0 : i32
    return %c0_i32, %c0_i32_0 : i32, i32
  }
  func.func @transform_7(%arg0: i32) -> (i32, i32) {
    %c0_i32 = arith.constant 0 : i32
    %c0_i32_0 = arith.constant 0 : i32
    %c0_i32_1 = arith.constant 0 : i32
    return %c0_i32, %c0_i32_0 : i32, i32
  }
  func.func @transform_8(%arg0: i32) -> (i32, i32) {
    %c0_i32 = arith.constant 0 : i32
    %c0_i32_0 = arith.constant 0 : i32
    %c0_i32_1 = arith.constant 0 : i32
    return %c0_i32, %c0_i32_0 : i32, i32
  }
  func.func @transform_9(%arg0: i32) -> (i32, i32) {
    %c0_i32 = arith.constant 0 : i32
    %c0_i32_0 = arith.constant 0 : i32
    %c0_i32_1 = arith.constant 0 : i32
    return %c0_i32, %c0_i32_0 : i32, i32
  }
  func.func @transform_10(%arg0: i32) -> (i32, i32) {
    %c0_i32 = arith.constant 0 : i32
    %c0_i32_0 = arith.constant 0 : i32
    %c0_i32_1 = arith.constant 0 : i32
    return %c0_i32, %c0_i32_0 : i32, i32
  }
  func.func @transform_11(%arg0: i32) -> (i32, i32) {
    %c0_i32 = arith.constant 0 : i32
    %c0_i32_0 = arith.constant 0 : i32
    return %arg0, %c0_i32 : i32, i32
  }
}

</mosaic_0001>

<llo_original>
// kernel: lenet_forward.1
$region0: #{lenet_forward.1}
  #allocation0 [shape = 'u32[]', space=smem, size = 0x4, offset = 0x4, fixed_abs, tag = 'smem constant byte address 0x4 - core index']
  #allocation1 [shape = 'u32[144,128]{1,0:T(1,128)}', space=vmem, size = 0x12000, scoped, tag = 'internal scratch']
  %s0 = inlined_call_operand.vmem [shape: bf16[1,128,256], index: 0, kind: input, shape index: {}]
  %s1 = inlined_call_operand.vmem [shape: bf16[2,3,256,256], index: 1, kind: input, shape index: {}]
  %s2 = inlined_call_operand.vmem [shape: f32[1,128], index: 2, kind: input, shape index: {}]
  %s3 = inlined_call_operand.vmem [shape: bf16[5,128,256], index: 3, kind: input, shape index: {}]
  %s4 = inlined_call_operand.vmem [shape: f32[1,128], index: 4, kind: input, shape index: {}]
  %s5 = inlined_call_operand.vmem [shape: bf16[5,128,128], index: 5, kind: input, shape index: {}]
  %s6 = inlined_call_operand.vmem [shape: f32[1,128], index: 6, kind: input, shape index: {}]
  %s7 = inlined_call_operand.vmem [shape: bf16[128,128], index: 7, kind: input, shape index: {}]
  %s8 = inlined_call_operand.vmem [shape: f32[1,128], index: 8, kind: input, shape index: {}]
  %s9 = inlined_call_operand.hbm [shape: bf16[128,128], index: 9, kind: input, shape index: {}]
  %s10 = inlined_call_operand.vmem [shape: f32[1,128], index: 10, kind: input, shape index: {}]
  %s11 = inlined_call_operand.vmem [shape: f32[8,128], index: 11, kind: output, shape index: {}]
  %s12 = sld [smem:[#allocation0]]
  $region58: #{lenet_forward.1} parent=0
    _
  %s14 = ssub.s32 1, %s12
  %s15 = scalar_select 0, %s14, %s12
  $region1: #{lenet_forward.1} parent=0
    #allocation2 [shape = 'u8[32768]{0}', space=vmem, size = 0x8000, scoped, tag = 'input window, operand 9, single buffered']
    #allocation3 [shape = 's32[1]{0}', space=sflag, size = 0x4, scoped, tag = 'scoped memory for lenet_forward.1']
    %16 = vsyncpa [#allocation3], 0
    // Predicated region
    $region2: #{lenet_forward.1} parent=1 // pred_check
      _
    $region3: #{lenet_forward.1} parent=1 // pred_check_branch
      %18 = sbr.rel (0) target = $region5
    $region4: #{lenet_forward.1} parent=1 // pred_region
      _
    $region5: #{lenet_forward.1} parent=1 // pred_fallthru
      _
    // Predicated region
    $region6: #{lenet_forward.1} parent=1 // pred_check
      _
    $region7: #{lenet_forward.1} parent=1 // pred_check_branch
      %20 = sbr.rel (0) target = $region9
    $region8: #{lenet_forward.1} parent=1 // pred_region
      _
    $region9: #{lenet_forward.1} parent=1 // pred_fallthru
      _
    // Predicated region
    $region10: #{lenet_forward.1} parent=1 // pred_check
      _
    $region11: #{lenet_forward.1} parent=1 // pred_check_branch
      %22 = sbr.rel (0) target = $region13
    $region12: #{lenet_forward.1} parent=1 // pred_region
      _
    $region13: #{lenet_forward.1} parent=1 // pred_fallthru
      _
    // Predicated region
    $region14: #{lenet_forward.1} parent=1 // pred_check
      _
    $region15: #{lenet_forward.1} parent=1 // pred_check_branch
      %24 = sbr.rel (0) target = $region17
    $region16: #{lenet_forward.1} parent=1 // pred_region
      _
    $region17: #{lenet_forward.1} parent=1 // pred_fallthru
      _
    // Predicated region
    $region18: #{lenet_forward.1} parent=1 // pred_check
      _
    $region19: #{lenet_forward.1} parent=1 // pred_check_branch
      %26 = sbr.rel (0) target = $region21
    $region20: #{lenet_forward.1} parent=1 // pred_region
      _
    $region21: #{lenet_forward.1} parent=1 // pred_fallthru
      _
    // Predicated region
    $region22: #{lenet_forward.1} parent=1 // pred_check
      _
    $region23: #{lenet_forward.1} parent=1 // pred_check_branch
      %28 = sbr.rel (0) target = $region25
    $region24: #{lenet_forward.1} parent=1 // pred_region
      _
    $region25: #{lenet_forward.1} parent=1 // pred_fallthru
      _
    // Predicated region
    $region26: #{lenet_forward.1} parent=1 // pred_check
      _
    $region27: #{lenet_forward.1} parent=1 // pred_check_branch
      %30 = sbr.rel (0) target = $region29
    $region28: #{lenet_forward.1} parent=1 // pred_region
      _
    $region29: #{lenet_forward.1} parent=1 // pred_fallthru
      _
    // Predicated region
    $region30: #{lenet_forward.1} parent=1 // pred_check
      _
    $region31: #{lenet_forward.1} parent=1 // pred_check_branch
      %32 = sbr.rel (0) target = $region33
    $region32: #{lenet_forward.1} parent=1 // pred_region
      _
    $region33: #{lenet_forward.1} parent=1 // pred_fallthru
      _
    // Predicated region
    $region34: #{lenet_forward.1} parent=1 // pred_check
      _
    $region35: #{lenet_forward.1} parent=1 // pred_check_branch
      %34 = sbr.rel (0) target = $region37
    $region36: #{lenet_forward.1} parent=1 // pred_region
      _
    $region37: #{lenet_forward.1} parent=1 // pred_fallthru
      _
    // Predicated region
    $region38: #{lenet_forward.1} parent=1 // pred_check
      _
    $region39: #{lenet_forward.1} parent=1 // pred_check_branch
      %36 = sbr.rel (0) target = $region41
    $region40: #{lenet_forward.1} parent=1 // pred_region
      %s38 = ssub.s32 1024, 1024
      %39 = vsyncadd [#allocation3], %s38
      %s40 = sshll.u32 [#allocation2], 4
      %s41 = int_to_ptr.vmem [resolvable:$true] %s40
      %46 = dma.hbm_to_vmem [thread:$0]  %s9, 1024, %s41, [#allocation3], 64, 64, 4
    $region41: #{lenet_forward.1} parent=1 // pred_fallthru
      _
    // Predicated region
    $region42: #{lenet_forward.1} parent=1 // pred_check
      _
    $region43: #{lenet_forward.1} parent=1 // pred_check_branch
      %48 = sbr.rel (0) target = $region45
    $region44: #{lenet_forward.1} parent=1 // pred_region
      _
    $region45: #{lenet_forward.1} parent=1 // pred_fallthru
      _
    // Predicated region
    $region46: #{lenet_forward.1} parent=1 // pred_check
      _
    $region47: #{lenet_forward.1} parent=1 // pred_check_branch
      %50 = sbr.rel (0) target = $region49
    $region48: #{lenet_forward.1} parent=1 // pred_region
      %51 = dma.done [#allocation3], 1024
    $region49: #{lenet_forward.1} parent=1 // pred_fallthru
      _
    %v53 = vld [vmem:[%s0] sm:$0xff]
    %v54 = vld [vmem:[%s0 + $0x8] sm:$0xff]
    %v55 = vld [vmem:[%s0 + $0x10] sm:$0xff]
    %v56 = vld [vmem:[%s0 + $0x18] sm:$0xff]
    %v57 = vld [vmem:[%s0 + $0x20] sm:$0xff]
    %v58 = vld [vmem:[%s0 + $0x28] sm:$0xff]
    %v59 = vld [vmem:[%s0 + $0x30] sm:$0xff]
    %v60 = vld [vmem:[%s0 + $0x38] sm:$0xff]
    %v61 = vld [vmem:[%s0 + $0x40] sm:$0xff]
    %v62 = vld [vmem:[%s0 + $0x48] sm:$0xff]
    %v63 = vld [vmem:[%s0 + $0x50] sm:$0xff]
    %v64 = vld [vmem:[%s0 + $0x58] sm:$0xff]
    %v65 = vld [vmem:[%s0 + $0x60] sm:$0xff]
    %v66 = vld [vmem:[%s0 + $0x68] sm:$0xff]
    %v67 = vld [vmem:[%s0 + $0x70] sm:$0xff]
    %v68 = vld [vmem:[%s0 + $0x78] sm:$0xff]
    %v69 = vld [vmem:[%s1] sm:$0xff]
    %v70 = vld [vmem:[%s1 + $0x8] sm:$0xff]
    %v71 = vld [vmem:[%s1 + $0x10] sm:$0xff]
    %v72 = vld [vmem:[%s1 + $0x18] sm:$0xff]
    %v73 = vld [vmem:[%s1 + $0x20] sm:$0xff]
    %v74 = vld [vmem:[%s1 + $0x28] sm:$0xff]
    %v75 = vld [vmem:[%s1 + $0x30] sm:$0xff]
    %v76 = vld [vmem:[%s1 + $0x38] sm:$0xff]
    %v77 = vld [vmem:[%s1 + $0x40] sm:$0xff]
    %v78 = vld [vmem:[%s1 + $0x48] sm:$0xff]
    %v79 = vld [vmem:[%s1 + $0x50] sm:$0xff]
    %v80 = vld [vmem:[%s1 + $0x58] sm:$0xff]
    %v81 = vld [vmem:[%s1 + $0x60] sm:$0xff]
    %v82 = vld [vmem:[%s1 + $0x68] sm:$0xff]
    %v83 = vld [vmem:[%s1 + $0x70] sm:$0xff]
    %v84 = vld [vmem:[%s1 + $0x78] sm:$0xff]
    %v85 = vld [vmem:[%s1 + $0x80] sm:$0xff]
    %v86 = vld [vmem:[%s1 + $0x88] sm:$0xff]
    %v87 = vld [vmem:[%s1 + $0x90] sm:$0xff]
    %v88 = vld [vmem:[%s1 + $0x98] sm:$0xff]
    %v89 = vld [vmem:[%s1 + $0xa0] sm:$0xff]
    %v90 = vld [vmem:[%s1 + $0xa8] sm:$0xff]
    %v91 = vld [vmem:[%s1 + $0xb0] sm:$0xff]
    %v92 = vld [vmem:[%s1 + $0xb8] sm:$0xff]
    %v93 = vld [vmem:[%s1 + $0xc0] sm:$0xff]
    %v94 = vld [vmem:[%s1 + $0xc8] sm:$0xff]
    %v95 = vld [vmem:[%s1 + $0xd0] sm:$0xff]
    %v96 = vld [vmem:[%s1 + $0xd8] sm:$0xff]
    %v97 = vld [vmem:[%s1 + $0xe0] sm:$0xff]
    %v98 = vld [vmem:[%s1 + $0xe8] sm:$0xff]
    %v99 = vld [vmem:[%s1 + $0xf0] sm:$0xff]
    %v100 = vld [vmem:[%s1 + $0xf8] sm:$0xff]
    %v117 = vunpack.c.l.b16 %v53
    %v118 = vunpack.c.h.b16 %v53
    %v119 = vunpack.c.l.b16 %v54
    %v120 = vunpack.c.h.b16 %v54
    %v121 = vunpack.c.l.b16 %v55
    %v122 = vunpack.c.h.b16 %v55
    %v123 = vunpack.c.l.b16 %v56
    %v124 = vunpack.c.h.b16 %v56
    %v125 = vunpack.c.l.b16 %v57
    %v126 = vunpack.c.h.b16 %v57
    %v127 = vunpack.c.l.b16 %v58
    %v128 = vunpack.c.h.b16 %v58
    %v129 = vunpack.c.l.b16 %v59
    %v130 = vunpack.c.h.b16 %v59
    %v131 = vunpack.c.l.b16 %v60
    %v132 = vunpack.c.h.b16 %v60
    %v133 = vunpack.c.l.b16 %v61
    %v134 = vunpack.c.h.b16 %v61
    %v135 = vunpack.c.l.b16 %v62
    %v136 = vunpack.c.h.b16 %v62
    %v137 = vunpack.c.l.b16 %v63
    %v138 = vunpack.c.h.b16 %v63
    %v139 = vunpack.c.l.b16 %v64
    %v140 = vunpack.c.h.b16 %v64
    %v141 = vunpack.c.l.b16 %v65
    %v142 = vunpack.c.h.b16 %v65
    %v143 = vunpack.c.l.b16 %v66
    %v144 = vunpack.c.h.b16 %v66
    %v145 = vunpack.c.l.b16 %v67
    %v146 = vunpack.c.h.b16 %v67
    %v147 = vunpack.c.l.b16 %v68
    %v148 = vunpack.c.h.b16 %v68
    %v149 = vpack.c.b16 %v119, %v117
    %v150 = vpack.c.b16 %v120, %v118
    %v151 = vpack.c.b16 %v123, %v121
    %v152 = vpack.c.b16 %v124, %v122
    %v153 = vpack.c.b16 %v127, %v125
    %v154 = vpack.c.b16 %v128, %v126
    %v155 = vpack.c.b16 %v131, %v129
    %v156 = vpack.c.b16 %v132, %v130
    %v157 = vpack.c.b16 %v135, %v133
    %v158 = vpack.c.b16 %v136, %v134
    %v159 = vpack.c.b16 %v139, %v137
    %v160 = vpack.c.b16 %v140, %v138
    %v161 = vpack.c.b16 %v143, %v141
    %v162 = vpack.c.b16 %v144, %v142
    %v163 = vpack.c.b16 %v147, %v145
    %v164 = vpack.c.b16 %v148, %v146
    %v213 = vunpack.c.l.b16 %v69
    %v214 = vunpack.c.h.b16 %v69
    %v215 = vunpack.c.l.b16 %v70
    %v216 = vunpack.c.h.b16 %v70
    %v217 = vunpack.c.l.b16 %v71
    %v218 = vunpack.c.h.b16 %v71
    %v219 = vunpack.c.l.b16 %v72
    %v220 = vunpack.c.h.b16 %v72
    %v221 = vunpack.c.l.b16 %v73
    %v222 = vunpack.c.h.b16 %v73
    %v223 = vunpack.c.l.b16 %v74
    %v224 = vunpack.c.h.b16 %v74
    %v225 = vunpack.c.l.b16 %v75
    %v226 = vunpack.c.h.b16 %v75
    %v227 = vunpack.c.l.b16 %v76
    %v228 = vunpack.c.h.b16 %v76
    %v229 = vunpack.c.l.b16 %v77
    %v230 = vunpack.c.h.b16 %v77
    %v231 = vunpack.c.l.b16 %v78
    %v232 = vunpack.c.h.b16 %v78
    %v233 = vunpack.c.l.b16 %v79
    %v234 = vunpack.c.h.b16 %v79
    %v235 = vunpack.c.l.b16 %v80
    %v236 = vunpack.c.h.b16 %v80
    %v237 = vunpack.c.l.b16 %v81
    %v238 = vunpack.c.h.b16 %v81
    %v239 = vunpack.c.l.b16 %v82
    %v240 = vunpack.c.h.b16 %v82
    %v241 = vunpack.c.l.b16 %v83
    %v242 = vunpack.c.h.b16 %v83
    %v243 = vunpack.c.l.b16 %v84
    %v244 = vunpack.c.h.b16 %v84
    %v245 = vunpack.c.l.b16 %v85
    %v246 = vunpack.c.h.b16 %v85
    %v247 = vunpack.c.l.b16 %v86
    %v248 = vunpack.c.h.b16 %v86
    %v249 = vunpack.c.l.b16 %v87
    %v250 = vunpack.c.h.b16 %v87
    %v251 = vunpack.c.l.b16 %v88
    %v252 = vunpack.c.h.b16 %v88
    %v253 = vunpack.c.l.b16 %v89
    %v254 = vunpack.c.h.b16 %v89
    %v255 = vunpack.c.l.b16 %v90
    %v256 = vunpack.c.h.b16 %v90
    %v257 = vunpack.c.l.b16 %v91
    %v258 = vunpack.c.h.b16 %v91
    %v259 = vunpack.c.l.b16 %v92
    %v260 = vunpack.c.h.b16 %v92
    %v261 = vunpack.c.l.b16 %v93
    %v262 = vunpack.c.h.b16 %v93
    %v263 = vunpack.c.l.b16 %v94
    %v264 = vunpack.c.h.b16 %v94
    %v265 = vunpack.c.l.b16 %v95
    %v266 = vunpack.c.h.b16 %v95
    %v267 = vunpack.c.l.b16 %v96
    %v268 = vunpack.c.h.b16 %v96
    %v269 = vunpack.c.l.b16 %v97
    %v270 = vunpack.c.h.b16 %v97
    %v271 = vunpack.c.l.b16 %v98
    %v272 = vunpack.c.h.b16 %v98
    %v273 = vunpack.c.l.b16 %v99
    %v274 = vunpack.c.h.b16 %v99
    %v275 = vunpack.c.l.b16 %v100
    %v276 = vunpack.c.h.b16 %v100
    %v277 = vpack.c.b16 %v215, %v213
    %v278 = vpack.c.b16 %v216, %v214
    %v279 = vpack.c.b16 %v219, %v217
    %v280 = vpack.c.b16 %v220, %v218
    %v281 = vpack.c.b16 %v223, %v221
    %v282 = vpack.c.b16 %v224, %v222
    %v283 = vpack.c.b16 %v227, %v225
    %v284 = vpack.c.b16 %v228, %v226
    %v285 = vpack.c.b16 %v231, %v229
    %v286 = vpack.c.b16 %v232, %v230
    %v287 = vpack.c.b16 %v235, %v233
    %v288 = vpack.c.b16 %v236, %v234
    %v289 = vpack.c.b16 %v239, %v237
    %v290 = vpack.c.b16 %v240, %v238
    %v291 = vpack.c.b16 %v243, %v241
    %v292 = vpack.c.b16 %v244, %v242
    %v293 = vpack.c.b16 %v247, %v245
    %v294 = vpack.c.b16 %v248, %v246
    %v295 = vpack.c.b16 %v251, %v249
    %v296 = vpack.c.b16 %v252, %v250
    %v297 = vpack.c.b16 %v255, %v253
    %v298 = vpack.c.b16 %v256, %v254
    %v299 = vpack.c.b16 %v259, %v257
    %v300 = vpack.c.b16 %v260, %v258
    %v301 = vpack.c.b16 %v263, %v261
    %v302 = vpack.c.b16 %v264, %v262
    %v303 = vpack.c.b16 %v267, %v265
    %v304 = vpack.c.b16 %v268, %v266
    %v305 = vpack.c.b16 %v271, %v269
    %v306 = vpack.c.b16 %v272, %v270
    %v307 = vpack.c.b16 %v275, %v273
    %v308 = vpack.c.b16 %v276, %v274
    %341 = vmatprep.subr.bf16.mxu0 %v278
    %342 = vmatpush1.bf16.msra.mxu0 %v277
    %343 = vmatprep.subr.bf16.mxu0 %v280
    %344 = vmatpush1.bf16.msra.mxu0 %v279
    %345 = vmatprep.subr.bf16.mxu0 %v282
    %346 = vmatpush1.bf16.msra.mxu0 %v281
    %347 = vmatprep.subr.bf16.mxu0 %v284
    %348 = vmatpush1.bf16.msra.mxu0 %v283
    %349 = vmatprep.subr.bf16.mxu0 %v286
    %350 = vmatpush1.bf16.msra.mxu0 %v285
    %351 = vmatprep.subr.bf16.mxu0 %v288
    %352 = vmatpush1.bf16.msra.mxu0 %v287
    %353 = vmatprep.subr.bf16.mxu0 %v290
    %354 = vmatpush1.bf16.msra.mxu0 %v289
    %355 = vmatprep.subr.bf16.mxu0 %v292
    %356 = vmatpush1.bf16.msra.mxu0 %v291
    %357 = vmatprep.subr.bf16.mxu0 %v294
    %358 = vmatpush1.bf16.msra.mxu0 %v293
    %359 = vmatprep.subr.bf16.mxu0 %v296
    %360 = vmatpush1.bf16.msra.mxu0 %v295
    %361 = vmatprep.subr.bf16.mxu0 %v298
    %362 = vmatpush1.bf16.msra.mxu0 %v297
    %363 = vmatprep.subr.bf16.mxu0 %v300
    %364 = vmatpush1.bf16.msra.mxu0 %v299
    %365 = vmatprep.subr.bf16.mxu0 %v302
    %366 = vmatpush1.bf16.msra.mxu0 %v301
    %367 = vmatprep.subr.bf16.mxu0 %v304
    %368 = vmatpush1.bf16.msra.mxu0 %v303
    %369 = vmatprep.subr.bf16.mxu0 %v306
    %370 = vmatpush1.bf16.msra.mxu0 %v305
    %371 = vmatprep.subr.bf16.mxu0 %v308
    %372 = vmatpush1.bf16.msra.mxu0 %v307
    %373 = vmatprep.mubr.bf16.mxu0 %v150
    %374 = vmatmul.mubr.bf16.gmra.mrb[0].mxu0 %v149
    %v375 = vpop.f32.mrb[0].mxu0
    %v376 = vadd.f32 0.0, %v375
    %v377 = vpop.f32.mrb[0].mxu0
    %v378 = vadd.f32 0.0, %v377
    %v379 = vpop.f32.mrb[0].mxu0
    %v380 = vadd.f32 0.0, %v379
    %v381 = vpop.f32.mrb[0].mxu0
    %v382 = vadd.f32 0.0, %v381
    %383 = vmatprep.mubr.bf16.mxu0 %v152
    %384 = vmatmul.mubr.bf16.gmra.mrb[0].mxu0 %v151
    %v385 = vpop.f32.mrb[0].mxu0
    %v386 = vadd.f32 0.0, %v385
    %v387 = vpop.f32.mrb[0].mxu0
    %v388 = vadd.f32 0.0, %v387
    %v389 = vpop.f32.mrb[0].mxu0
    %v390 = vadd.f32 0.0, %v389
    %v391 = vpop.f32.mrb[0].mxu0
    %v392 = vadd.f32 0.0, %v391
    %393 = vmatprep.mubr.bf16.mxu0 %v154
    %394 = vmatmul.mubr.bf16.gmra.mrb[0].mxu0 %v153
    %v395 = vpop.f32.mrb[0].mxu0
    %v396 = vadd.f32 0.0, %v395
    %v397 = vpop.f32.mrb[0].mxu0
    %v398 = vadd.f32 0.0, %v397
    %v399 = vpop.f32.mrb[0].mxu0
    %v400 = vadd.f32 0.0, %v399
    %v401 = vpop.f32.mrb[0].mxu0
    %v402 = vadd.f32 0.0, %v401
    %403 = vmatprep.mubr.bf16.mxu0 %v156
    %404 = vmatmul.mubr.bf16.gmra.mrb[0].mxu0 %v155
    %v405 = vpop.f32.mrb[0].mxu0
    %v406 = vadd.f32 0.0, %v405
    %v407 = vpop.f32.mrb[0].mxu0
    %v408 = vadd.f32 0.0, %v407
    %v409 = vpop.f32.mrb[0].mxu0
    %v410 = vadd.f32 0.0, %v409
    %v411 = vpop.f32.mrb[0].mxu0
    %v412 = vadd.f32 0.0, %v411
    %413 = vmatprep.mubr.bf16.mxu0 %v158
    %414 = vmatmul.mubr.bf16.gmra.mrb[0].mxu0 %v157
    %v415 = vpop.f32.mrb[0].mxu0
    %v416 = vadd.f32 0.0, %v415
    %v417 = vpop.f32.mrb[0].mxu0
    %v418 = vadd.f32 0.0, %v417
    %v419 = vpop.f32.mrb[0].mxu0
    %v420 = vadd.f32 0.0, %v419
    %v421 = vpop.f32.mrb[0].mxu0
    %v422 = vadd.f32 0.0, %v421
    %423 = vmatprep.mubr.bf16.mxu0 %v160
    %424 = vmatmul.mubr.bf16.gmra.mrb[0].mxu0 %v159
    %v425 = vpop.f32.mrb[0].mxu0
    %v426 = vadd.f32 0.0, %v425
    %v427 = vpop.f32.mrb[0].mxu0
    %v428 = vadd.f32 0.0, %v427
    %v429 = vpop.f32.mrb[0].mxu0
    %v430 = vadd.f32 0.0, %v429
    %v431 = vpop.f32.mrb[0].mxu0
    %v432 = vadd.f32 0.0, %v431
    %433 = vmatprep.mubr.bf16.mxu0 %v162
    %434 = vmatmul.mubr.bf16.gmra.mrb[0].mxu0 %v161
    %v435 = vpop.f32.mrb[0].mxu0
    %v436 = vadd.f32 0.0, %v435
    %v437 = vpop.f32.mrb[0].mxu0
    %v438 = vadd.f32 0.0, %v437
    %v439 = vpop.f32.mrb[0].mxu0
    %v440 = vadd.f32 0.0, %v439
    %v441 = vpop.f32.mrb[0].mxu0
    %v442 = vadd.f32 0.0, %v441
    %443 = vmatprep.mubr.bf16.mxu0 %v164
    %444 = vmatmul.mubr.bf16.gmra.mrb[0].mxu0 %v163
    %v445 = vpop.f32.mrb[0].mxu0
    %v446 = vpop.f32.mrb[0].mxu0
    %v447 = vpop.f32.mrb[0].mxu0
    %v448 = vpop.f32.mrb[0].mxu0
    %449 = vdwg.mxu0
    %s450 = scalar_lea.vmem %s1, 256
    %v451 = vld [vmem:[%s450] sm:$0xff]
    %v452 = vld [vmem:[%s450 + $0x8] sm:$0xff]
    %v453 = vld [vmem:[%s450 + $0x10] sm:$0xff]
    %v454 = vld [vmem:[%s450 + $0x18] sm:$0xff]
    %v455 = vld [vmem:[%s450 + $0x20] sm:$0xff]
    %v456 = vld [vmem:[%s450 + $0x28] sm:$0xff]
    %v457 = vld [vmem:[%s450 + $0x30] sm:$0xff]
    %v458 = vld [vmem:[%s450 + $0x38] sm:$0xff]
    %v459 = vld [vmem:[%s450 + $0x40] sm:$0xff]
    %v460 = vld [vmem:[%s450 + $0x48] sm:$0xff]
    %v461 = vld [vmem:[%s450 + $0x50] sm:$0xff]
    %v462 = vld [vmem:[%s450 + $0x58] sm:$0xff]
    %v463 = vld [vmem:[%s450 + $0x60] sm:$0xff]
    %v464 = vld [vmem:[%s450 + $0x68] sm:$0xff]
    %v465 = vld [vmem:[%s450 + $0x70] sm:$0xff]
    %v466 = vld [vmem:[%s450 + $0x78] sm:$0xff]
    %v467 = vld [vmem:[%s450 + $0x80] sm:$0xff]
    %v468 = vld [vmem:[%s450 + $0x88] sm:$0xff]
    %v469 = vld [vmem:[%s450 + $0x90] sm:$0xff]
    %v470 = vld [vmem:[%s450 + $0x98] sm:$0xff]
    %v471 = vld [vmem:[%s450 + $0xa0] sm:$0xff]
    %v472 = vld [vmem:[%s450 + $0xa8] sm:$0xff]
    %v473 = vld [vmem:[%s450 + $0xb0] sm:$0xff]
    %v474 = vld [vmem:[%s450 + $0xb8] sm:$0xff]
    %v475 = vld [vmem:[%s450 + $0xc0] sm:$0xff]
    %v476 = vld [vmem:[%s450 + $0xc8] sm:$0xff]
    %v477 = vld [vmem:[%s450 + $0xd0] sm:$0xff]
    %v478 = vld [vmem:[%s450 + $0xd8] sm:$0xff]
    %v479 = vld [vmem:[%s450 + $0xe0] sm:$0xff]
    %v480 = vld [vmem:[%s450 + $0xe8] sm:$0xff]
    %v481 = vld [vmem:[%s450 + $0xf0] sm:$0xff]
    %v482 = vld [vmem:[%s450 + $0xf8] sm:$0xff]
    %v515 = vunpack.c.l.b16 %v451
    %v516 = vunpack.c.h.b16 %v451
    %v517 = vunpack.c.l.b16 %v452
    %v518 = vunpack.c.h.b16 %v452
    %v519 = vunpack.c.l.b16 %v453
    %v520 = vunpack.c.h.b16 %v453
    %v521 = vunpack.c.l.b16 %v454
    %v522 = vunpack.c.h.b16 %v454
    %v523 = vunpack.c.l.b16 %v455
    %v524 = vunpack.c.h.b16 %v455
    %v525 = vunpack.c.l.b16 %v456
    %v526 = vunpack.c.h.b16 %v456
    %v527 = vunpack.c.l.b16 %v457
    %v528 = vunpack.c.h.b16 %v457
    %v529 = vunpack.c.l.b16 %v458
    %v530 = vunpack.c.h.b16 %v458
    %v531 = vunpack.c.l.b16 %v459
    %v532 = vunpack.c.h.b16 %v459
    %v533 = vunpack.c.l.b16 %v460
    %v534 = vunpack.c.h.b16 %v460
    %v535 = vunpack.c.l.b16 %v461
    %v536 = vunpack.c.h.b16 %v461
    %v537 = vunpack.c.l.b16 %v462
    %v538 = vunpack.c.h.b16 %v462
    %v539 = vunpack.c.l.b16 %v463
    %v540 = vunpack.c.h.b16 %v463
    %v541 = vunpack.c.l.b16 %v464
    %v542 = vunpack.c.h.b16 %v464
    %v543 = vunpack.c.l.b16 %v465
    %v544 = vunpack.c.h.b16 %v465
    %v545 = vunpack.c.l.b16 %v466
    %v546 = vunpack.c.h.b16 %v466
    %v547 = vunpack.c.l.b16 %v467
    %v548 = vunpack.c.h.b16 %v467
    %v549 = vunpack.c.l.b16 %v468
    %v550 = vunpack.c.h.b16 %v468
    %v551 = vunpack.c.l.b16 %v469
    %v552 = vunpack.c.h.b16 %v469
    %v553 = vunpack.c.l.b16 %v470
    %v554 = vunpack.c.h.b16 %v470
    %v555 = vunpack.c.l.b16 %v471
    %v556 = vunpack.c.h.b16 %v471
    %v557 = vunpack.c.l.b16 %v472
    %v558 = vunpack.c.h.b16 %v472
    %v559 = vunpack.c.l.b16 %v473
    %v560 = vunpack.c.h.b16 %v473
    %v561 = vunpack.c.l.b16 %v474
    %v562 = vunpack.c.h.b16 %v474
    %v563 = vunpack.c.l.b16 %v475
    %v564 = vunpack.c.h.b16 %v475
    %v565 = vunpack.c.l.b16 %v476
    %v566 = vunpack.c.h.b16 %v476
    %v567 = vunpack.c.l.b16 %v477
    %v568 = vunpack.c.h.b16 %v477
    %v569 = vunpack.c.l.b16 %v478
    %v570 = vunpack.c.h.b16 %v478
    %v571 = vunpack.c.l.b16 %v479
    %v572 = vunpack.c.h.b16 %v479
    %v573 = vunpack.c.l.b16 %v480
    %v574 = vunpack.c.h.b16 %v480
    %v575 = vunpack.c.l.b16 %v481
    %v576 = vunpack.c.h.b16 %v481
    %v577 = vunpack.c.l.b16 %v482
    %v578 = vunpack.c.h.b16 %v482
    %v579 = vpack.c.b16 %v517, %v515
    %v580 = vpack.c.b16 %v518, %v516
    %v581 = vpack.c.b16 %v521, %v519
    %v582 = vpack.c.b16 %v522, %v520
    %v583 = vpack.c.b16 %v525, %v523
    %v584 = vpack.c.b16 %v526, %v524
    %v585 = vpack.c.b16 %v529, %v527
    %v586 = vpack.c.b16 %v530, %v528
    %v587 = vpack.c.b16 %v533, %v531
    %v588 = vpack.c.b16 %v534, %v532
    %v589 = vpack.c.b16 %v537, %v535
    %v590 = vpack.c.b16 %v538, %v536
    %v591 = vpack.c.b16 %v541, %v539
    %v592 = vpack.c.b16 %v542, %v540
    %v593 = vpack.c.b16 %v545, %v543
    %v594 = vpack.c.b16 %v546, %v544
    %v595 = vpack.c.b16 %v549, %v547
    %v596 = vpack.c.b16 %v550, %v548
    %v597 = vpack.c.b16 %v553, %v551
    %v598 = vpack.c.b16 %v554, %v552
    %v599 = vpack.c.b16 %v557, %v555
    %v600 = vpack.c.b16 %v558, %v556
    %v601 = vpack.c.b16 %v561, %v559
    %v602 = vpack.c.b16 %v562, %v560
    %v603 = vpack.c.b16 %v565, %v563
    %v604 = vpack.c.b16 %v566, %v564
    %v605 = vpack.c.b16 %v569, %v567
    %v606 = vpack.c.b16 %v570, %v568
    %v607 = vpack.c.b16 %v573, %v571
    %v608 = vpack.c.b16 %v574, %v572
    %v609 = vpack.c.b16 %v577, %v575
    %v610 = vpack.c.b16 %v578, %v576
    %643 = vmatprep.subr.bf16.mxu0 %v580
    %644 = vmatpush1.bf16.msra.mxu0 %v579
    %645 = vmatprep.subr.bf16.mxu0 %v582
    %646 = vmatpush1.bf16.msra.mxu0 %v581
    %647 = vmatprep.subr.bf16.mxu0 %v584
    %648 = vmatpush1.bf16.msra.mxu0 %v583
    %649 = vmatprep.subr.bf16.mxu0 %v586
    %650 = vmatpush1.bf16.msra.mxu0 %v585
    %651 = vmatprep.subr.bf16.mxu0 %v588
    %652 = vmatpush1.bf16.msra.mxu0 %v587
    %653 = vmatprep.subr.bf16.mxu0 %v590
    %654 = vmatpush1.bf16.msra.mxu0 %v589
    %655 = vmatprep.subr.bf16.mxu0 %v592
    %656 = vmatpush1.bf16.msra.mxu0 %v591
    %657 = vmatprep.subr.bf16.mxu0 %v594
    %658 = vmatpush1.bf16.msra.mxu0 %v593
    %659 = vmatprep.subr.bf16.mxu0 %v596
    %660 = vmatpush1.bf16.msra.mxu0 %v595
    %661 = vmatprep.subr.bf16.mxu0 %v598
    %662 = vmatpush1.bf16.msra.mxu0 %v597
    %663 = vmatprep.subr.bf16.mxu0 %v600
    %664 = vmatpush1.bf16.msra.mxu0 %v599
    %665 = vmatprep.subr.bf16.mxu0 %v602
    %666 = vmatpush1.bf16.msra.mxu0 %v601
    %667 = vmatprep.subr.bf16.mxu0 %v604
    %668 = vmatpush1.bf16.msra.mxu0 %v603
    %669 = vmatprep.subr.bf16.mxu0 %v606
    %670 = vmatpush1.bf16.msra.mxu0 %v605
    %671 = vmatprep.subr.bf16.mxu0 %v608
    %672 = vmatpush1.bf16.msra.mxu0 %v607
    %673 = vmatprep.subr.bf16.mxu0 %v610
    %674 = vmatpush1.bf16.msra.mxu0 %v609
    %675 = vmatprep.mubr.bf16.mxu0 %v150
    %676 = vmatmul.mubr.bf16.gmra.mrb[0].mxu0 %v149
    %v677 = vpop.f32.mrb[0].mxu0
    %v678 = vpop.f32.mrb[0].mxu0
    %v679 = vpop.f32.mrb[0].mxu0
    %v680 = vadd.f32 0.0, %v679
    %v681 = vpop.f32.mrb[0].mxu0
    %v682 = vadd.f32 0.0, %v681
    %683 = vmatprep.mubr.bf16.mxu0 %v152
    %684 = vmatmul.mubr.bf16.gmra.mrb[0].mxu0 %v151
    %v685 = vpop.f32.mrb[0].mxu0
    %v686 = vadd.f32 0.0, %v685
    %v687 = vpop.f32.mrb[0].mxu0
    %v688 = vadd.f32 0.0, %v687
    %v689 = vpop.f32.mrb[0].mxu0
    %v690 = vadd.f32 0.0, %v689
    %v691 = vpop.f32.mrb[0].mxu0
    %v692 = vadd.f32 0.0, %v691
    %693 = vmatprep.mubr.bf16.mxu0 %v154
    %694 = vmatmul.mubr.bf16.gmra.mrb[0].mxu0 %v153
    %v695 = vpop.f32.mrb[0].mxu0
    %v696 = vadd.f32 0.0, %v695
    %v697 = vpop.f32.mrb[0].mxu0
    %v698 = vadd.f32 0.0, %v697
    %v699 = vpop.f32.mrb[0].mxu0
    %v700 = vadd.f32 0.0, %v699
    %v701 = vpop.f32.mrb[0].mxu0
    %v702 = vadd.f32 0.0, %v701
    %703 = vmatprep.mubr.bf16.mxu0 %v156
    %704 = vmatmul.mubr.bf16.gmra.mrb[0].mxu0 %v155
    %v705 = vpop.f32.mrb[0].mxu0
    %v706 = vadd.f32 0.0, %v705
    %v707 = vpop.f32.mrb[0].mxu0
    %v708 = vadd.f32 0.0, %v707
    %v709 = vpop.f32.mrb[0].mxu0
    %v710 = vadd.f32 0.0, %v709
    %v711 = vpop.f32.mrb[0].mxu0
    %v712 = vadd.f32 0.0, %v711
    %713 = vmatprep.mubr.bf16.mxu0 %v158
    %714 = vmatmul.mubr.bf16.gmra.mrb[0].mxu0 %v157
    %v715 = vpop.f32.mrb[0].mxu0
    %v716 = vadd.f32 0.0, %v715
    %v717 = vpop.f32.mrb[0].mxu0
    %v718 = vadd.f32 0.0, %v717
    %v719 = vpop.f32.mrb[0].mxu0
    %v720 = vadd.f32 0.0, %v719
    %v721 = vpop.f32.mrb[0].mxu0
    %v722 = vadd.f32 0.0, %v721
    %723 = vmatprep.mubr.bf16.mxu0 %v160
    %724 = vmatmul.mubr.bf16.gmra.mrb[0].mxu0 %v159
    %v725 = vpop.f32.mrb[0].mxu0
    %v726 = vadd.f32 0.0, %v725
    %v727 = vpop.f32.mrb[0].mxu0
    %v728 = vadd.f32 0.0, %v727
    %v729 = vpop.f32.mrb[0].mxu0
    %v730 = vadd.f32 0.0, %v729
    %v731 = vpop.f32.mrb[0].mxu0
    %v732 = vadd.f32 0.0, %v731
    %733 = vmatprep.mubr.bf16.mxu0 %v162
    %734 = vmatmul.mubr.bf16.gmra.mrb[0].mxu0 %v161
    %v735 = vpop.f32.mrb[0].mxu0
    %v736 = vadd.f32 0.0, %v735
    %v737 = vpop.f32.mrb[0].mxu0
    %v738 = vadd.f32 0.0, %v737
    %v739 = vpop.f32.mrb[0].mxu0
    %v740 = vadd.f32 0.0, %v739
    %v741 = vpop.f32.mrb[0].mxu0
    %v742 = vadd.f32 0.0, %v741
    %743 = vmatprep.mubr.bf16.mxu0 %v164
    %744 = vmatmul.mubr.bf16.gmra.mrb[0].mxu0 %v163
    %v745 = vpop.f32.mrb[0].mxu0
    %v746 = vadd.f32 0.0, %v745
    %v747 = vpop.f32.mrb[0].mxu0
    %v748 = vadd.f32 0.0, %v747
    %v749 = vpop.f32.mrb[0].mxu0
    %v750 = vpop.f32.mrb[0].mxu0
    %751 = vdwg.mxu0
    %v752 = vadd.f32 %v376, %v680
    %v753 = vadd.f32 %v378, %v682
    %v754 = vadd.f32 %v380, %v686
    %v755 = vadd.f32 %v382, %v688
    %v756 = vadd.f32 %v386, %v690
    %v757 = vadd.f32 %v388, %v692
    %v758 = vadd.f32 %v390, %v696
    %v759 = vadd.f32 %v392, %v698
    %v760 = vadd.f32 %v396, %v700
    %v761 = vadd.f32 %v398, %v702
    %v762 = vadd.f32 %v400, %v706
    %v763 = vadd.f32 %v402, %v708
    %v764 = vadd.f32 %v406, %v710
    %v765 = vadd.f32 %v408, %v712
    %v766 = vadd.f32 %v410, %v716
    %v767 = vadd.f32 %v412, %v718
    %v768 = vadd.f32 %v416, %v720
    %v769 = vadd.f32 %v418, %v722
    %v770 = vadd.f32 %v420, %v726
    %v771 = vadd.f32 %v422, %v728
    %v772 = vadd.f32 %v426, %v730
    %v773 = vadd.f32 %v428, %v732
    %v774 = vadd.f32 %v430, %v736
    %v775 = vadd.f32 %v432, %v738
    %v776 = vadd.f32 %v436, %v740
    %v777 = vadd.f32 %v438, %v742
    %v778 = vadd.f32 %v440, %v746
    %v779 = vadd.f32 %v442, %v748
    %s780 = scalar_lea.vmem %s1, 512
    %v781 = vld [vmem:[%s780] sm:$0xff]
    %v782 = vld [vmem:[%s780 + $0x8] sm:$0xff]
    %v783 = vld [vmem:[%s780 + $0x10] sm:$0xff]
    %v784 = vld [vmem:[%s780 + $0x18] sm:$0xff]
    %v785 = vld [vmem:[%s780 + $0x20] sm:$0xff]
    %v786 = vld [vmem:[%s780 + $0x28] sm:$0xff]
    %v787 = vld [vmem:[%s780 + $0x30] sm:$0xff]
    %v788 = vld [vmem:[%s780 + $0x38] sm:$0xff]
    %v789 = vld [vmem:[%s780 + $0x40] sm:$0xff]
    %v790 = vld [vmem:[%s780 + $0x48] sm:$0xff]
    %v791 = vld [vmem:[%s780 + $0x50] sm:$0xff]
    %v792 = vld [vmem:[%s780 + $0x58] sm:$0xff]
    %v793 = vld [vmem:[%s780 + $0x60] sm:$0xff]
    %v794 = vld [vmem:[%s780 + $0x68] sm:$0xff]
    %v795 = vld [vmem:[%s780 + $0x70] sm:$0xff]
    %v796 = vld [vmem:[%s780 + $0x78] sm:$0xff]
    %v797 = vld [vmem:[%s780 + $0x80] sm:$0xff]
    %v798 = vld [vmem:[%s780 + $0x88] sm:$0xff]
    %v799 = vld [vmem:[%s780 + $0x90] sm:$0xff]
    %v800 = vld [vmem:[%s780 + $0x98] sm:$0xff]
    %v801 = vld [vmem:[%s780 + $0xa0] sm:$0xff]
    %v802 = vld [vmem:[%s780 + $0xa8] sm:$0xff]
    %v803 = vld [vmem:[%s780 + $0xb0] sm:$0xff]
    %v804 = vld [vmem:[%s780 + $0xb8] sm:$0xff]
    %v805 = vld [vmem:[%s780 + $0xc0] sm:$0xff]
    %v806 = vld [vmem:[%s780 + $0xc8] sm:$0xff]
    %v807 = vld [vmem:[%s780 + $0xd0] sm:$0xff]
    %v808 = vld [vmem:[%s780 + $0xd8] sm:$0xff]
    %v809 = vld [vmem:[%s780 + $0xe0] sm:$0xff]
    %v810 = vld [vmem:[%s780 + $0xe8] sm:$0xff]
    %v811 = vld [vmem:[%s780 + $0xf0] sm:$0xff]
    %v812 = vld [vmem:[%s780 + $0xf8] sm:$0xff]
    %v845 = vunpack.c.l.b16 %v781
    %v846 = vunpack.c.h.b16 %v781
    %v847 = vunpack.c.l.b16 %v782
    %v848 = vunpack.c.h.b16 %v782
    %v849 = vunpack.c.l.b16 %v783
    %v850 = vunpack.c.h.b16 %v783
    %v851 = vunpack.c.l.b16 %v784
    %v852 = vunpack.c.h.b16 %v784
    %v853 = vunpack.c.l.b16 %v785
    %v854 = vunpack.c.h.b16 %v785
    %v855 = vunpack.c.l.b16 %v786
    %v856 = vunpack.c.h.b16 %v786
    %v857 = vunpack.c.l.b16 %v787
    %v858 = vunpack.c.h.b16 %v787
    %v859 = vunpack.c.l.b16 %v788
    %v860 = vunpack.c.h.b16 %v788
    %v861 = vunpack.c.l.b16 %v789
    %v862 = vunpack.c.h.b16 %v789
    %v863 = vunpack.c.l.b16 %v790
    %v864 = vunpack.c.h.b16 %v790
    %v865 = vunpack.c.l.b16 %v791
    %v866 = vunpack.c.h.b16 %v791
    %v867 = vunpack.c.l.b16 %v792
    %v868 = vunpack.c.h.b16 %v792
    %v869 = vunpack.c.l.b16 %v793
    %v870 = vunpack.c.h.b16 %v793
    %v871 = vunpack.c.l.b16 %v794
    %v872 = vunpack.c.h.b16 %v794
    %v873 = vunpack.c.l.b16 %v795
    %v874 = vunpack.c.h.b16 %v795
    %v875 = vunpack.c.l.b16 %v796
    %v876 = vunpack.c.h.b16 %v796
    %v877 = vunpack.c.l.b16 %v797
    %v878 = vunpack.c.h.b16 %v797
    %v879 = vunpack.c.l.b16 %v798
    %v880 = vunpack.c.h.b16 %v798
    %v881 = vunpack.c.l.b16 %v799
    %v882 = vunpack.c.h.b16 %v799
    %v883 = vunpack.c.l.b16 %v800
    %v884 = vunpack.c.h.b16 %v800
    %v885 = vunpack.c.l.b16 %v801
    %v886 = vunpack.c.h.b16 %v801
    %v887 = vunpack.c.l.b16 %v802
    %v888 = vunpack.c.h.b16 %v802
    %v889 = vunpack.c.l.b16 %v803
    %v890 = vunpack.c.h.b16 %v803
    %v891 = vunpack.c.l.b16 %v804
    %v892 = vunpack.c.h.b16 %v804
    %v893 = vunpack.c.l.b16 %v805
    %v894 = vunpack.c.h.b16 %v805
    %v895 = vunpack.c.l.b16 %v806
    %v896 = vunpack.c.h.b16 %v806
    %v897 = vunpack.c.l.b16 %v807
    %v898 = vunpack.c.h.b16 %v807
    %v899 = vunpack.c.l.b16 %v808
    %v900 = vunpack.c.h.b16 %v808
    %v901 = vunpack.c.l.b16 %v809
    %v902 = vunpack.c.h.b16 %v809
    %v903 = vunpack.c.l.b16 %v810
    %v904 = vunpack.c.h.b16 %v810
    %v905 = vunpack.c.l.b16 %v811
    %v906 = vunpack.c.h.b16 %v811
    %v907 = vunpack.c.l.b16 %v812
    %v908 = vunpack.c.h.b16 %v812
    %v909 = vpack.c.b16 %v847, %v845
    %v910 = vpack.c.b16 %v848, %v846
    %v911 = vpack.c.b16 %v851, %v849
    %v912 = vpack.c.b16 %v852, %v850
    %v913 = vpack.c.b16 %v855, %v853
    %v914 = vpack.c.b16 %v856, %v854
    %v915 = vpack.c.b16 %v859, %v857
    %v916 = vpack.c.b16 %v860, %v858
    %v917 = vpack.c.b16 %v863, %v861
    %v918 = vpack.c.b16 %v864, %v862
    %v919 = vpack.c.b16 %v867, %v865
    %v920 = vpack.c.b16 %v868, %v866
    %v921 = vpack.c.b16 %v871, %v869
    %v922 = vpack.c.b16 %v872, %v870
    %v923 = vpack.c.b16 %v875, %v873
    %v924 = vpack.c.b16 %v876, %v874
    %v925 = vpack.c.b16 %v879, %v877
    %v926 = vpack.c.b16 %v880, %v878
    %v927 = vpack.c.b16 %v883, %v881
    %v928 = vpack.c.b16 %v884, %v882
    %v929 = vpack.c.b16 %v887, %v885
    %v930 = vpack.c.b16 %v888, %v886
    %v931 = vpack.c.b16 %v891, %v889
    %v932 = vpack.c.b16 %v892, %v890
    %v933 = vpack.c.b16 %v895, %v893
    %v934 = vpack.c.b16 %v896, %v894
    %v935 = vpack.c.b16 %v899, %v897
    %v936 = vpack.c.b16 %v900, %v898
    %v937 = vpack.c.b16 %v903, %v901
    %v938 = vpack.c.b16 %v904, %v902
    %v939 = vpack.c.b16 %v907, %v905
    %v940 = vpack.c.b16 %v908, %v906
    %973 = vmatprep.subr.bf16.mxu0 %v910
    %974 = vmatpush1.bf16.msra.mxu0 %v909
    %975 = vmatprep.subr.bf16.mxu0 %v912
    %976 = vmatpush1.bf16.msra.mxu0 %v911
    %977 = vmatprep.subr.bf16.mxu0 %v914
    %978 = vmatpush1.bf16.msra.mxu0 %v913
    %979 = vmatprep.subr.bf16.mxu0 %v916
    %980 = vmatpush1.bf16.msra.mxu0 %v915
    %981 = vmatprep.subr.bf16.mxu0 %v918
    %982 = vmatpush1.bf16.msra.mxu0 %v917
    %983 = vmatprep.subr.bf16.mxu0 %v920
    %984 = vmatpush1.bf16.msra.mxu0 %v919
    %985 = vmatprep.subr.bf16.mxu0 %v922
    %986 = vmatpush1.bf16.msra.mxu0 %v921
    %987 = vmatprep.subr.bf16.mxu0 %v924
    %988 = vmatpush1.bf16.msra.mxu0 %v923
    %989 = vmatprep.subr.bf16.mxu0 %v926
    %990 = vmatpush1.bf16.msra.mxu0 %v925
    %991 = vmatprep.subr.bf16.mxu0 %v928
    %992 = vmatpush1.bf16.msra.mxu0 %v927
    %993 = vmatprep.subr.bf16.mxu0 %v930
    %994 = vmatpush1.bf16.msra.mxu0 %v929
    %995 = vmatprep.subr.bf16.mxu0 %v932
    %996 = vmatpush1.bf16.msra.mxu0 %v931
    %997 = vmatprep.subr.bf16.mxu0 %v934
    %998 = vmatpush1.bf16.msra.mxu0 %v933
    %999 = vmatprep.subr.bf16.mxu0 %v936
    %1000 = vmatpush1.bf16.msra.mxu0 %v935
    %1001 = vmatprep.subr.bf16.mxu0 %v938
    %1002 = vmatpush1.bf16.msra.mxu0 %v937
    %1003 = vmatprep.subr.bf16.mxu0 %v940
    %1004 = vmatpush1.bf16.msra.mxu0 %v939
    %1005 = vmatprep.mubr.bf16.mxu0 %v150
    %1006 = vmatmul.mubr.bf16.gmra.mrb[0].mxu0 %v149
    %v1007 = vpop.f32.mrb[0].mxu0
    %v1008 = vpop.f32.mrb[0].mxu0
    %v1009 = vpop.f32.mrb[0].mxu0
    %v1010 = vpop.f32.mrb[0].mxu0
    %1011 = vmatprep.mubr.bf16.mxu0 %v152
    %1012 = vmatmul.mubr.bf16.gmra.mrb[0].mxu0 %v151
    %v1013 = vpop.f32.mrb[0].mxu0
    %v1014 = vadd.f32 0.0, %v1013
    %v1015 = vpop.f32.mrb[0].mxu0
    %v1016 = vadd.f32 0.0, %v1015
    %v1017 = vpop.f32.mrb[0].mxu0
    %v1018 = vadd.f32 0.0, %v1017
    %v1019 = vpop.f32.mrb[0].mxu0
    %v1020 = vadd.f32 0.0, %v1019
    %1021 = vmatprep.mubr.bf16.mxu0 %v154
    %1022 = vmatmul.mubr.bf16.gmra.mrb[0].mxu0 %v153
    %v1023 = vpop.f32.mrb[0].mxu0
    %v1024 = vadd.f32 0.0, %v1023
    %v1025 = vpop.f32.mrb[0].mxu0
    %v1026 = vadd.f32 0.0, %v1025
    %v1027 = vpop.f32.mrb[0].mxu0
    %v1028 = vadd.f32 0.0, %v1027
    %v1029 = vpop.f32.mrb[0].mxu0
    %v1030 = vadd.f32 0.0, %v1029
    %1031 = vmatprep.mubr.bf16.mxu0 %v156
    %1032 = vmatmul.mubr.bf16.gmra.mrb[0].mxu0 %v155
    %v1033 = vpop.f32.mrb[0].mxu0
    %v1034 = vadd.f32 0.0, %v1033
    %v1035 = vpop.f32.mrb[0].mxu0
    %v1036 = vadd.f32 0.0, %v1035
    %v1037 = vpop.f32.mrb[0].mxu0
    %v1038 = vadd.f32 0.0, %v1037
    %v1039 = vpop.f32.mrb[0].mxu0
    %v1040 = vadd.f32 0.0, %v1039
    %1041 = vmatprep.mubr.bf16.mxu0 %v158
    %1042 = vmatmul.mubr.bf16.gmra.mrb[0].mxu0 %v157
    %v1043 = vpop.f32.mrb[0].mxu0
    %v1044 = vadd.f32 0.0, %v1043
    %v1045 = vpop.f32.mrb[0].mxu0
    %v1046 = vadd.f32 0.0, %v1045
    %v1047 = vpop.f32.mrb[0].mxu0
    %v1048 = vadd.f32 0.0, %v1047
    %v1049 = vpop.f32.mrb[0].mxu0
    %v1050 = vadd.f32 0.0, %v1049
    %1051 = vmatprep.mubr.bf16.mxu0 %v160
    %1052 = vmatmul.mubr.bf16.gmra.mrb[0].mxu0 %v159
    %v1053 = vpop.f32.mrb[0].mxu0
    %v1054 = vadd.f32 0.0, %v1053
    %v1055 = vpop.f32.mrb[0].mxu0
    %v1056 = vadd.f32 0.0, %v1055
    %v1057 = vpop.f32.mrb[0].mxu0
    %v1058 = vadd.f32 0.0, %v1057
    %v1059 = vpop.f32.mrb[0].mxu0
    %v1060 = vadd.f32 0.0, %v1059
    %1061 = vmatprep.mubr.bf16.mxu0 %v162
    %1062 = vmatmul.mubr.bf16.gmra.mrb[0].mxu0 %v161
    %v1063 = vpop.f32.mrb[0].mxu0
    %v1064 = vadd.f32 0.0, %v1063
    %v1065 = vpop.f32.mrb[0].mxu0
    %v1066 = vadd.f32 0.0, %v1065
    %v1067 = vpop.f32.mrb[0].mxu0
    %v1068 = vadd.f32 0.0, %v1067
    %v1069 = vpop.f32.mrb[0].mxu0
    %v1070 = vadd.f32 0.0, %v1069
    %1071 = vmatprep.mubr.bf16.mxu0 %v164
    %1072 = vmatmul.mubr.bf16.gmra.mrb[0].mxu0 %v163
    %v1073 = vpop.f32.mrb[0].mxu0
    %v1074 = vadd.f32 0.0, %v1073
    %v1075 = vpop.f32.mrb[0].mxu0
    %v1076 = vadd.f32 0.0, %v1075
    %v1077 = vpop.f32.mrb[0].mxu0
    %v1078 = vadd.f32 0.0, %v1077
    %v1079 = vpop.f32.mrb[0].mxu0
    %v1080 = vadd.f32 0.0, %v1079
    %1081 = vdwg.mxu0
    %v1082 = vadd.f32 %v752, %v1014
    %v1083 = vadd.f32 %v753, %v1016
    %v1084 = vadd.f32 %v754, %v1018
    %v1085 = vadd.f32 %v755, %v1020
    %v1086 = vadd.f32 %v756, %v1024
    %v1087 = vadd.f32 %v757, %v1026
    %v1088 = vadd.f32 %v758, %v1028
    %v1089 = vadd.f32 %v759, %v1030
    %v1090 = vadd.f32 %v760, %v1034
    %v1091 = vadd.f32 %v761, %v1036
    %v1092 = vadd.f32 %v762, %v1038
    %v1093 = vadd.f32 %v763, %v1040
    %v1094 = vadd.f32 %v764, %v1044
    %v1095 = vadd.f32 %v765, %v1046
    %v1096 = vadd.f32 %v766, %v1048
    %v1097 = vadd.f32 %v767, %v1050
    %v1098 = vadd.f32 %v768, %v1054
    %v1099 = vadd.f32 %v769, %v1056
    %v1100 = vadd.f32 %v770, %v1058
    %v1101 = vadd.f32 %v771, %v1060
    %v1102 = vadd.f32 %v772, %v1064
    %v1103 = vadd.f32 %v773, %v1066
    %v1104 = vadd.f32 %v774, %v1068
    %v1105 = vadd.f32 %v775, %v1070
    %v1106 = vadd.f32 %v776, %v1074
    %v1107 = vadd.f32 %v777, %v1076
    %v1108 = vadd.f32 %v778, %v1078
    %v1109 = vadd.f32 %v779, %v1080
    %v1110 = vmax.f32 %v1082, %v1083
    %v1111 = vmax.f32 %v1084, %v1085
    %v1112 = vmax.f32 %v1086, %v1087
    %v1113 = vmax.f32 %v1088, %v1089
    %v1114 = vmax.f32 %v1090, %v1091
    %v1115 = vmax.f32 %v1092, %v1093
    %v1116 = vmax.f32 %v1094, %v1095
    %v1117 = vmax.f32 %v1096, %v1097
    %v1118 = vmax.f32 %v1098, %v1099
    %v1119 = vmax.f32 %v1100, %v1101
    %v1120 = vmax.f32 %v1102, %v1103
    %v1121 = vmax.f32 %v1104, %v1105
    %v1122 = vmax.f32 %v1106, %v1107
    %v1123 = vmax.f32 %v1108, %v1109
    %s1124 = scalar_lea.vmem %s1, 768
    %v1125 = vld [vmem:[%s1124] sm:$0xff]
    %v1126 = vld [vmem:[%s1124 + $0x8] sm:$0xff]
    %v1127 = vld [vmem:[%s1124 + $0x10] sm:$0xff]
    %v1128 = vld [vmem:[%s1124 + $0x18] sm:$0xff]
    %v1129 = vld [vmem:[%s1124 + $0x20] sm:$0xff]
    %v1130 = vld [vmem:[%s1124 + $0x28] sm:$0xff]
    %v1131 = vld [vmem:[%s1124 + $0x30] sm:$0xff]
    %v1132 = vld [vmem:[%s1124 + $0x38] sm:$0xff]
    %v1133 = vld [vmem:[%s1124 + $0x40] sm:$0xff]
    %v1134 = vld [vmem:[%s1124 + $0x48] sm:$0xff]
    %v1135 = vld [vmem:[%s1124 + $0x50] sm:$0xff]
    %v1136 = vld [vmem:[%s1124 + $0x58] sm:$0xff]
    %v1137 = vld [vmem:[%s1124 + $0x60] sm:$0xff]
    %v1138 = vld [vmem:[%s1124 + $0x68] sm:$0xff]
    %v1139 = vld [vmem:[%s1124 + $0x70] sm:$0xff]
    %v1140 = vld [vmem:[%s1124 + $0x78] sm:$0xff]
    %v1141 = vld [vmem:[%s1124 + $0x80] sm:$0xff]
    %v1142 = vld [vmem:[%s1124 + $0x88] sm:$0xff]
    %v1143 = vld [vmem:[%s1124 + $0x90] sm:$0xff]
    %v1144 = vld [vmem:[%s1124 + $0x98] sm:$0xff]
    %v1145 = vld [vmem:[%s1124 + $0xa0] sm:$0xff]
    %v1146 = vld [vmem:[%s1124 + $0xa8] sm:$0xff]
    %v1147 = vld [vmem:[%s1124 + $0xb0] sm:$0xff]
    %v1148 = vld [vmem:[%s1124 + $0xb8] sm:$0xff]
    %v1149 = vld [vmem:[%s1124 + $0xc0] sm:$0xff]
    %v1150 = vld [vmem:[%s1124 + $0xc8] sm:$0xff]
    %v1151 = vld [vmem:[%s1124 + $0xd0] sm:$0xff]
    %v1152 = vld [vmem:[%s1124 + $0xd8] sm:$0xff]
    %v1153 = vld [vmem:[%s1124 + $0xe0] sm:$0xff]
    %v1154 = vld [vmem:[%s1124 + $0xe8] sm:$0xff]
    %v1155 = vld [vmem:[%s1124 + $0xf0] sm:$0xff]
    %v1156 = vld [vmem:[%s1124 + $0xf8] sm:$0xff]
    %v1189 = vunpack.c.l.b16 %v1125
    %v1190 = vunpack.c.h.b16 %v1125
    %v1191 = vunpack.c.l.b16 %v1126
    %v1192 = vunpack.c.h.b16 %v1126
    %v1193 = vunpack.c.l.b16 %v1127
    %v1194 = vunpack.c.h.b16 %v1127
    %v1195 = vunpack.c.l.b16 %v1128
    %v1196 = vunpack.c.h.b16 %v1128
    %v1197 = vunpack.c.l.b16 %v1129
    %v1198 = vunpack.c.h.b16 %v1129
    %v1199 = vunpack.c.l.b16 %v1130
    %v1200 = vunpack.c.h.b16 %v1130
    %v1201 = vunpack.c.l.b16 %v1131
    %v1202 = vunpack.c.h.b16 %v1131
    %v1203 = vunpack.c.l.b16 %v1132
    %v1204 = vunpack.c.h.b16 %v1132
    %v1205 = vunpack.c.l.b16 %v1133
    %v1206 = vunpack.c.h.b16 %v1133
    %v1207 = vunpack.c.l.b16 %v1134
    %v1208 = vunpack.c.h.b16 %v1134
    %v1209 = vunpack.c.l.b16 %v1135
    %v1210 = vunpack.c.h.b16 %v1135
    %v1211 = vunpack.c.l.b16 %v1136
    %v1212 = vunpack.c.h.b16 %v1136
    %v1213 = vunpack.c.l.b16 %v1137
    %v1214 = vunpack.c.h.b16 %v1137
    %v1215 = vunpack.c.l.b16 %v1138
    %v1216 = vunpack.c.h.b16 %v1138
    %v1217 = vunpack.c.l.b16 %v1139
    %v1218 = vunpack.c.h.b16 %v1139
    %v1219 = vunpack.c.l.b16 %v1140
    %v1220 = vunpack.c.h.b16 %v1140
    %v1221 = vunpack.c.l.b16 %v1141
    %v1222 = vunpack.c.h.b16 %v1141
    %v1223 = vunpack.c.l.b16 %v1142
    %v1224 = vunpack.c.h.b16 %v1142
    %v1225 = vunpack.c.l.b16 %v1143
    %v1226 = vunpack.c.h.b16 %v1143
    %v1227 = vunpack.c.l.b16 %v1144
    %v1228 = vunpack.c.h.b16 %v1144
    %v1229 = vunpack.c.l.b16 %v1145
    %v1230 = vunpack.c.h.b16 %v1145
    %v1231 = vunpack.c.l.b16 %v1146
    %v1232 = vunpack.c.h.b16 %v1146
    %v1233 = vunpack.c.l.b16 %v1147
    %v1234 = vunpack.c.h.b16 %v1147
    %v1235 = vunpack.c.l.b16 %v1148
    %v1236 = vunpack.c.h.b16 %v1148
    %v1237 = vunpack.c.l.b16 %v1149
    %v1238 = vunpack.c.h.b16 %v1149
    %v1239 = vunpack.c.l.b16 %v1150
    %v1240 = vunpack.c.h.b16 %v1150
    %v1241 = vunpack.c.l.b16 %v1151
    %v1242 = vunpack.c.h.b16 %v1151
    %v1243 = vunpack.c.l.b16 %v1152
    %v1244 = vunpack.c.h.b16 %v1152
    %v1245 = vunpack.c.l.b16 %v1153
    %v1246 = vunpack.c.h.b16 %v1153
    %v1247 = vunpack.c.l.b16 %v1154
    %v1248 = vunpack.c.h.b16 %v1154
    %v1249 = vunpack.c.l.b16 %v1155
    %v1250 = vunpack.c.h.b16 %v1155
    %v1251 = vunpack.c.l.b16 %v1156
    %v1252 = vunpack.c.h.b16 %v1156
    %v1253 = vpack.c.b16 %v1191, %v1189
    %v1254 = vpack.c.b16 %v1192, %v1190
    %v1255 = vpack.c.b16 %v1195, %v1193
    %v1256 = vpack.c.b16 %v1196, %v1194
    %v1257 = vpack.c.b16 %v1199, %v1197
    %v1258 = vpack.c.b16 %v1200, %v1198
    %v1259 = vpack.c.b16 %v1203, %v1201
    %v1260 = vpack.c.b16 %v1204, %v1202
    %v1261 = vpack.c.b16 %v1207, %v1205
    %v1262 = vpack.c.b16 %v1208, %v1206
    %v1263 = vpack.c.b16 %v1211, %v1209
    %v1264 = vpack.c.b16 %v1212, %v1210
    %v1265 = vpack.c.b16 %v1215, %v1213
    %v1266 = vpack.c.b16 %v1216, %v1214
    %v1267 = vpack.c.b16 %v1219, %v1217
    %v1268 = vpack.c.b16 %v1220, %v1218
    %v1269 = vpack.c.b16 %v1223, %v1221
    %v1270 = vpack.c.b16 %v1224, %v1222
    %v1271 = vpack.c.b16 %v1227, %v1225
    %v1272 = vpack.c.b16 %v1228, %v1226
    %v1273 = vpack.c.b16 %v1231, %v1229
    %v1274 = vpack.c.b16 %v1232, %v1230
    %v1275 = vpack.c.b16 %v1235, %v1233
    %v1276 = vpack.c.b16 %v1236, %v1234
    %v1277 = vpack.c.b16 %v1239, %v1237
    %v1278 = vpack.c.b16 %v1240, %v1238
    %v1279 = vpack.c.b16 %v1243, %v1241
    %v1280 = vpack.c.b16 %v1244, %v1242
    %v1281 = vpack.c.b16 %v1247, %v1245
    %v1282 = vpack.c.b16 %v1248, %v1246
    %v1283 = vpack.c.b16 %v1251, %v1249
    %v1284 = vpack.c.b16 %v1252, %v1250
    %1317 = vmatprep.subr.bf16.mxu0 %v1254
    %1318 = vmatpush1.bf16.msra.mxu0 %v1253
    %1319 = vmatprep.subr.bf16.mxu0 %v1256
    %1320 = vmatpush1.bf16.msra.mxu0 %v1255
    %1321 = vmatprep.subr.bf16.mxu0 %v1258
    %1322 = vmatpush1.bf16.msra.mxu0 %v1257
    %1323 = vmatprep.subr.bf16.mxu0 %v1260
    %1324 = vmatpush1.bf16.msra.mxu0 %v1259
    %1325 = vmatprep.subr.bf16.mxu0 %v1262
    %1326 = vmatpush1.bf16.msra.mxu0 %v1261
    %1327 = vmatprep.subr.bf16.mxu0 %v1264
    %1328 = vmatpush1.bf16.msra.mxu0 %v1263
    %1329 = vmatprep.subr.bf16.mxu0 %v1266
    %1330 = vmatpush1.bf16.msra.mxu0 %v1265
    %1331 = vmatprep.subr.bf16.mxu0 %v1268
    %1332 = vmatpush1.bf16.msra.mxu0 %v1267
    %1333 = vmatprep.subr.bf16.mxu0 %v1270
    %1334 = vmatpush1.bf16.msra.mxu0 %v1269
    %1335 = vmatprep.subr.bf16.mxu0 %v1272
    %1336 = vmatpush1.bf16.msra.mxu0 %v1271
    %1337 = vmatprep.subr.bf16.mxu0 %v1274
    %1338 = vmatpush1.bf16.msra.mxu0 %v1273
    %1339 = vmatprep.subr.bf16.mxu0 %v1276
    %1340 = vmatpush1.bf16.msra.mxu0 %v1275
    %1341 = vmatprep.subr.bf16.mxu0 %v1278
    %1342 = vmatpush1.bf16.msra.mxu0 %v1277
    %1343 = vmatprep.subr.bf16.mxu0 %v1280
    %1344 = vmatpush1.bf16.msra.mxu0 %v1279
    %1345 = vmatprep.subr.bf16.mxu0 %v1282
    %1346 = vmatpush1.bf16.msra.mxu0 %v1281
    %1347 = vmatprep.subr.bf16.mxu0 %v1284
    %1348 = vmatpush1.bf16.msra.mxu0 %v1283
    %1349 = vmatprep.mubr.bf16.mxu0 %v150
    %1350 = vmatmul.mubr.bf16.gmra.mrb[0].mxu0 %v149
    %v1351 = vpop.f32.mrb[0].mxu0
    %v1352 = vadd.f32 0.0, %v1351
    %v1353 = vpop.f32.mrb[0].mxu0
    %v1354 = vadd.f32 0.0, %v1353
    %v1355 = vpop.f32.mrb[0].mxu0
    %v1356 = vadd.f32 0.0, %v1355
    %v1357 = vpop.f32.mrb[0].mxu0
    %v1358 = vadd.f32 0.0, %v1357
    %1359 = vmatprep.mubr.bf16.mxu0 %v152
    %1360 = vmatmul.mubr.bf16.gmra.mrb[0].mxu0 %v151
    %v1361 = vpop.f32.mrb[0].mxu0
    %v1362 = vadd.f32 0.0, %v1361
    %v1363 = vpop.f32.mrb[0].mxu0
    %v1364 = vadd.f32 0.0, %v1363
    %v1365 = vpop.f32.mrb[0].mxu0
    %v1366 = vadd.f32 0.0, %v1365
    %v1367 = vpop.f32.mrb[0].mxu0
    %v1368 = vadd.f32 0.0, %v1367
    %1369 = vmatprep.mubr.bf16.mxu0 %v154
    %1370 = vmatmul.mubr.bf16.gmra.mrb[0].mxu0 %v153
    %v1371 = vpop.f32.mrb[0].mxu0
    %v1372 = vadd.f32 0.0, %v1371
    %v1373 = vpop.f32.mrb[0].mxu0
    %v1374 = vadd.f32 0.0, %v1373
    %v1375 = vpop.f32.mrb[0].mxu0
    %v1376 = vadd.f32 0.0, %v1375
    %v1377 = vpop.f32.mrb[0].mxu0
    %v1378 = vadd.f32 0.0, %v1377
    %1379 = vmatprep.mubr.bf16.mxu0 %v156
    %1380 = vmatmul.mubr.bf16.gmra.mrb[0].mxu0 %v155
    %v1381 = vpop.f32.mrb[0].mxu0
    %v1382 = vadd.f32 0.0, %v1381
    %v1383 = vpop.f32.mrb[0].mxu0
    %v1384 = vadd.f32 0.0, %v1383
    %v1385 = vpop.f32.mrb[0].mxu0
    %v1386 = vadd.f32 0.0, %v1385
    %v1387 = vpop.f32.mrb[0].mxu0
    %v1388 = vadd.f32 0.0, %v1387
    %1389 = vmatprep.mubr.bf16.mxu0 %v158
    %1390 = vmatmul.mubr.bf16.gmra.mrb[0].mxu0 %v157
    %v1391 = vpop.f32.mrb[0].mxu0
    %v1392 = vadd.f32 0.0, %v1391
    %v1393 = vpop.f32.mrb[0].mxu0
    %v1394 = vadd.f32 0.0, %v1393
    %v1395 = vpop.f32.mrb[0].mxu0
    %v1396 = vadd.f32 0.0, %v1395
    %v1397 = vpop.f32.mrb[0].mxu0
    %v1398 = vadd.f32 0.0, %v1397
    %1399 = vmatprep.mubr.bf16.mxu0 %v160
    %1400 = vmatmul.mubr.bf16.gmra.mrb[0].mxu0 %v159
    %v1401 = vpop.f32.mrb[0].mxu0
    %v1402 = vadd.f32 0.0, %v1401
    %v1403 = vpop.f32.mrb[0].mxu0
    %v1404 = vadd.f32 0.0, %v1403
    %v1405 = vpop.f32.mrb[0].mxu0
    %v1406 = vadd.f32 0.0, %v1405
    %v1407 = vpop.f32.mrb[0].mxu0
    %v1408 = vadd.f32 0.0, %v1407
    %1409 = vmatprep.mubr.bf16.mxu0 %v162
    %1410 = vmatmul.mubr.bf16.gmra.mrb[0].mxu0 %v161
    %v1411 = vpop.f32.mrb[0].mxu0
    %v1412 = vadd.f32 0.0, %v1411
    %v1413 = vpop.f32.mrb[0].mxu0
    %v1414 = vadd.f32 0.0, %v1413
    %v1415 = vpop.f32.mrb[0].mxu0
    %v1416 = vadd.f32 0.0, %v1415
    %v1417 = vpop.f32.mrb[0].mxu0
    %v1418 = vadd.f32 0.0, %v1417
    %1419 = vmatprep.mubr.bf16.mxu0 %v164
    %1420 = vmatmul.mubr.bf16.gmra.mrb[0].mxu0 %v163
    %v1421 = vpop.f32.mrb[0].mxu0
    %v1422 = vpop.f32.mrb[0].mxu0
    %v1423 = vpop.f32.mrb[0].mxu0
    %v1424 = vpop.f32.mrb[0].mxu0
    %1425 = vdwg.mxu0
    %s1426 = scalar_lea.vmem %s1, 1024
    %v1427 = vld [vmem:[%s1426] sm:$0xff]
    %v1428 = vld [vmem:[%s1426 + $0x8] sm:$0xff]
    %v1429 = vld [vmem:[%s1426 + $0x10] sm:$0xff]
    %v1430 = vld [vmem:[%s1426 + $0x18] sm:$0xff]
    %v1431 = vld [vmem:[%s1426 + $0x20] sm:$0xff]
    %v1432 = vld [vmem:[%s1426 + $0x28] sm:$0xff]
    %v1433 = vld [vmem:[%s1426 + $0x30] sm:$0xff]
    %v1434 = vld [vmem:[%s1426 + $0x38] sm:$0xff]
    %v1435 = vld [vmem:[%s1426 + $0x40] sm:$0xff]
    %v1436 = vld [vmem:[%s1426 + $0x48] sm:$0xff]
    %v1437 = vld [vmem:[%s1426 + $0x50] sm:$0xff]
    %v1438 = vld [vmem:[%s1426 + $0x58] sm:$0xff]
    %v1439 = vld [vmem:[%s1426 + $0x60] sm:$0xff]
    %v1440 = vld [vmem:[%s1426 + $0x68] sm:$0xff]
    %v1441 = vld [vmem:[%s1426 + $0x70] sm:$0xff]
    %v1442 = vld [vmem:[%s1426 + $0x78] sm:$0xff]
    %v1443 = vld [vmem:[%s1426 + $0x80] sm:$0xff]
    %v1444 = vld [vmem:[%s1426 + $0x88] sm:$0xff]
    %v1445 = vld [vmem:[%s1426 + $0x90] sm:$0xff]
    %v1446 = vld [vmem:[%s1426 + $0x98] sm:$0xff]
    %v1447 = vld [vmem:[%s1426 + $0xa0] sm:$0xff]
    %v1448 = vld [vmem:[%s1426 + $0xa8] sm:$0xff]
    %v1449 = vld [vmem:[%s1426 + $0xb0] sm:$0xff]
    %v1450 = vld [vmem:[%s1426 + $0xb8] sm:$0xff]
    %v1451 = vld [vmem:[%s1426 + $0xc0] sm:$0xff]
    %v1452 = vld [vmem:[%s1426 + $0xc8] sm:$0xff]
    %v1453 = vld [vmem:[%s1426 + $0xd0] sm:$0xff]
    %v1454 = vld [vmem:[%s1426 + $0xd8] sm:$0xff]
    %v1455 = vld [vmem:[%s1426 + $0xe0] sm:$0xff]
    %v1456 = vld [vmem:[%s1426 + $0xe8] sm:$0xff]
    %v1457 = vld [vmem:[%s1426 + $0xf0] sm:$0xff]
    %v1458 = vld [vmem:[%s1426 + $0xf8] sm:$0xff]
    %v1491 = vunpack.c.l.b16 %v1427
    %v1492 = vunpack.c.h.b16 %v1427
    %v1493 = vunpack.c.l.b16 %v1428
    %v1494 = vunpack.c.h.b16 %v1428
    %v1495 = vunpack.c.l.b16 %v1429
    %v1496 = vunpack.c.h.b16 %v1429
    %v1497 = vunpack.c.l.b16 %v1430
    %v1498 = vunpack.c.h.b16 %v1430
    %v1499 = vunpack.c.l.b16 %v1431
    %v1500 = vunpack.c.h.b16 %v1431
    %v1501 = vunpack.c.l.b16 %v1432
    %v1502 = vunpack.c.h.b16 %v1432
    %v1503 = vunpack.c.l.b16 %v1433
    %v1504 = vunpack.c.h.b16 %v1433
    %v1505 = vunpack.c.l.b16 %v1434
    %v1506 = vunpack.c.h.b16 %v1434
    %v1507 = vunpack.c.l.b16 %v1435
    %v1508 = vunpack.c.h.b16 %v1435
    %v1509 = vunpack.c.l.b16 %v1436
    %v1510 = vunpack.c.h.b16 %v1436
    %v1511 = vunpack.c.l.b16 %v1437
    %v1512 = vunpack.c.h.b16 %v1437
    %v1513 = vunpack.c.l.b16 %v1438
    %v1514 = vunpack.c.h.b16 %v1438
    %v1515 = vunpack.c.l.b16 %v1439
    %v1516 = vunpack.c.h.b16 %v1439
    %v1517 = vunpack.c.l.b16 %v1440
    %v1518 = vunpack.c.h.b16 %v1440
    %v1519 = vunpack.c.l.b16 %v1441
    %v1520 = vunpack.c.h.b16 %v1441
    %v1521 = vunpack.c.l.b16 %v1442
    %v1522 = vunpack.c.h.b16 %v1442
    %v1523 = vunpack.c.l.b16 %v1443
    %v1524 = vunpack.c.h.b16 %v1443
    %v1525 = vunpack.c.l.b16 %v1444
    %v1526 = vunpack.c.h.b16 %v1444
    %v1527 = vunpack.c.l.b16 %v1445
    %v1528 = vunpack.c.h.b16 %v1445
    %v1529 = vunpack.c.l.b16 %v1446
    %v1530 = vunpack.c.h.b16 %v1446
    %v1531 = vunpack.c.l.b16 %v1447
    %v1532 = vunpack.c.h.b16 %v1447
    %v1533 = vunpack.c.l.b16 %v1448
    %v1534 = vunpack.c.h.b16 %v1448
    %v1535 = vunpack.c.l.b16 %v1449
    %v1536 = vunpack.c.h.b16 %v1449
    %v1537 = vunpack.c.l.b16 %v1450
    %v1538 = vunpack.c.h.b16 %v1450
    %v1539 = vunpack.c.l.b16 %v1451
    %v1540 = vunpack.c.h.b16 %v1451
    %v1541 = vunpack.c.l.b16 %v1452
    %v1542 = vunpack.c.h.b16 %v1452
    %v1543 = vunpack.c.l.b16 %v1453
    %v1544 = vunpack.c.h.b16 %v1453
    %v1545 = vunpack.c.l.b16 %v1454
    %v1546 = vunpack.c.h.b16 %v1454
    %v1547 = vunpack.c.l.b16 %v1455
    %v1548 = vunpack.c.h.b16 %v1455
    %v1549 = vunpack.c.l.b16 %v1456
    %v1550 = vunpack.c.h.b16 %v1456
    %v1551 = vunpack.c.l.b16 %v1457
    %v1552 = vunpack.c.h.b16 %v1457
    %v1553 = vunpack.c.l.b16 %v1458
    %v1554 = vunpack.c.h.b16 %v1458
    %v1555 = vpack.c.b16 %v1493, %v1491
    %v1556 = vpack.c.b16 %v1494, %v1492
    %v1557 = vpack.c.b16 %v1497, %v1495
    %v1558 = vpack.c.b16 %v1498, %v1496
    %v1559 = vpack.c.b16 %v1501, %v1499
    %v1560 = vpack.c.b16 %v1502, %v1500
    %v1561 = vpack.c.b16 %v1505, %v1503
    %v1562 = vpack.c.b16 %v1506, %v1504
    %v1563 = vpack.c.b16 %v1509, %v1507
    %v1564 = vpack.c.b16 %v1510, %v1508
    %v1565 = vpack.c.b16 %v1513, %v1511
    %v1566 = vpack.c.b16 %v1514, %v1512
    %v1567 = vpack.c.b16 %v1517, %v1515
    %v1568 = vpack.c.b16 %v1518, %v1516
    %v1569 = vpack.c.b16 %v1521, %v1519
    %v1570 = vpack.c.b16 %v1522, %v1520
    %v1571 = vpack.c.b16 %v1525, %v1523
    %v1572 = vpack.c.b16 %v1526, %v1524
    %v1573 = vpack.c.b16 %v1529, %v1527
    %v1574 = vpack.c.b16 %v1530, %v1528
    %v1575 = vpack.c.b16 %v1533, %v1531
    %v1576 = vpack.c.b16 %v1534, %v1532
    %v1577 = vpack.c.b16 %v1537, %v1535
    %v1578 = vpack.c.b16 %v1538, %v1536
    %v1579 = vpack.c.b16 %v1541, %v1539
    %v1580 = vpack.c.b16 %v1542, %v1540
    %v1581 = vpack.c.b16 %v1545, %v1543
    %v1582 = vpack.c.b16 %v1546, %v1544
    %v1583 = vpack.c.b16 %v1549, %v1547
    %v1584 = vpack.c.b16 %v1550, %v1548
    %v1585 = vpack.c.b16 %v1553, %v1551
    %v1586 = vpack.c.b16 %v1554, %v1552
    %1619 = vmatprep.subr.bf16.mxu0 %v1556
    %1620 = vmatpush1.bf16.msra.mxu0 %v1555
    %1621 = vmatprep.subr.bf16.mxu0 %v1558
    %1622 = vmatpush1.bf16.msra.mxu0 %v1557
    %1623 = vmatprep.subr.bf16.mxu0 %v1560
    %1624 = vmatpush1.bf16.msra.mxu0 %v1559
    %1625 = vmatprep.subr.bf16.mxu0 %v1562
    %1626 = vmatpush1.bf16.msra.mxu0 %v1561
    %1627 = vmatprep.subr.bf16.mxu0 %v1564
    %1628 = vmatpush1.bf16.msra.mxu0 %v1563
    %1629 = vmatprep.subr.bf16.mxu0 %v1566
    %1630 = vmatpush1.bf16.msra.mxu0 %v1565
    %1631 = vmatprep.subr.bf16.mxu0 %v1568
    %1632 = vmatpush1.bf16.msra.mxu0 %v1567
    %1633 = vmatprep.subr.bf16.mxu0 %v1570
    %1634 = vmatpush1.bf16.msra.mxu0 %v1569
    %1635 = vmatprep.subr.bf16.mxu0 %v1572
    %1636 = vmatpush1.bf16.msra.mxu0 %v1571
    %1637 = vmatprep.subr.bf16.mxu0 %v1574
    %1638 = vmatpush1.bf16.msra.mxu0 %v1573
    %1639 = vmatprep.subr.bf16.mxu0 %v1576
    %1640 = vmatpush1.bf16.msra.mxu0 %v1575
    %1641 = vmatprep.subr.bf16.mxu0 %v1578
    %1642 = vmatpush1.bf16.msra.mxu0 %v1577
    %1643 = vmatprep.subr.bf16.mxu0 %v1580
    %1644 = vmatpush1.bf16.msra.mxu0 %v1579
    %1645 = vmatprep.subr.bf16.mxu0 %v1582
    %1646 = vmatpush1.bf16.msra.mxu0 %v1581
    %1647 = vmatprep.subr.bf16.mxu0 %v1584
    %1648 = vmatpush1.bf16.msra.mxu0 %v1583
    %1649 = vmatprep.subr.bf16.mxu0 %v1586
    %1650 = vmatpush1.bf16.msra.mxu0 %v1585
    %1651 = vmatprep.mubr.bf16.mxu0 %v150
    %1652 = vmatmul.mubr.bf16.gmra.mrb[0].mxu0 %v149
    %v1653 = vpop.f32.mrb[0].mxu0
    %v1654 = vpop.f32.mrb[0].mxu0
    %v1655 = vpop.f32.mrb[0].mxu0
    %v1656 = vadd.f32 0.0, %v1655
    %v1657 = vpop.f32.mrb[0].mxu0
    %v1658 = vadd.f32 0.0, %v1657
    %1659 = vmatprep.mubr.bf16.mxu0 %v152
    %1660 = vmatmul.mubr.bf16.gmra.mrb[0].mxu0 %v151
    %v1661 = vpop.f32.mrb[0].mxu0
    %v1662 = vadd.f32 0.0, %v1661
    %v1663 = vpop.f32.mrb[0].mxu0
    %v1664 = vadd.f32 0.0, %v1663
    %v1665 = vpop.f32.mrb[0].mxu0
    %v1666 = vadd.f32 0.0, %v1665
    %v1667 = vpop.f32.mrb[0].mxu0
    %v1668 = vadd.f32 0.0, %v1667
    %1669 = vmatprep.mubr.bf16.mxu0 %v154
    %1670 = vmatmul.mubr.bf16.gmra.mrb[0].mxu0 %v153
    %v1671 = vpop.f32.mrb[0].mxu0
    %v1672 = vadd.f32 0.0, %v1671
    %v1673 = vpop.f32.mrb[0].mxu0
    %v1674 = vadd.f32 0.0, %v1673
    %v1675 = vpop.f32.mrb[0].mxu0
    %v1676 = vadd.f32 0.0, %v1675
    %v1677 = vpop.f32.mrb[0].mxu0
    %v1678 = vadd.f32 0.0, %v1677
    %1679 = vmatprep.mubr.bf16.mxu0 %v156
    %1680 = vmatmul.mubr.bf16.gmra.mrb[0].mxu0 %v155
    %v1681 = vpop.f32.mrb[0].mxu0
    %v1682 = vadd.f32 0.0, %v1681
    %v1683 = vpop.f32.mrb[0].mxu0
    %v1684 = vadd.f32 0.0, %v1683
    %v1685 = vpop.f32.mrb[0].mxu0
    %v1686 = vadd.f32 0.0, %v1685
    %v1687 = vpop.f32.mrb[0].mxu0
    %v1688 = vadd.f32 0.0, %v1687
    %1689 = vmatprep.mubr.bf16.mxu0 %v158
    %1690 = vmatmul.mubr.bf16.gmra.mrb[0].mxu0 %v157
    %v1691 = vpop.f32.mrb[0].mxu0
    %v1692 = vadd.f32 0.0, %v1691
    %v1693 = vpop.f32.mrb[0].mxu0
    %v1694 = vadd.f32 0.0, %v1693
    %v1695 = vpop.f32.mrb[0].mxu0
    %v1696 = vadd.f32 0.0, %v1695
    %v1697 = vpop.f32.mrb[0].mxu0
    %v1698 = vadd.f32 0.0, %v1697
    %1699 = vmatprep.mubr.bf16.mxu0 %v160
    %1700 = vmatmul.mubr.bf16.gmra.mrb[0].mxu0 %v159
    %v1701 = vpop.f32.mrb[0].mxu0
    %v1702 = vadd.f32 0.0, %v1701
    %v1703 = vpop.f32.mrb[0].mxu0
    %v1704 = vadd.f32 0.0, %v1703
    %v1705 = vpop.f32.mrb[0].mxu0
    %v1706 = vadd.f32 0.0, %v1705
    %v1707 = vpop.f32.mrb[0].mxu0
    %v1708 = vadd.f32 0.0, %v1707
    %1709 = vmatprep.mubr.bf16.mxu0 %v162
    %1710 = vmatmul.mubr.bf16.gmra.mrb[0].mxu0 %v161
    %v1711 = vpop.f32.mrb[0].mxu0
    %v1712 = vadd.f32 0.0, %v1711
    %v1713 = vpop.f32.mrb[0].mxu0
    %v1714 = vadd.f32 0.0, %v1713
    %v1715 = vpop.f32.mrb[0].mxu0
    %v1716 = vadd.f32 0.0, %v1715
    %v1717 = vpop.f32.mrb[0].mxu0
    %v1718 = vadd.f32 0.0, %v1717
    %1719 = vmatprep.mubr.bf16.mxu0 %v164
    %1720 = vmatmul.mubr.bf16.gmra.mrb[0].mxu0 %v163
    %v1721 = vpop.f32.mrb[0].mxu0
    %v1722 = vadd.f32 0.0, %v1721
    %v1723 = vpop.f32.mrb[0].mxu0
    %v1724 = vadd.f32 0.0, %v1723
    %v1725 = vpop.f32.mrb[0].mxu0
    %v1726 = vpop.f32.mrb[0].mxu0
    %1727 = vdwg.mxu0
    %v1728 = vadd.f32 %v1352, %v1656
    %v1729 = vadd.f32 %v1354, %v1658
    %v1730 = vadd.f32 %v1356, %v1662
    %v1731 = vadd.f32 %v1358, %v1664
    %v1732 = vadd.f32 %v1362, %v1666
    %v1733 = vadd.f32 %v1364, %v1668
    %v1734 = vadd.f32 %v1366, %v1672
    %v1735 = vadd.f32 %v1368, %v1674
    %v1736 = vadd.f32 %v1372, %v1676
    %v1737 = vadd.f32 %v1374, %v1678
    %v1738 = vadd.f32 %v1376, %v1682
    %v1739 = vadd.f32 %v1378, %v1684
    %v1740 = vadd.f32 %v1382, %v1686
    %v1741 = vadd.f32 %v1384, %v1688
    %v1742 = vadd.f32 %v1386, %v1692
    %v1743 = vadd.f32 %v1388, %v1694
    %v1744 = vadd.f32 %v1392, %v1696
    %v1745 = vadd.f32 %v1394, %v1698
    %v1746 = vadd.f32 %v1396, %v1702
    %v1747 = vadd.f32 %v1398, %v1704
    %v1748 = vadd.f32 %v1402, %v1706
    %v1749 = vadd.f32 %v1404, %v1708
    %v1750 = vadd.f32 %v1406, %v1712
    %v1751 = vadd.f32 %v1408, %v1714
    %v1752 = vadd.f32 %v1412, %v1716
    %v1753 = vadd.f32 %v1414, %v1718
    %v1754 = vadd.f32 %v1416, %v1722
    %v1755 = vadd.f32 %v1418, %v1724
    %s1756 = scalar_lea.vmem %s1, 1280
    %v1757 = vld [vmem:[%s1756] sm:$0xff]
    %v1758 = vld [vmem:[%s1756 + $0x8] sm:$0xff]
    %v1759 = vld [vmem:[%s1756 + $0x10] sm:$0xff]
    %v1760 = vld [vmem:[%s1756 + $0x18] sm:$0xff]
    %v1761 = vld [vmem:[%s1756 + $0x20] sm:$0xff]
    %v1762 = vld [vmem:[%s1756 + $0x28] sm:$0xff]
    %v1763 = vld [vmem:[%s1756 + $0x30] sm:$0xff]
    %v1764 = vld [vmem:[%s1756 + $0x38] sm:$0xff]
    %v1765 = vld [vmem:[%s1756 + $0x40] sm:$0xff]
    %v1766 = vld [vmem:[%s1756 + $0x48] sm:$0xff]
    %v1767 = vld [vmem:[%s1756 + $0x50] sm:$0xff]
    %v1768 = vld [vmem:[%s1756 + $0x58] sm:$0xff]
    %v1769 = vld [vmem:[%s1756 + $0x60] sm:$0xff]
    %v1770 = vld [vmem:[%s1756 + $0x68] sm:$0xff]
    %v1771 = vld [vmem:[%s1756 + $0x70] sm:$0xff]
    %v1772 = vld [vmem:[%s1756 + $0x78] sm:$0xff]
    %v1773 = vld [vmem:[%s1756 + $0x80] sm:$0xff]
    %v1774 = vld [vmem:[%s1756 + $0x88] sm:$0xff]
    %v1775 = vld [vmem:[%s1756 + $0x90] sm:$0xff]
    %v1776 = vld [vmem:[%s1756 + $0x98] sm:$0xff]
    %v1777 = vld [vmem:[%s1756 + $0xa0] sm:$0xff]
    %v1778 = vld [vmem:[%s1756 + $0xa8] sm:$0xff]
    %v1779 = vld [vmem:[%s1756 + $0xb0] sm:$0xff]
    %v1780 = vld [vmem:[%s1756 + $0xb8] sm:$0xff]
    %v1781 = vld [vmem:[%s1756 + $0xc0] sm:$0xff]
    %v1782 = vld [vmem:[%s1756 + $0xc8] sm:$0xff]
    %v1783 = vld [vmem:[%s1756 + $0xd0] sm:$0xff]
    %v1784 = vld [vmem:[%s1756 + $0xd8] sm:$0xff]
    %v1785 = vld [vmem:[%s1756 + $0xe0] sm:$0xff]
    %v1786 = vld [vmem:[%s1756 + $0xe8] sm:$0xff]
    %v1787 = vld [vmem:[%s1756 + $0xf0] sm:$0xff]
    %v1788 = vld [vmem:[%s1756 + $0xf8] sm:$0xff]
    %v1821 = vunpack.c.l.b16 %v1757
    %v1822 = vunpack.c.h.b16 %v1757
    %v1823 = vunpack.c.l.b16 %v1758
    %v1824 = vunpack.c.h.b16 %v1758
    %v1825 = vunpack.c.l.b16 %v1759
    %v1826 = vunpack.c.h.b16 %v1759
    %v1827 = vunpack.c.l.b16 %v1760
    %v1828 = vunpack.c.h.b16 %v1760
    %v1829 = vunpack.c.l.b16 %v1761
    %v1830 = vunpack.c.h.b16 %v1761
    %v1831 = vunpack.c.l.b16 %v1762
    %v1832 = vunpack.c.h.b16 %v1762
    %v1833 = vunpack.c.l.b16 %v1763
    %v1834 = vunpack.c.h.b16 %v1763
    %v1835 = vunpack.c.l.b16 %v1764
    %v1836 = vunpack.c.h.b16 %v1764
    %v1837 = vunpack.c.l.b16 %v1765
    %v1838 = vunpack.c.h.b16 %v1765
    %v1839 = vunpack.c.l.b16 %v1766
    %v1840 = vunpack.c.h.b16 %v1766
    %v1841 = vunpack.c.l.b16 %v1767
    %v1842 = vunpack.c.h.b16 %v1767
    %v1843 = vunpack.c.l.b16 %v1768
    %v1844 = vunpack.c.h.b16 %v1768
    %v1845 = vunpack.c.l.b16 %v1769
    %v1846 = vunpack.c.h.b16 %v1769
    %v1847 = vunpack.c.l.b16 %v1770
    %v1848 = vunpack.c.h.b16 %v1770
    %v1849 = vunpack.c.l.b16 %v1771
    %v1850 = vunpack.c.h.b16 %v1771
    %v1851 = vunpack.c.l.b16 %v1772
    %v1852 = vunpack.c.h.b16 %v1772
    %v1853 = vunpack.c.l.b16 %v1773
    %v1854 = vunpack.c.h.b16 %v1773
    %v1855 = vunpack.c.l.b16 %v1774
    %v1856 = vunpack.c.h.b16 %v1774
    %v1857 = vunpack.c.l.b16 %v1775
    %v1858 = vunpack.c.h.b16 %v1775
    %v1859 = vunpack.c.l.b16 %v1776
    %v1860 = vunpack.c.h.b16 %v1776
    %v1861 = vunpack.c.l.b16 %v1777
    %v1862 = vunpack.c.h.b16 %v1777
    %v1863 = vunpack.c.l.b16 %v1778
    %v1864 = vunpack.c.h.b16 %v1778
    %v1865 = vunpack.c.l.b16 %v1779
    %v1866 = vunpack.c.h.b16 %v1779
    %v1867 = vunpack.c.l.b16 %v1780
    %v1868 = vunpack.c.h.b16 %v1780
    %v1869 = vunpack.c.l.b16 %v1781
    %v1870 = vunpack.c.h.b16 %v1781
    %v1871 = vunpack.c.l.b16 %v1782
    %v1872 = vunpack.c.h.b16 %v1782
    %v1873 = vunpack.c.l.b16 %v1783
    %v1874 = vunpack.c.h.b16 %v1783
    %v1875 = vunpack.c.l.b16 %v1784
    %v1876 = vunpack.c.h.b16 %v1784
    %v1877 = vunpack.c.l.b16 %v1785
    %v1878 = vunpack.c.h.b16 %v1785
    %v1879 = vunpack.c.l.b16 %v1786
    %v1880 = vunpack.c.h.b16 %v1786
    %v1881 = vunpack.c.l.b16 %v1787
    %v1882 = vunpack.c.h.b16 %v1787
    %v1883 = vunpack.c.l.b16 %v1788
    %v1884 = vunpack.c.h.b16 %v1788
    %v1885 = vpack.c.b16 %v1823, %v1821
    %v1886 = vpack.c.b16 %v1824, %v1822
    %v1887 = vpack.c.b16 %v1827, %v1825
    %v1888 = vpack.c.b16 %v1828, %v1826
    %v1889 = vpack.c.b16 %v1831, %v1829
    %v1890 = vpack.c.b16 %v1832, %v1830
    %v1891 = vpack.c.b16 %v1835, %v1833
    %v1892 = vpack.c.b16 %v1836, %v1834
    %v1893 = vpack.c.b16 %v1839, %v1837
    %v1894 = vpack.c.b16 %v1840, %v1838
    %v1895 = vpack.c.b16 %v1843, %v1841
    %v1896 = vpack.c.b16 %v1844, %v1842
    %v1897 = vpack.c.b16 %v1847, %v1845
    %v1898 = vpack.c.b16 %v1848, %v1846
    %v1899 = vpack.c.b16 %v1851, %v1849
    %v1900 = vpack.c.b16 %v1852, %v1850
    %v1901 = vpack.c.b16 %v1855, %v1853
    %v1902 = vpack.c.b16 %v1856, %v1854
    %v1903 = vpack.c.b16 %v1859, %v1857
    %v1904 = vpack.c.b16 %v1860, %v1858
    %v1905 = vpack.c.b16 %v1863, %v1861
    %v1906 = vpack.c.b16 %v1864, %v1862
    %v1907 = vpack.c.b16 %v1867, %v1865
    %v1908 = vpack.c.b16 %v1868, %v1866
    %v1909 = vpack.c.b16 %v1871, %v1869
    %v1910 = vpack.c.b16 %v1872, %v1870
    %v1911 = vpack.c.b16 %v1875, %v1873
    %v1912 = vpack.c.b16 %v1876, %v1874
    %v1913 = vpack.c.b16 %v1879, %v1877
    %v1914 = vpack.c.b16 %v1880, %v1878
    %v1915 = vpack.c.b16 %v1883, %v1881
    %v1916 = vpack.c.b16 %v1884, %v1882
    %1949 = vmatprep.subr.bf16.mxu0 %v1886
    %1950 = vmatpush1.bf16.msra.mxu0 %v1885
    %1951 = vmatprep.subr.bf16.mxu0 %v1888
    %1952 = vmatpush1.bf16.msra.mxu0 %v1887
    %1953 = vmatprep.subr.bf16.mxu0 %v1890
    %1954 = vmatpush1.bf16.msra.mxu0 %v1889
    %1955 = vmatprep.subr.bf16.mxu0 %v1892
    %1956 = vmatpush1.bf16.msra.mxu0 %v1891
    %1957 = vmatprep.subr.bf16.mxu0 %v1894
    %1958 = vmatpush1.bf16.msra.mxu0 %v1893
    %1959 = vmatprep.subr.bf16.mxu0 %v1896
    %1960 = vmatpush1.bf16.msra.mxu0 %v1895
    %1961 = vmatprep.subr.bf16.mxu0 %v1898
    %1962 = vmatpush1.bf16.msra.mxu0 %v1897
    %1963 = vmatprep.subr.bf16.mxu0 %v1900
    %1964 = vmatpush1.bf16.msra.mxu0 %v1899
    %1965 = vmatprep.subr.bf16.mxu0 %v1902
    %1966 = vmatpush1.bf16.msra.mxu0 %v1901
    %1967 = vmatprep.subr.bf16.mxu0 %v1904
    %1968 = vmatpush1.bf16.msra.mxu0 %v1903
    %1969 = vmatprep.subr.bf16.mxu0 %v1906
    %1970 = vmatpush1.bf16.msra.mxu0 %v1905
    %1971 = vmatprep.subr.bf16.mxu0 %v1908
    %1972 = vmatpush1.bf16.msra.mxu0 %v1907
    %1973 = vmatprep.subr.bf16.mxu0 %v1910
    %1974 = vmatpush1.bf16.msra.mxu0 %v1909
    %1975 = vmatprep.subr.bf16.mxu0 %v1912
    %1976 = vmatpush1.bf16.msra.mxu0 %v1911
    %1977 = vmatprep.subr.bf16.mxu0 %v1914
    %1978 = vmatpush1.bf16.msra.mxu0 %v1913
    %1979 = vmatprep.subr.bf16.mxu0 %v1916
    %1980 = vmatpush1.bf16.msra.mxu0 %v1915
    %1981 = vmatprep.mubr.bf16.mxu0 %v150
    %1982 = vmatmul.mubr.bf16.gmra.mrb[0].mxu0 %v149
    %v1983 = vpop.f32.mrb[0].mxu0
    %v1984 = vpop.f32.mrb[0].mxu0
    %v1985 = vpop.f32.mrb[0].mxu0
    %v1986 = vpop.f32.mrb[0].mxu0
    %1987 = vmatprep.mubr.bf16.mxu0 %v152
    %1988 = vmatmul.mubr.bf16.gmra.mrb[0].mxu0 %v151
    %v1989 = vpop.f32.mrb[0].mxu0
    %v1990 = vadd.f32 0.0, %v1989
    %v1991 = vpop.f32.mrb[0].mxu0
    %v1992 = vadd.f32 0.0, %v1991
    %v1993 = vpop.f32.mrb[0].mxu0
    %v1994 = vadd.f32 0.0, %v1993
    %v1995 = vpop.f32.mrb[0].mxu0
    %v1996 = vadd.f32 0.0, %v1995
    %1997 = vmatprep.mubr.bf16.mxu0 %v154
    %1998 = vmatmul.mubr.bf16.gmra.mrb[0].mxu0 %v153
    %v1999 = vpop.f32.mrb[0].mxu0
    %v2000 = vadd.f32 0.0, %v1999
    %v2001 = vpop.f32.mrb[0].mxu0
    %v2002 = vadd.f32 0.0, %v2001
    %v2003 = vpop.f32.mrb[0].mxu0
    %v2004 = vadd.f32 0.0, %v2003
    %v2005 = vpop.f32.mrb[0].mxu0
    %v2006 = vadd.f32 0.0, %v2005
    %2007 = vmatprep.mubr.bf16.mxu0 %v156
    %2008 = vmatmul.mubr.bf16.gmra.mrb[0].mxu0 %v155
    %v2009 = vpop.f32.mrb[0].mxu0
    %v2010 = vadd.f32 0.0, %v2009
    %v2011 = vpop.f32.mrb[0].mxu0
    %v2012 = vadd.f32 0.0, %v2011
    %v2013 = vpop.f32.mrb[0].mxu0
    %v2014 = vadd.f32 0.0, %v2013
    %v2015 = vpop.f32.mrb[0].mxu0
    %v2016 = vadd.f32 0.0, %v2015
    %2017 = vmatprep.mubr.bf16.mxu0 %v158
    %2018 = vmatmul.mubr.bf16.gmra.mrb[0].mxu0 %v157
    %v2019 = vpop.f32.mrb[0].mxu0
    %v2020 = vadd.f32 0.0, %v2019
    %v2021 = vpop.f32.mrb[0].mxu0
    %v2022 = vadd.f32 0.0, %v2021
    %v2023 = vpop.f32.mrb[0].mxu0
    %v2024 = vadd.f32 0.0, %v2023
    %v2025 = vpop.f32.mrb[0].mxu0
    %v2026 = vadd.f32 0.0, %v2025
    %2027 = vmatprep.mubr.bf16.mxu0 %v160
    %2028 = vmatmul.mubr.bf16.gmra.mrb[0].mxu0 %v159
    %v2029 = vpop.f32.mrb[0].mxu0
    %v2030 = vadd.f32 0.0, %v2029
    %v2031 = vpop.f32.mrb[0].mxu0
    %v2032 = vadd.f32 0.0, %v2031
    %v2033 = vpop.f32.mrb[0].mxu0
    %v2034 = vadd.f32 0.0, %v2033
    %v2035 = vpop.f32.mrb[0].mxu0
    %v2036 = vadd.f32 0.0, %v2035
    %2037 = vmatprep.mubr.bf16.mxu0 %v162
    %2038 = vmatmul.mubr.bf16.gmra.mrb[0].mxu0 %v161
    %v2039 = vpop.f32.mrb[0].mxu0
    %v2040 = vadd.f32 0.0, %v2039
    %v2041 = vpop.f32.mrb[0].mxu0
    %v2042 = vadd.f32 0.0, %v2041
    %v2043 = vpop.f32.mrb[0].mxu0
    %v2044 = vadd.f32 0.0, %v2043
    %v2045 = vpop.f32.mrb[0].mxu0
    %v2046 = vadd.f32 0.0, %v2045
    %2047 = vmatprep.mubr.bf16.mxu0 %v164
    %2048 = vmatmul.mubr.bf16.gmra.mrb[0].mxu0 %v163
    %v2049 = vpop.f32.mrb[0].mxu0
    %v2050 = vadd.f32 0.0, %v2049
    %v2051 = vpop.f32.mrb[0].mxu0
    %v2052 = vadd.f32 0.0, %v2051
    %v2053 = vpop.f32.mrb[0].mxu0
    %v2054 = vadd.f32 0.0, %v2053
    %v2055 = vpop.f32.mrb[0].mxu0
    %v2056 = vadd.f32 0.0, %v2055
    %2057 = vdwg.mxu0
    %v2058 = vadd.f32 %v1728, %v1990
    %v2059 = vadd.f32 %v1729, %v1992
    %v2060 = vadd.f32 %v1730, %v1994
    %v2061 = vadd.f32 %v1731, %v1996
    %v2062 = vadd.f32 %v1732, %v2000
    %v2063 = vadd.f32 %v1733, %v2002
    %v2064 = vadd.f32 %v1734, %v2004
    %v2065 = vadd.f32 %v1735, %v2006
    %v2066 = vadd.f32 %v1736, %v2010
    %v2067 = vadd.f32 %v1737, %v2012
    %v2068 = vadd.f32 %v1738, %v2014
    %v2069 = vadd.f32 %v1739, %v2016
    %v2070 = vadd.f32 %v1740, %v2020
    %v2071 = vadd.f32 %v1741, %v2022
    %v2072 = vadd.f32 %v1742, %v2024
    %v2073 = vadd.f32 %v1743, %v2026
    %v2074 = vadd.f32 %v1744, %v2030
    %v2075 = vadd.f32 %v1745, %v2032
    %v2076 = vadd.f32 %v1746, %v2034
    %v2077 = vadd.f32 %v1747, %v2036
    %v2078 = vadd.f32 %v1748, %v2040
    %v2079 = vadd.f32 %v1749, %v2042
    %v2080 = vadd.f32 %v1750, %v2044
    %v2081 = vadd.f32 %v1751, %v2046
    %v2082 = vadd.f32 %v1752, %v2050
    %v2083 = vadd.f32 %v1753, %v2052
    %v2084 = vadd.f32 %v1754, %v2054
    %v2085 = vadd.f32 %v1755, %v2056
    %v2086 = vmax.f32 %v2058, %v2059
    %v2087 = vmax.f32 %v2060, %v2061
    %v2088 = vmax.f32 %v2062, %v2063
    %v2089 = vmax.f32 %v2064, %v2065
    %v2090 = vmax.f32 %v2066, %v2067
    %v2091 = vmax.f32 %v2068, %v2069
    %v2092 = vmax.f32 %v2070, %v2071
    %v2093 = vmax.f32 %v2072, %v2073
    %v2094 = vmax.f32 %v2074, %v2075
    %v2095 = vmax.f32 %v2076, %v2077
    %v2096 = vmax.f32 %v2078, %v2079
    %v2097 = vmax.f32 %v2080, %v2081
    %v2098 = vmax.f32 %v2082, %v2083
    %v2099 = vmax.f32 %v2084, %v2085
    %v2100 = vmax.f32 %v1110, %v2086
    %v2101 = vmax.f32 %v1111, %v2087
    %v2102 = vmax.f32 %v1112, %v2088
    %v2103 = vmax.f32 %v1113, %v2089
    %v2104 = vmax.f32 %v1114, %v2090
    %v2105 = vmax.f32 %v1115, %v2091
    %v2106 = vmax.f32 %v1116, %v2092
    %v2107 = vmax.f32 %v1117, %v2093
    %v2108 = vmax.f32 %v1118, %v2094
    %v2109 = vmax.f32 %v1119, %v2095
    %v2110 = vmax.f32 %v1120, %v2096
    %v2111 = vmax.f32 %v1121, %v2097
    %v2112 = vmax.f32 %v1122, %v2098
    %v2113 = vmax.f32 %v1123, %v2099
    %v2114 = vld [vmem:[%s2] sm:$0x1]
    %v2116 = vlaneseq
    %v2117 = vshrl.u32 %v2116, 7
    %v2118 = vsub.s32 0, %v2117
    %v2119 = vrot.slane %v2114, %v2118
    %v2121 = vadd.f32 %v2100, %v2119
    %v2122 = vadd.f32 %v2101, %v2119
    %v2123 = vadd.f32 %v2102, %v2119
    %v2124 = vadd.f32 %v2103, %v2119
    %v2125 = vadd.f32 %v2104, %v2119
    %v2126 = vadd.f32 %v2105, %v2119
    %v2127 = vadd.f32 %v2106, %v2119
    %v2128 = vadd.f32 %v2107, %v2119
    %v2129 = vadd.f32 %v2108, %v2119
    %v2130 = vadd.f32 %v2109, %v2119
    %v2131 = vadd.f32 %v2110, %v2119
    %v2132 = vadd.f32 %v2111, %v2119
    %v2133 = vadd.f32 %v2112, %v2119
    %v2134 = vadd.f32 %v2113, %v2119
    %v2135 = vmax.f32 %v2121, 0.0
    %v2136 = vmax.f32 %v2122, 0.0
    %v2137 = vmax.f32 %v2123, 0.0
    %v2138 = vmax.f32 %v2124, 0.0
    %v2139 = vmax.f32 %v2125, 0.0
    %v2140 = vmax.f32 %v2126, 0.0
    %v2141 = vmax.f32 %v2127, 0.0
    %v2142 = vmax.f32 %v2128, 0.0
    %v2143 = vmax.f32 %v2129, 0.0
    %v2144 = vmax.f32 %v2130, 0.0
    %v2145 = vmax.f32 %v2131, 0.0
    %v2146 = vmax.f32 %v2132, 0.0
    %v2147 = vmax.f32 %v2133, 0.0
    %v2148 = vmax.f32 %v2134, 0.0
    %v2149 = vpack.c.bf16 %v2137, %v2135
    %v2150 = vpack.c.bf16 %v2141, %v2139
    %v2151 = vpack.c.bf16 %v2143, %v2143
    %v2152 = vld [vmem:[%s3] sm:$0xff]
    %v2153 = vld [vmem:[%s3 + $0x8] sm:$0xff]
    %v2154 = vld [vmem:[%s3 + $0x10] sm:$0xff]
    %v2155 = vld [vmem:[%s3 + $0x18] sm:$0xff]
    %v2156 = vld [vmem:[%s3 + $0x20] sm:$0xff]
    %v2157 = vld [vmem:[%s3 + $0x28] sm:$0xff]
    %v2158 = vld [vmem:[%s3 + $0x30] sm:$0xff]
    %v2159 = vld [vmem:[%s3 + $0x38] sm:$0xff]
    %v2160 = vld [vmem:[%s3 + $0x40] sm:$0xff]
    %v2161 = vld [vmem:[%s3 + $0x48] sm:$0xff]
    %v2162 = vld [vmem:[%s3 + $0x50] sm:$0xff]
    %v2163 = vld [vmem:[%s3 + $0x58] sm:$0xff]
    %v2164 = vld [vmem:[%s3 + $0x60] sm:$0xff]
    %v2165 = vld [vmem:[%s3 + $0x68] sm:$0xff]
    %v2166 = vld [vmem:[%s3 + $0x70] sm:$0xff]
    %v2167 = vld [vmem:[%s3 + $0x78] sm:$0xff]
    %v2168 = vpack.c.bf16 %v2138, %v2136
    %v2169 = vpack.c.bf16 %v2142, %v2140
    %v2170 = vpack.c.bf16 %v2144, %v2144
    %s2171 = scalar_lea.vmem %s3, 128
    %v2172 = vld [vmem:[%s2171] sm:$0xff]
    %v2173 = vld [vmem:[%s2171 + $0x8] sm:$0xff]
    %v2174 = vld [vmem:[%s2171 + $0x10] sm:$0xff]
    %v2175 = vld [vmem:[%s2171 + $0x18] sm:$0xff]
    %v2176 = vld [vmem:[%s2171 + $0x20] sm:$0xff]
    %v2177 = vld [vmem:[%s2171 + $0x28] sm:$0xff]
    %v2178 = vld [vmem:[%s2171 + $0x30] sm:$0xff]
    %v2179 = vld [vmem:[%s2171 + $0x38] sm:$0xff]
    %v2180 = vld [vmem:[%s2171 + $0x40] sm:$0xff]
    %v2181 = vld [vmem:[%s2171 + $0x48] sm:$0xff]
    %v2182 = vld [vmem:[%s2171 + $0x50] sm:$0xff]
    %v2183 = vld [vmem:[%s2171 + $0x58] sm:$0xff]
    %v2184 = vld [vmem:[%s2171 + $0x60] sm:$0xff]
    %v2185 = vld [vmem:[%s2171 + $0x68] sm:$0xff]
    %v2186 = vld [vmem:[%s2171 + $0x70] sm:$0xff]
    %v2187 = vld [vmem:[%s2171 + $0x78] sm:$0xff]
    %v2204 = vunpack.c.l.b16 %v2172
    %v2205 = vunpack.c.h.b16 %v2172
    %v2206 = vunpack.c.l.b16 %v2173
    %v2207 = vunpack.c.h.b16 %v2173
    %v2208 = vunpack.c.l.b16 %v2174
    %v2209 = vunpack.c.h.b16 %v2174
    %v2210 = vunpack.c.l.b16 %v2175
    %v2211 = vunpack.c.h.b16 %v2175
    %v2212 = vunpack.c.l.b16 %v2176
    %v2213 = vunpack.c.h.b16 %v2176
    %v2214 = vunpack.c.l.b16 %v2177
    %v2215 = vunpack.c.h.b16 %v2177
    %v2216 = vunpack.c.l.b16 %v2178
    %v2217 = vunpack.c.h.b16 %v2178
    %v2218 = vunpack.c.l.b16 %v2179
    %v2219 = vunpack.c.h.b16 %v2179
    %v2220 = vunpack.c.l.b16 %v2180
    %v2221 = vunpack.c.h.b16 %v2180
    %v2222 = vunpack.c.l.b16 %v2181
    %v2223 = vunpack.c.h.b16 %v2181
    %v2224 = vunpack.c.l.b16 %v2182
    %v2225 = vunpack.c.h.b16 %v2182
    %v2226 = vunpack.c.l.b16 %v2183
    %v2227 = vunpack.c.h.b16 %v2183
    %v2228 = vunpack.c.l.b16 %v2184
    %v2229 = vunpack.c.h.b16 %v2184
    %v2230 = vunpack.c.l.b16 %v2185
    %v2231 = vunpack.c.h.b16 %v2185
    %v2232 = vunpack.c.l.b16 %v2186
    %v2233 = vunpack.c.h.b16 %v2186
    %v2234 = vunpack.c.l.b16 %v2187
    %v2235 = vunpack.c.h.b16 %v2187
    %v2236 = vpack.c.b16 %v2206, %v2204
    %v2237 = vpack.c.b16 %v2207, %v2205
    %v2238 = vpack.c.b16 %v2210, %v2208
    %v2239 = vpack.c.b16 %v2211, %v2209
    %v2240 = vpack.c.b16 %v2214, %v2212
    %v2241 = vpack.c.b16 %v2215, %v2213
    %v2242 = vpack.c.b16 %v2218, %v2216
    %v2243 = vpack.c.b16 %v2219, %v2217
    %v2244 = vpack.c.b16 %v2222, %v2220
    %v2245 = vpack.c.b16 %v2223, %v2221
    %v2246 = vpack.c.b16 %v2226, %v2224
    %v2247 = vpack.c.b16 %v2227, %v2225
    %v2248 = vpack.c.b16 %v2230, %v2228
    %v2249 = vpack.c.b16 %v2231, %v2229
    %v2250 = vpack.c.b16 %v2234, %v2232
    %v2251 = vpack.c.b16 %v2235, %v2233
    %2268 = vmatprep.subr.bf16.mxu0 %v2237
    %2269 = vmatpush1.bf16.msra.mxu0 %v2236
    %2270 = vmatprep.subr.bf16.mxu0 %v2239
    %2271 = vmatpush1.bf16.msra.mxu0 %v2238
    %2272 = vmatprep.subr.bf16.mxu0 %v2241
    %2273 = vmatpush1.bf16.msra.mxu0 %v2240
    %2274 = vmatprep.subr.bf16.mxu0 %v2243
    %2275 = vmatpush1.bf16.msra.mxu0 %v2242
    %2276 = vmatprep.subr.bf16.mxu0 %v2245
    %2277 = vmatpush1.bf16.msra.mxu0 %v2244
    %2278 = vmatprep.subr.bf16.mxu0 %v2247
    %2279 = vmatpush1.bf16.msra.mxu0 %v2246
    %2280 = vmatprep.subr.bf16.mxu0 %v2249
    %2281 = vmatpush1.bf16.msra.mxu0 %v2248
    %2282 = vmatprep.subr.bf16.mxu0 %v2251
    %2283 = vmatpush1.bf16.msra.mxu0 %v2250
    %2284 = vmatprep.subr.bf16.mxu0 0
    %2285 = vmatpush1.bf16.msra.mxu0 0
    %2286 = vmatprep.subr.bf16.mxu0 0
    %2287 = vmatpush1.bf16.msra.mxu0 0
    %2288 = vmatprep.subr.bf16.mxu0 0
    %2289 = vmatpush1.bf16.msra.mxu0 0
    %2290 = vmatprep.subr.bf16.mxu0 0
    %2291 = vmatpush1.bf16.msra.mxu0 0
    %2292 = vmatprep.subr.bf16.mxu0 0
    %2293 = vmatpush1.bf16.msra.mxu0 0
    %2294 = vmatprep.subr.bf16.mxu0 0
    %2295 = vmatpush1.bf16.msra.mxu0 0
    %2296 = vmatprep.subr.bf16.mxu0 0
    %2297 = vmatpush1.bf16.msra.mxu0 0
    %2298 = vmatprep.subr.bf16.mxu0 0
    %2299 = vmatpush1.bf16.msra.mxu0 0
    %2300 = vmatprep.mubr.bf16.mxu0 0
    %2301 = vmatmul.mubr.bf16.gmra.mrb[0].mxu0 %v2168
    %v2302 = vpop.f32.mrb[0].mxu0
    %v2303 = vadd.f32 0.0, %v2302
    %v2304 = vpop.f32.mrb[0].mxu0
    %v2305 = vadd.f32 0.0, %v2304
    %v2306 = vpop.f32.mrb[0].mxu0
    %v2307 = vadd.f32 0.0, %v2306
    %v2308 = vpop.f32.mrb[0].mxu0
    %v2309 = vadd.f32 0.0, %v2308
    %2310 = vmatprep.mubr.bf16.mxu0 0
    %2311 = vmatmul.mubr.bf16.gmra.mrb[0].mxu0 %v2169
    %v2312 = vpop.f32.mrb[0].mxu0
    %v2313 = vadd.f32 0.0, %v2312
    %v2314 = vpop.f32.mrb[0].mxu0
    %v2315 = vadd.f32 0.0, %v2314
    %v2316 = vpop.f32.mrb[0].mxu0
    %v2317 = vadd.f32 0.0, %v2316
    %v2318 = vpop.f32.mrb[0].mxu0
    %v2319 = vadd.f32 0.0, %v2318
    %2320 = vmatprep.mubr.bf16.mxu0 0
    %2321 = vmatmul.mubr.bf16.gmra.mrb[0].mxu0 %v2170
    %v2322 = vpop.f32.mrb[0].mxu0
    %v2323 = vadd.f32 0.0, %v2322
    %v2324 = vpop.f32.mrb[0].mxu0
    %v2325 = vadd.f32 0.0, %v2324
    %v2326 = vpop.f32.mrb[0].mxu0
    %v2327 = vpop.f32.mrb[0].mxu0
    %2328 = vdwg.mxu0
    %v2345 = vunpack.c.l.b16 %v2152
    %v2346 = vunpack.c.h.b16 %v2152
    %v2347 = vunpack.c.l.b16 %v2153
    %v2348 = vunpack.c.h.b16 %v2153
    %v2349 = vunpack.c.l.b16 %v2154
    %v2350 = vunpack.c.h.b16 %v2154
    %v2351 = vunpack.c.l.b16 %v2155
    %v2352 = vunpack.c.h.b16 %v2155
    %v2353 = vunpack.c.l.b16 %v2156
    %v2354 = vunpack.c.h.b16 %v2156
    %v2355 = vunpack.c.l.b16 %v2157
    %v2356 = vunpack.c.h.b16 %v2157
    %v2357 = vunpack.c.l.b16 %v2158
    %v2358 = vunpack.c.h.b16 %v2158
    %v2359 = vunpack.c.l.b16 %v2159
    %v2360 = vunpack.c.h.b16 %v2159
    %v2361 = vunpack.c.l.b16 %v2160
    %v2362 = vunpack.c.h.b16 %v2160
    %v2363 = vunpack.c.l.b16 %v2161
    %v2364 = vunpack.c.h.b16 %v2161
    %v2365 = vunpack.c.l.b16 %v2162
    %v2366 = vunpack.c.h.b16 %v2162
    %v2367 = vunpack.c.l.b16 %v2163
    %v2368 = vunpack.c.h.b16 %v2163
    %v2369 = vunpack.c.l.b16 %v2164
    %v2370 = vunpack.c.h.b16 %v2164
    %v2371 = vunpack.c.l.b16 %v2165
    %v2372 = vunpack.c.h.b16 %v2165
    %v2373 = vunpack.c.l.b16 %v2166
    %v2374 = vunpack.c.h.b16 %v2166
    %v2375 = vunpack.c.l.b16 %v2167
    %v2376 = vunpack.c.h.b16 %v2167
    %v2377 = vpack.c.b16 %v2347, %v2345
    %v2378 = vpack.c.b16 %v2348, %v2346
    %v2379 = vpack.c.b16 %v2351, %v2349
    %v2380 = vpack.c.b16 %v2352, %v2350
    %v2381 = vpack.c.b16 %v2355, %v2353
    %v2382 = vpack.c.b16 %v2356, %v2354
    %v2383 = vpack.c.b16 %v2359, %v2357
    %v2384 = vpack.c.b16 %v2360, %v2358
    %v2385 = vpack.c.b16 %v2363, %v2361
    %v2386 = vpack.c.b16 %v2364, %v2362
    %v2387 = vpack.c.b16 %v2367, %v2365
    %v2388 = vpack.c.b16 %v2368, %v2366
    %v2389 = vpack.c.b16 %v2371, %v2369
    %v2390 = vpack.c.b16 %v2372, %v2370
    %v2391 = vpack.c.b16 %v2375, %v2373
    %v2392 = vpack.c.b16 %v2376, %v2374
    %2409 = vmatprep.subr.bf16.mxu0 %v2378
    %2410 = vmatpush1.bf16.msra.mxu0 %v2377
    %2411 = vmatprep.subr.bf16.mxu0 %v2380
    %2412 = vmatpush1.bf16.msra.mxu0 %v2379
    %2413 = vmatprep.subr.bf16.mxu0 %v2382
    %2414 = vmatpush1.bf16.msra.mxu0 %v2381
    %2415 = vmatprep.subr.bf16.mxu0 %v2384
    %2416 = vmatpush1.bf16.msra.mxu0 %v2383
    %2417 = vmatprep.subr.bf16.mxu0 %v2386
    %2418 = vmatpush1.bf16.msra.mxu0 %v2385
    %2419 = vmatprep.subr.bf16.mxu0 %v2388
    %2420 = vmatpush1.bf16.msra.mxu0 %v2387
    %2421 = vmatprep.subr.bf16.mxu0 %v2390
    %2422 = vmatpush1.bf16.msra.mxu0 %v2389
    %2423 = vmatprep.subr.bf16.mxu0 %v2392
    %2424 = vmatpush1.bf16.msra.mxu0 %v2391
    %2425 = vmatprep.subr.bf16.mxu0 0
    %2426 = vmatpush1.bf16.msra.mxu0 0
    %2427 = vmatprep.subr.bf16.mxu0 0
    %2428 = vmatpush1.bf16.msra.mxu0 0
    %2429 = vmatprep.subr.bf16.mxu0 0
    %2430 = vmatpush1.bf16.msra.mxu0 0
    %2431 = vmatprep.subr.bf16.mxu0 0
    %2432 = vmatpush1.bf16.msra.mxu0 0
    %2433 = vmatprep.subr.bf16.mxu0 0
    %2434 = vmatpush1.bf16.msra.mxu0 0
    %2435 = vmatprep.subr.bf16.mxu0 0
    %2436 = vmatpush1.bf16.msra.mxu0 0
    %2437 = vmatprep.subr.bf16.mxu0 0
    %2438 = vmatpush1.bf16.msra.mxu0 0
    %2439 = vmatprep.subr.bf16.mxu0 0
    %2440 = vmatpush1.bf16.msra.mxu0 0
    %2441 = vmatprep.mubr.bf16.mxu0 0
    %2442 = vmatmul.mubr.bf16.gmra.mrb[0].mxu0 %v2149
    %v2443 = vpop.f32.mrb[0].mxu0
    %v2444 = vadd.f32 %v2303, %v2443
    %v2445 = vpop.f32.mrb[0].mxu0
    %v2446 = vadd.f32 %v2305, %v2445
    %v2447 = vpop.f32.mrb[0].mxu0
    %v2448 = vadd.f32 %v2307, %v2447
    %v2449 = vpop.f32.mrb[0].mxu0
    %v2450 = vadd.f32 %v2309, %v2449
    %2451 = vmatprep.mubr.bf16.mxu0 0
    %2452 = vmatmul.mubr.bf16.gmra.mrb[0].mxu0 %v2150
    %v2453 = vpop.f32.mrb[0].mxu0
    %v2454 = vadd.f32 %v2313, %v2453
    %v2455 = vpop.f32.mrb[0].mxu0
    %v2456 = vadd.f32 %v2315, %v2455
    %v2457 = vpop.f32.mrb[0].mxu0
    %v2458 = vadd.f32 %v2317, %v2457
    %v2459 = vpop.f32.mrb[0].mxu0
    %v2460 = vadd.f32 %v2319, %v2459
    %2461 = vmatprep.mubr.bf16.mxu0 0
    %2462 = vmatmul.mubr.bf16.gmra.mrb[0].mxu0 %v2151
    %v2463 = vpop.f32.mrb[0].mxu0
    %v2464 = vadd.f32 %v2323, %v2463
    %v2465 = vpop.f32.mrb[0].mxu0
    %v2466 = vadd.f32 %v2325, %v2465
    %v2467 = vpop.f32.mrb[0].mxu0
    %v2468 = vpop.f32.mrb[0].mxu0
    %2469 = vdwg.mxu0
    %v2470 = vpack.c.bf16 %v2139, %v2137
    %v2471 = vpack.c.bf16 %v2143, %v2141
    %v2472 = vpack.c.bf16 %v2145, %v2145
    %s2473 = scalar_lea.vmem %s3, 256
    %v2474 = vld [vmem:[%s2473] sm:$0xff]
    %v2475 = vld [vmem:[%s2473 + $0x8] sm:$0xff]
    %v2476 = vld [vmem:[%s2473 + $0x10] sm:$0xff]
    %v2477 = vld [vmem:[%s2473 + $0x18] sm:$0xff]
    %v2478 = vld [vmem:[%s2473 + $0x20] sm:$0xff]
    %v2479 = vld [vmem:[%s2473 + $0x28] sm:$0xff]
    %v2480 = vld [vmem:[%s2473 + $0x30] sm:$0xff]
    %v2481 = vld [vmem:[%s2473 + $0x38] sm:$0xff]
    %v2482 = vld [vmem:[%s2473 + $0x40] sm:$0xff]
    %v2483 = vld [vmem:[%s2473 + $0x48] sm:$0xff]
    %v2484 = vld [vmem:[%s2473 + $0x50] sm:$0xff]
    %v2485 = vld [vmem:[%s2473 + $0x58] sm:$0xff]
    %v2486 = vld [vmem:[%s2473 + $0x60] sm:$0xff]
    %v2487 = vld [vmem:[%s2473 + $0x68] sm:$0xff]
    %v2488 = vld [vmem:[%s2473 + $0x70] sm:$0xff]
    %v2489 = vld [vmem:[%s2473 + $0x78] sm:$0xff]
    %v2506 = vunpack.c.l.b16 %v2474
    %v2507 = vunpack.c.h.b16 %v2474
    %v2508 = vunpack.c.l.b16 %v2475
    %v2509 = vunpack.c.h.b16 %v2475
    %v2510 = vunpack.c.l.b16 %v2476
    %v2511 = vunpack.c.h.b16 %v2476
    %v2512 = vunpack.c.l.b16 %v2477
    %v2513 = vunpack.c.h.b16 %v2477
    %v2514 = vunpack.c.l.b16 %v2478
    %v2515 = vunpack.c.h.b16 %v2478
    %v2516 = vunpack.c.l.b16 %v2479
    %v2517 = vunpack.c.h.b16 %v2479
    %v2518 = vunpack.c.l.b16 %v2480
    %v2519 = vunpack.c.h.b16 %v2480
    %v2520 = vunpack.c.l.b16 %v2481
    %v2521 = vunpack.c.h.b16 %v2481
    %v2522 = vunpack.c.l.b16 %v2482
    %v2523 = vunpack.c.h.b16 %v2482
    %v2524 = vunpack.c.l.b16 %v2483
    %v2525 = vunpack.c.h.b16 %v2483
    %v2526 = vunpack.c.l.b16 %v2484
    %v2527 = vunpack.c.h.b16 %v2484
    %v2528 = vunpack.c.l.b16 %v2485
    %v2529 = vunpack.c.h.b16 %v2485
    %v2530 = vunpack.c.l.b16 %v2486
    %v2531 = vunpack.c.h.b16 %v2486
    %v2532 = vunpack.c.l.b16 %v2487
    %v2533 = vunpack.c.h.b16 %v2487
    %v2534 = vunpack.c.l.b16 %v2488
    %v2535 = vunpack.c.h.b16 %v2488
    %v2536 = vunpack.c.l.b16 %v2489
    %v2537 = vunpack.c.h.b16 %v2489
    %v2538 = vpack.c.b16 %v2508, %v2506
    %v2539 = vpack.c.b16 %v2509, %v2507
    %v2540 = vpack.c.b16 %v2512, %v2510
    %v2541 = vpack.c.b16 %v2513, %v2511
    %v2542 = vpack.c.b16 %v2516, %v2514
    %v2543 = vpack.c.b16 %v2517, %v2515
    %v2544 = vpack.c.b16 %v2520, %v2518
    %v2545 = vpack.c.b16 %v2521, %v2519
    %v2546 = vpack.c.b16 %v2524, %v2522
    %v2547 = vpack.c.b16 %v2525, %v2523
    %v2548 = vpack.c.b16 %v2528, %v2526
    %v2549 = vpack.c.b16 %v2529, %v2527
    %v2550 = vpack.c.b16 %v2532, %v2530
    %v2551 = vpack.c.b16 %v2533, %v2531
    %v2552 = vpack.c.b16 %v2536, %v2534
    %v2553 = vpack.c.b16 %v2537, %v2535
    %2570 = vmatprep.subr.bf16.mxu0 %v2539
    %2571 = vmatpush1.bf16.msra.mxu0 %v2538
    %2572 = vmatprep.subr.bf16.mxu0 %v2541
    %2573 = vmatpush1.bf16.msra.mxu0 %v2540
    %2574 = vmatprep.subr.bf16.mxu0 %v2543
    %2575 = vmatpush1.bf16.msra.mxu0 %v2542
    %2576 = vmatprep.subr.bf16.mxu0 %v2545
    %2577 = vmatpush1.bf16.msra.mxu0 %v2544
    %2578 = vmatprep.subr.bf16.mxu0 %v2547
    %2579 = vmatpush1.bf16.msra.mxu0 %v2546
    %2580 = vmatprep.subr.bf16.mxu0 %v2549
    %2581 = vmatpush1.bf16.msra.mxu0 %v2548
    %2582 = vmatprep.subr.bf16.mxu0 %v2551
    %2583 = vmatpush1.bf16.msra.mxu0 %v2550
    %2584 = vmatprep.subr.bf16.mxu0 %v2553
    %2585 = vmatpush1.bf16.msra.mxu0 %v2552
    %2586 = vmatprep.subr.bf16.mxu0 0
    %2587 = vmatpush1.bf16.msra.mxu0 0
    %2588 = vmatprep.subr.bf16.mxu0 0
    %2589 = vmatpush1.bf16.msra.mxu0 0
    %2590 = vmatprep.subr.bf16.mxu0 0
    %2591 = vmatpush1.bf16.msra.mxu0 0
    %2592 = vmatprep.subr.bf16.mxu0 0
    %2593 = vmatpush1.bf16.msra.mxu0 0
    %2594 = vmatprep.subr.bf16.mxu0 0
    %2595 = vmatpush1.bf16.msra.mxu0 0
    %2596 = vmatprep.subr.bf16.mxu0 0
    %2597 = vmatpush1.bf16.msra.mxu0 0
    %2598 = vmatprep.subr.bf16.mxu0 0
    %2599 = vmatpush1.bf16.msra.mxu0 0
    %2600 = vmatprep.subr.bf16.mxu0 0
    %2601 = vmatpush1.bf16.msra.mxu0 0
    %2602 = vmatprep.mubr.bf16.mxu0 0
    %2603 = vmatmul.mubr.bf16.gmra.mrb[0].mxu0 %v2470
    %v2604 = vpop.f32.mrb[0].mxu0
    %v2605 = vadd.f32 0.0, %v2604
    %v2606 = vpop.f32.mrb[0].mxu0
    %v2607 = vadd.f32 0.0, %v2606
    %v2608 = vpop.f32.mrb[0].mxu0
    %v2609 = vadd.f32 0.0, %v2608
    %v2610 = vpop.f32.mrb[0].mxu0
    %v2611 = vadd.f32 0.0, %v2610
    %2612 = vmatprep.mubr.bf16.mxu0 0
    %2613 = vmatmul.mubr.bf16.gmra.mrb[0].mxu0 %v2471
    %v2614 = vpop.f32.mrb[0].mxu0
    %v2615 = vadd.f32 0.0, %v2614
    %v2616 = vpop.f32.mrb[0].mxu0
    %v2617 = vadd.f32 0.0, %v2616
    %v2618 = vpop.f32.mrb[0].mxu0
    %v2619 = vadd.f32 0.0, %v2618
    %v2620 = vpop.f32.mrb[0].mxu0
    %v2621 = vadd.f32 0.0, %v2620
    %2622 = vmatprep.mubr.bf16.mxu0 0
    %2623 = vmatmul.mubr.bf16.gmra.mrb[0].mxu0 %v2472
    %v2624 = vpop.f32.mrb[0].mxu0
    %v2625 = vadd.f32 0.0, %v2624
    %v2626 = vpop.f32.mrb[0].mxu0
    %v2627 = vadd.f32 0.0, %v2626
    %v2628 = vpop.f32.mrb[0].mxu0
    %v2629 = vpop.f32.mrb[0].mxu0
    %2630 = vdwg.mxu0
    %v2631 = vadd.f32 %v2444, %v2605
    %v2632 = vadd.f32 %v2446, %v2607
    %v2633 = vadd.f32 %v2448, %v2609
    %v2634 = vadd.f32 %v2450, %v2611
    %v2635 = vadd.f32 %v2454, %v2615
    %v2636 = vadd.f32 %v2456, %v2617
    %v2637 = vadd.f32 %v2458, %v2619
    %v2638 = vadd.f32 %v2460, %v2621
    %v2639 = vadd.f32 %v2464, %v2625
    %v2640 = vadd.f32 %v2466, %v2627
    %2641 = vmatprep.subr.bf16.mxu0 %v2237
    %2642 = vmatpush1.bf16.msra.mxu0 %v2236
    %2643 = vmatprep.subr.bf16.mxu0 %v2239
    %2644 = vmatpush1.bf16.msra.mxu0 %v2238
    %2645 = vmatprep.subr.bf16.mxu0 %v2241
    %2646 = vmatpush1.bf16.msra.mxu0 %v2240
    %2647 = vmatprep.subr.bf16.mxu0 %v2243
    %2648 = vmatpush1.bf16.msra.mxu0 %v2242
    %2649 = vmatprep.subr.bf16.mxu0 %v2245
    %2650 = vmatpush1.bf16.msra.mxu0 %v2244
    %2651 = vmatprep.subr.bf16.mxu0 %v2247
    %2652 = vmatpush1.bf16.msra.mxu0 %v2246
    %2653 = vmatprep.subr.bf16.mxu0 %v2249
    %2654 = vmatpush1.bf16.msra.mxu0 %v2248
    %2655 = vmatprep.subr.bf16.mxu0 %v2251
    %2656 = vmatpush1.bf16.msra.mxu0 %v2250
    %2657 = vmatprep.subr.bf16.mxu0 0
    %2658 = vmatpush1.bf16.msra.mxu0 0
    %2659 = vmatprep.subr.bf16.mxu0 0
    %2660 = vmatpush1.bf16.msra.mxu0 0
    %2661 = vmatprep.subr.bf16.mxu0 0
    %2662 = vmatpush1.bf16.msra.mxu0 0
    %2663 = vmatprep.subr.bf16.mxu0 0
    %2664 = vmatpush1.bf16.msra.mxu0 0
    %2665 = vmatprep.subr.bf16.mxu0 0
    %2666 = vmatpush1.bf16.msra.mxu0 0
    %2667 = vmatprep.subr.bf16.mxu0 0
    %2668 = vmatpush1.bf16.msra.mxu0 0
    %2669 = vmatprep.subr.bf16.mxu0 0
    %2670 = vmatpush1.bf16.msra.mxu0 0
    %2671 = vmatprep.subr.bf16.mxu0 0
    %2672 = vmatpush1.bf16.msra.mxu0 0
    %2673 = vmatprep.mubr.bf16.mxu0 0
    %2674 = vmatmul.mubr.bf16.gmra.mrb[0].mxu0 %v2470
    %v2675 = vpop.f32.mrb[0].mxu0
    %v2676 = vadd.f32 0.0, %v2675
    %v2677 = vpop.f32.mrb[0].mxu0
    %v2678 = vadd.f32 0.0, %v2677
    %v2679 = vpop.f32.mrb[0].mxu0
    %v2680 = vadd.f32 0.0, %v2679
    %v2681 = vpop.f32.mrb[0].mxu0
    %v2682 = vadd.f32 0.0, %v2681
    %2683 = vmatprep.mubr.bf16.mxu0 0
    %2684 = vmatmul.mubr.bf16.gmra.mrb[0].mxu0 %v2471
    %v2685 = vpop.f32.mrb[0].mxu0
    %v2686 = vadd.f32 0.0, %v2685
    %v2687 = vpop.f32.mrb[0].mxu0
    %v2688 = vadd.f32 0.0, %v2687
    %v2689 = vpop.f32.mrb[0].mxu0
    %v2690 = vadd.f32 0.0, %v2689
    %v2691 = vpop.f32.mrb[0].mxu0
    %v2692 = vadd.f32 0.0, %v2691
    %2693 = vmatprep.mubr.bf16.mxu0 0
    %2694 = vmatmul.mubr.bf16.gmra.mrb[0].mxu0 %v2472
    %v2695 = vpop.f32.mrb[0].mxu0
    %v2696 = vadd.f32 0.0, %v2695
    %v2697 = vpop.f32.mrb[0].mxu0
    %v2698 = vadd.f32 0.0, %v2697
    %v2699 = vpop.f32.mrb[0].mxu0
    %v2700 = vpop.f32.mrb[0].mxu0
    %2701 = vdwg.mxu0
    %2702 = vmatprep.subr.bf16.mxu0 %v2378
    %2703 = vmatpush1.bf16.msra.mxu0 %v2377
    %2704 = vmatprep.subr.bf16.mxu0 %v2380
    %2705 = vmatpush1.bf16.msra.mxu0 %v2379
    %2706 = vmatprep.subr.bf16.mxu0 %v2382
    %2707 = vmatpush1.bf16.msra.mxu0 %v2381
    %2708 = vmatprep.subr.bf16.mxu0 %v2384
    %2709 = vmatpush1.bf16.msra.mxu0 %v2383
    %2710 = vmatprep.subr.bf16.mxu0 %v2386
    %2711 = vmatpush1.bf16.msra.mxu0 %v2385
    %2712 = vmatprep.subr.bf16.mxu0 %v2388
    %2713 = vmatpush1.bf16.msra.mxu0 %v2387
    %2714 = vmatprep.subr.bf16.mxu0 %v2390
    %2715 = vmatpush1.bf16.msra.mxu0 %v2389
    %2716 = vmatprep.subr.bf16.mxu0 %v2392
    %2717 = vmatpush1.bf16.msra.mxu0 %v2391
    %2718 = vmatprep.subr.bf16.mxu0 0
    %2719 = vmatpush1.bf16.msra.mxu0 0
    %2720 = vmatprep.subr.bf16.mxu0 0
    %2721 = vmatpush1.bf16.msra.mxu0 0
    %2722 = vmatprep.subr.bf16.mxu0 0
    %2723 = vmatpush1.bf16.msra.mxu0 0
    %2724 = vmatprep.subr.bf16.mxu0 0
    %2725 = vmatpush1.bf16.msra.mxu0 0
    %2726 = vmatprep.subr.bf16.mxu0 0
    %2727 = vmatpush1.bf16.msra.mxu0 0
    %2728 = vmatprep.subr.bf16.mxu0 0
    %2729 = vmatpush1.bf16.msra.mxu0 0
    %2730 = vmatprep.subr.bf16.mxu0 0
    %2731 = vmatpush1.bf16.msra.mxu0 0
    %2732 = vmatprep.subr.bf16.mxu0 0
    %2733 = vmatpush1.bf16.msra.mxu0 0
    %2734 = vmatprep.mubr.bf16.mxu0 0
    %2735 = vmatmul.mubr.bf16.gmra.mrb[0].mxu0 %v2168
    %v2736 = vpop.f32.mrb[0].mxu0
    %v2737 = vadd.f32 %v2676, %v2736
    %v2738 = vpop.f32.mrb[0].mxu0
    %v2739 = vadd.f32 %v2678, %v2738
    %v2740 = vpop.f32.mrb[0].mxu0
    %v2741 = vadd.f32 %v2680, %v2740
    %v2742 = vpop.f32.mrb[0].mxu0
    %v2743 = vadd.f32 %v2682, %v2742
    %2744 = vmatprep.mubr.bf16.mxu0 0
    %2745 = vmatmul.mubr.bf16.gmra.mrb[0].mxu0 %v2169
    %v2746 = vpop.f32.mrb[0].mxu0
    %v2747 = vadd.f32 %v2686, %v2746
    %v2748 = vpop.f32.mrb[0].mxu0
    %v2749 = vadd.f32 %v2688, %v2748
    %v2750 = vpop.f32.mrb[0].mxu0
    %v2751 = vadd.f32 %v2690, %v2750
    %v2752 = vpop.f32.mrb[0].mxu0
    %v2753 = vadd.f32 %v2692, %v2752
    %2754 = vmatprep.mubr.bf16.mxu0 0
    %2755 = vmatmul.mubr.bf16.gmra.mrb[0].mxu0 %v2170
    %v2756 = vpop.f32.mrb[0].mxu0
    %v2757 = vadd.f32 %v2696, %v2756
    %v2758 = vpop.f32.mrb[0].mxu0
    %v2759 = vadd.f32 %v2698, %v2758
    %v2760 = vpop.f32.mrb[0].mxu0
    %v2761 = vpop.f32.mrb[0].mxu0
    %2762 = vdwg.mxu0
    %v2763 = vpack.c.bf16 %v2140, %v2138
    %v2764 = vpack.c.bf16 %v2144, %v2142
    %v2765 = vpack.c.bf16 %v2146, %v2146
    %s2766 = scalar_lea.vmem %s3, 384
    %v2767 = vld [vmem:[%s2766] sm:$0xff]
    %v2768 = vld [vmem:[%s2766 + $0x8] sm:$0xff]
    %v2769 = vld [vmem:[%s2766 + $0x10] sm:$0xff]
    %v2770 = vld [vmem:[%s2766 + $0x18] sm:$0xff]
    %v2771 = vld [vmem:[%s2766 + $0x20] sm:$0xff]
    %v2772 = vld [vmem:[%s2766 + $0x28] sm:$0xff]
    %v2773 = vld [vmem:[%s2766 + $0x30] sm:$0xff]
    %v2774 = vld [vmem:[%s2766 + $0x38] sm:$0xff]
    %v2775 = vld [vmem:[%s2766 + $0x40] sm:$0xff]
    %v2776 = vld [vmem:[%s2766 + $0x48] sm:$0xff]
    %v2777 = vld [vmem:[%s2766 + $0x50] sm:$0xff]
    %v2778 = vld [vmem:[%s2766 + $0x58] sm:$0xff]
    %v2779 = vld [vmem:[%s2766 + $0x60] sm:$0xff]
    %v2780 = vld [vmem:[%s2766 + $0x68] sm:$0xff]
    %v2781 = vld [vmem:[%s2766 + $0x70] sm:$0xff]
    %v2782 = vld [vmem:[%s2766 + $0x78] sm:$0xff]
    %v2799 = vunpack.c.l.b16 %v2767
    %v2800 = vunpack.c.h.b16 %v2767
    %v2801 = vunpack.c.l.b16 %v2768
    %v2802 = vunpack.c.h.b16 %v2768
    %v2803 = vunpack.c.l.b16 %v2769
    %v2804 = vunpack.c.h.b16 %v2769
    %v2805 = vunpack.c.l.b16 %v2770
    %v2806 = vunpack.c.h.b16 %v2770
    %v2807 = vunpack.c.l.b16 %v2771
    %v2808 = vunpack.c.h.b16 %v2771
    %v2809 = vunpack.c.l.b16 %v2772
    %v2810 = vunpack.c.h.b16 %v2772
    %v2811 = vunpack.c.l.b16 %v2773
    %v2812 = vunpack.c.h.b16 %v2773
    %v2813 = vunpack.c.l.b16 %v2774
    %v2814 = vunpack.c.h.b16 %v2774
    %v2815 = vunpack.c.l.b16 %v2775
    %v2816 = vunpack.c.h.b16 %v2775
    %v2817 = vunpack.c.l.b16 %v2776
    %v2818 = vunpack.c.h.b16 %v2776
    %v2819 = vunpack.c.l.b16 %v2777
    %v2820 = vunpack.c.h.b16 %v2777
    %v2821 = vunpack.c.l.b16 %v2778
    %v2822 = vunpack.c.h.b16 %v2778
    %v2823 = vunpack.c.l.b16 %v2779
    %v2824 = vunpack.c.h.b16 %v2779
    %v2825 = vunpack.c.l.b16 %v2780
    %v2826 = vunpack.c.h.b16 %v2780
    %v2827 = vunpack.c.l.b16 %v2781
    %v2828 = vunpack.c.h.b16 %v2781
    %v2829 = vunpack.c.l.b16 %v2782
    %v2830 = vunpack.c.h.b16 %v2782
    %v2831 = vpack.c.b16 %v2801, %v2799
    %v2832 = vpack.c.b16 %v2802, %v2800
    %v2833 = vpack.c.b16 %v2805, %v2803
    %v2834 = vpack.c.b16 %v2806, %v2804
    %v2835 = vpack.c.b16 %v2809, %v2807
    %v2836 = vpack.c.b16 %v2810, %v2808
    %v2837 = vpack.c.b16 %v2813, %v2811
    %v2838 = vpack.c.b16 %v2814, %v2812
    %v2839 = vpack.c.b16 %v2817, %v2815
    %v2840 = vpack.c.b16 %v2818, %v2816
    %v2841 = vpack.c.b16 %v2821, %v2819
    %v2842 = vpack.c.b16 %v2822, %v2820
    %v2843 = vpack.c.b16 %v2825, %v2823
    %v2844 = vpack.c.b16 %v2826, %v2824
    %v2845 = vpack.c.b16 %v2829, %v2827
    %v2846 = vpack.c.b16 %v2830, %v2828
    %2863 = vmatprep.subr.bf16.mxu0 %v2832
    %2864 = vmatpush1.bf16.msra.mxu0 %v2831
    %2865 = vmatprep.subr.bf16.mxu0 %v2834
    %2866 = vmatpush1.bf16.msra.mxu0 %v2833
    %2867 = vmatprep.subr.bf16.mxu0 %v2836
    %2868 = vmatpush1.bf16.msra.mxu0 %v2835
    %2869 = vmatprep.subr.bf16.mxu0 %v2838
    %2870 = vmatpush1.bf16.msra.mxu0 %v2837
    %2871 = vmatprep.subr.bf16.mxu0 %v2840
    %2872 = vmatpush1.bf16.msra.mxu0 %v2839
    %2873 = vmatprep.subr.bf16.mxu0 %v2842
    %2874 = vmatpush1.bf16.msra.mxu0 %v2841
    %2875 = vmatprep.subr.bf16.mxu0 %v2844
    %2876 = vmatpush1.bf16.msra.mxu0 %v2843
    %2877 = vmatprep.subr.bf16.mxu0 %v2846
    %2878 = vmatpush1.bf16.msra.mxu0 %v2845
    %2879 = vmatprep.subr.bf16.mxu0 0
    %2880 = vmatpush1.bf16.msra.mxu0 0
    %2881 = vmatprep.subr.bf16.mxu0 0
    %2882 = vmatpush1.bf16.msra.mxu0 0
    %2883 = vmatprep.subr.bf16.mxu0 0
    %2884 = vmatpush1.bf16.msra.mxu0 0
    %2885 = vmatprep.subr.bf16.mxu0 0
    %2886 = vmatpush1.bf16.msra.mxu0 0
    %2887 = vmatprep.subr.bf16.mxu0 0
    %2888 = vmatpush1.bf16.msra.mxu0 0
    %2889 = vmatprep.subr.bf16.mxu0 0
    %2890 = vmatpush1.bf16.msra.mxu0 0
    %2891 = vmatprep.subr.bf16.mxu0 0
    %2892 = vmatpush1.bf16.msra.mxu0 0
    %2893 = vmatprep.subr.bf16.mxu0 0
    %2894 = vmatpush1.bf16.msra.mxu0 0
    %2895 = vmatprep.mubr.bf16.mxu0 0
    %2896 = vmatmul.mubr.bf16.gmra.mrb[0].mxu0 %v2763
    %v2897 = vpop.f32.mrb[0].mxu0
    %v2898 = vadd.f32 0.0, %v2897
    %v2899 = vpop.f32.mrb[0].mxu0
    %v2900 = vadd.f32 0.0, %v2899
    %v2901 = vpop.f32.mrb[0].mxu0
    %v2902 = vadd.f32 0.0, %v2901
    %v2903 = vpop.f32.mrb[0].mxu0
    %v2904 = vadd.f32 0.0, %v2903
    %2905 = vmatprep.mubr.bf16.mxu0 0
    %2906 = vmatmul.mubr.bf16.gmra.mrb[0].mxu0 %v2764
    %v2907 = vpop.f32.mrb[0].mxu0
    %v2908 = vadd.f32 0.0, %v2907
    %v2909 = vpop.f32.mrb[0].mxu0
    %v2910 = vadd.f32 0.0, %v2909
    %v2911 = vpop.f32.mrb[0].mxu0
    %v2912 = vadd.f32 0.0, %v2911
    %v2913 = vpop.f32.mrb[0].mxu0
    %v2914 = vadd.f32 0.0, %v2913
    %2915 = vmatprep.mubr.bf16.mxu0 0
    %2916 = vmatmul.mubr.bf16.gmra.mrb[0].mxu0 %v2765
    %v2917 = vpop.f32.mrb[0].mxu0
    %v2918 = vadd.f32 0.0, %v2917
    %v2919 = vpop.f32.mrb[0].mxu0
    %v2920 = vadd.f32 0.0, %v2919
    %v2921 = vpop.f32.mrb[0].mxu0
    %v2922 = vpop.f32.mrb[0].mxu0
    %2923 = vdwg.mxu0
    %v2924 = vadd.f32 %v2631, %v2898
    %v2925 = vadd.f32 %v2632, %v2900
    %v2926 = vadd.f32 %v2633, %v2902
    %v2927 = vadd.f32 %v2634, %v2904
    %v2928 = vadd.f32 %v2635, %v2908
    %v2929 = vadd.f32 %v2636, %v2910
    %v2930 = vadd.f32 %v2637, %v2912
    %v2931 = vadd.f32 %v2638, %v2914
    %v2932 = vadd.f32 %v2639, %v2918
    %v2933 = vadd.f32 %v2640, %v2920
    %2934 = vmatprep.subr.bf16.mxu0 %v2539
    %2935 = vmatpush1.bf16.msra.mxu0 %v2538
    %2936 = vmatprep.subr.bf16.mxu0 %v2541
    %2937 = vmatpush1.bf16.msra.mxu0 %v2540
    %2938 = vmatprep.subr.bf16.mxu0 %v2543
    %2939 = vmatpush1.bf16.msra.mxu0 %v2542
    %2940 = vmatprep.subr.bf16.mxu0 %v2545
    %2941 = vmatpush1.bf16.msra.mxu0 %v2544
    %2942 = vmatprep.subr.bf16.mxu0 %v2547
    %2943 = vmatpush1.bf16.msra.mxu0 %v2546
    %2944 = vmatprep.subr.bf16.mxu0 %v2549
    %2945 = vmatpush1.bf16.msra.mxu0 %v2548
    %2946 = vmatprep.subr.bf16.mxu0 %v2551
    %2947 = vmatpush1.bf16.msra.mxu0 %v2550
    %2948 = vmatprep.subr.bf16.mxu0 %v2553
    %2949 = vmatpush1.bf16.msra.mxu0 %v2552
    %2950 = vmatprep.subr.bf16.mxu0 0
    %2951 = vmatpush1.bf16.msra.mxu0 0
    %2952 = vmatprep.subr.bf16.mxu0 0
    %2953 = vmatpush1.bf16.msra.mxu0 0
    %2954 = vmatprep.subr.bf16.mxu0 0
    %2955 = vmatpush1.bf16.msra.mxu0 0
    %2956 = vmatprep.subr.bf16.mxu0 0
    %2957 = vmatpush1.bf16.msra.mxu0 0
    %2958 = vmatprep.subr.bf16.mxu0 0
    %2959 = vmatpush1.bf16.msra.mxu0 0
    %2960 = vmatprep.subr.bf16.mxu0 0
    %2961 = vmatpush1.bf16.msra.mxu0 0
    %2962 = vmatprep.subr.bf16.mxu0 0
    %2963 = vmatpush1.bf16.msra.mxu0 0
    %2964 = vmatprep.subr.bf16.mxu0 0
    %2965 = vmatpush1.bf16.msra.mxu0 0
    %2966 = vmatprep.mubr.bf16.mxu0 0
    %2967 = vmatmul.mubr.bf16.gmra.mrb[0].mxu0 %v2763
    %v2968 = vpop.f32.mrb[0].mxu0
    %v2969 = vadd.f32 0.0, %v2968
    %v2970 = vpop.f32.mrb[0].mxu0
    %v2971 = vadd.f32 0.0, %v2970
    %v2972 = vpop.f32.mrb[0].mxu0
    %v2973 = vadd.f32 0.0, %v2972
    %v2974 = vpop.f32.mrb[0].mxu0
    %v2975 = vadd.f32 0.0, %v2974
    %2976 = vmatprep.mubr.bf16.mxu0 0
    %2977 = vmatmul.mubr.bf16.gmra.mrb[0].mxu0 %v2764
    %v2978 = vpop.f32.mrb[0].mxu0
    %v2979 = vadd.f32 0.0, %v2978
    %v2980 = vpop.f32.mrb[0].mxu0
    %v2981 = vadd.f32 0.0, %v2980
    %v2982 = vpop.f32.mrb[0].mxu0
    %v2983 = vadd.f32 0.0, %v2982
    %v2984 = vpop.f32.mrb[0].mxu0
    %v2985 = vadd.f32 0.0, %v2984
    %2986 = vmatprep.mubr.bf16.mxu0 0
    %2987 = vmatmul.mubr.bf16.gmra.mrb[0].mxu0 %v2765
    %v2988 = vpop.f32.mrb[0].mxu0
    %v2989 = vadd.f32 0.0, %v2988
    %v2990 = vpop.f32.mrb[0].mxu0
    %v2991 = vadd.f32 0.0, %v2990
    %v2992 = vpop.f32.mrb[0].mxu0
    %v2993 = vpop.f32.mrb[0].mxu0
    %2994 = vdwg.mxu0
    %v2995 = vadd.f32 %v2737, %v2969
    %v2996 = vadd.f32 %v2739, %v2971
    %v2997 = vadd.f32 %v2741, %v2973
    %v2998 = vadd.f32 %v2743, %v2975
    %v2999 = vadd.f32 %v2747, %v2979
    %v3000 = vadd.f32 %v2749, %v2981
    %v3001 = vadd.f32 %v2751, %v2983
    %v3002 = vadd.f32 %v2753, %v2985
    %v3003 = vadd.f32 %v2757, %v2989
    %v3004 = vadd.f32 %v2759, %v2991
    %v3005 = vpack.c.bf16 %v2145, %v2143
    %v3006 = vpack.c.bf16 %v2147, %v2147
    %s3007 = scalar_lea.vmem %s3, 512
    %v3008 = vld [vmem:[%s3007] sm:$0xff]
    %v3009 = vld [vmem:[%s3007 + $0x8] sm:$0xff]
    %v3010 = vld [vmem:[%s3007 + $0x10] sm:$0xff]
    %v3011 = vld [vmem:[%s3007 + $0x18] sm:$0xff]
    %v3012 = vld [vmem:[%s3007 + $0x20] sm:$0xff]
    %v3013 = vld [vmem:[%s3007 + $0x28] sm:$0xff]
    %v3014 = vld [vmem:[%s3007 + $0x30] sm:$0xff]
    %v3015 = vld [vmem:[%s3007 + $0x38] sm:$0xff]
    %v3016 = vld [vmem:[%s3007 + $0x40] sm:$0xff]
    %v3017 = vld [vmem:[%s3007 + $0x48] sm:$0xff]
    %v3018 = vld [vmem:[%s3007 + $0x50] sm:$0xff]
    %v3019 = vld [vmem:[%s3007 + $0x58] sm:$0xff]
    %v3020 = vld [vmem:[%s3007 + $0x60] sm:$0xff]
    %v3021 = vld [vmem:[%s3007 + $0x68] sm:$0xff]
    %v3022 = vld [vmem:[%s3007 + $0x70] sm:$0xff]
    %v3023 = vld [vmem:[%s3007 + $0x78] sm:$0xff]
    %v3040 = vunpack.c.l.b16 %v3008
    %v3041 = vunpack.c.h.b16 %v3008
    %v3042 = vunpack.c.l.b16 %v3009
    %v3043 = vunpack.c.h.b16 %v3009
    %v3044 = vunpack.c.l.b16 %v3010
    %v3045 = vunpack.c.h.b16 %v3010
    %v3046 = vunpack.c.l.b16 %v3011
    %v3047 = vunpack.c.h.b16 %v3011
    %v3048 = vunpack.c.l.b16 %v3012
    %v3049 = vunpack.c.h.b16 %v3012
    %v3050 = vunpack.c.l.b16 %v3013
    %v3051 = vunpack.c.h.b16 %v3013
    %v3052 = vunpack.c.l.b16 %v3014
    %v3053 = vunpack.c.h.b16 %v3014
    %v3054 = vunpack.c.l.b16 %v3015
    %v3055 = vunpack.c.h.b16 %v3015
    %v3056 = vunpack.c.l.b16 %v3016
    %v3057 = vunpack.c.h.b16 %v3016
    %v3058 = vunpack.c.l.b16 %v3017
    %v3059 = vunpack.c.h.b16 %v3017
    %v3060 = vunpack.c.l.b16 %v3018
    %v3061 = vunpack.c.h.b16 %v3018
    %v3062 = vunpack.c.l.b16 %v3019
    %v3063 = vunpack.c.h.b16 %v3019
    %v3064 = vunpack.c.l.b16 %v3020
    %v3065 = vunpack.c.h.b16 %v3020
    %v3066 = vunpack.c.l.b16 %v3021
    %v3067 = vunpack.c.h.b16 %v3021
    %v3068 = vunpack.c.l.b16 %v3022
    %v3069 = vunpack.c.h.b16 %v3022
    %v3070 = vunpack.c.l.b16 %v3023
    %v3071 = vunpack.c.h.b16 %v3023
    %v3072 = vpack.c.b16 %v3042, %v3040
    %v3073 = vpack.c.b16 %v3043, %v3041
    %v3074 = vpack.c.b16 %v3046, %v3044
    %v3075 = vpack.c.b16 %v3047, %v3045
    %v3076 = vpack.c.b16 %v3050, %v3048
    %v3077 = vpack.c.b16 %v3051, %v3049
    %v3078 = vpack.c.b16 %v3054, %v3052
    %v3079 = vpack.c.b16 %v3055, %v3053
    %v3080 = vpack.c.b16 %v3058, %v3056
    %v3081 = vpack.c.b16 %v3059, %v3057
    %v3082 = vpack.c.b16 %v3062, %v3060
    %v3083 = vpack.c.b16 %v3063, %v3061
    %v3084 = vpack.c.b16 %v3066, %v3064
    %v3085 = vpack.c.b16 %v3067, %v3065
    %v3086 = vpack.c.b16 %v3070, %v3068
    %v3087 = vpack.c.b16 %v3071, %v3069
    %3104 = vmatprep.subr.bf16.mxu0 %v3073
    %3105 = vmatpush1.bf16.msra.mxu0 %v3072
    %3106 = vmatprep.subr.bf16.mxu0 %v3075
    %3107 = vmatpush1.bf16.msra.mxu0 %v3074
    %3108 = vmatprep.subr.bf16.mxu0 %v3077
    %3109 = vmatpush1.bf16.msra.mxu0 %v3076
    %3110 = vmatprep.subr.bf16.mxu0 %v3079
    %3111 = vmatpush1.bf16.msra.mxu0 %v3078
    %3112 = vmatprep.subr.bf16.mxu0 %v3081
    %3113 = vmatpush1.bf16.msra.mxu0 %v3080
    %3114 = vmatprep.subr.bf16.mxu0 %v3083
    %3115 = vmatpush1.bf16.msra.mxu0 %v3082
    %3116 = vmatprep.subr.bf16.mxu0 %v3085
    %3117 = vmatpush1.bf16.msra.mxu0 %v3084
    %3118 = vmatprep.subr.bf16.mxu0 %v3087
    %3119 = vmatpush1.bf16.msra.mxu0 %v3086
    %3120 = vmatprep.subr.bf16.mxu0 0
    %3121 = vmatpush1.bf16.msra.mxu0 0
    %3122 = vmatprep.subr.bf16.mxu0 0
    %3123 = vmatpush1.bf16.msra.mxu0 0
    %3124 = vmatprep.subr.bf16.mxu0 0
    %3125 = vmatpush1.bf16.msra.mxu0 0
    %3126 = vmatprep.subr.bf16.mxu0 0
    %3127 = vmatpush1.bf16.msra.mxu0 0
    %3128 = vmatprep.subr.bf16.mxu0 0
    %3129 = vmatpush1.bf16.msra.mxu0 0
    %3130 = vmatprep.subr.bf16.mxu0 0
    %3131 = vmatpush1.bf16.msra.mxu0 0
    %3132 = vmatprep.subr.bf16.mxu0 0
    %3133 = vmatpush1.bf16.msra.mxu0 0
    %3134 = vmatprep.subr.bf16.mxu0 0
    %3135 = vmatpush1.bf16.msra.mxu0 0
    %3136 = vmatprep.mubr.bf16.mxu0 0
    %3137 = vmatmul.mubr.bf16.gmra.mrb[0].mxu0 %v2150
    %v3138 = vpop.f32.mrb[0].mxu0
    %v3139 = vadd.f32 0.0, %v3138
    %v3140 = vpop.f32.mrb[0].mxu0
    %v3141 = vadd.f32 0.0, %v3140
    %v3142 = vpop.f32.mrb[0].mxu0
    %v3143 = vadd.f32 0.0, %v3142
    %v3144 = vpop.f32.mrb[0].mxu0
    %v3145 = vadd.f32 0.0, %v3144
    %3146 = vmatprep.mubr.bf16.mxu0 0
    %3147 = vmatmul.mubr.bf16.gmra.mrb[0].mxu0 %v3005
    %v3148 = vpop.f32.mrb[0].mxu0
    %v3149 = vadd.f32 0.0, %v3148
    %v3150 = vpop.f32.mrb[0].mxu0
    %v3151 = vadd.f32 0.0, %v3150
    %v3152 = vpop.f32.mrb[0].mxu0
    %v3153 = vadd.f32 0.0, %v3152
    %v3154 = vpop.f32.mrb[0].mxu0
    %v3155 = vadd.f32 0.0, %v3154
    %3156 = vmatprep.mubr.bf16.mxu0 0
    %3157 = vmatmul.mubr.bf16.gmra.mrb[0].mxu0 %v3006
    %v3158 = vpop.f32.mrb[0].mxu0
    %v3159 = vadd.f32 0.0, %v3158
    %v3160 = vpop.f32.mrb[0].mxu0
    %v3161 = vadd.f32 0.0, %v3160
    %v3162 = vpop.f32.mrb[0].mxu0
    %v3163 = vpop.f32.mrb[0].mxu0
    %3164 = vdwg.mxu0
    %v3165 = vadd.f32 %v2924, %v3139
    %v3166 = vadd.f32 %v2925, %v3141
    %v3167 = vadd.f32 %v2926, %v3143
    %v3168 = vadd.f32 %v2927, %v3145
    %v3169 = vadd.f32 %v2928, %v3149
    %v3170 = vadd.f32 %v2929, %v3151
    %v3171 = vadd.f32 %v2930, %v3153
    %v3172 = vadd.f32 %v2931, %v3155
    %v3173 = vadd.f32 %v2932, %v3159
    %v3174 = vadd.f32 %v2933, %v3161
    %3175 = vmatprep.subr.bf16.mxu0 %v2832
    %3176 = vmatpush1.bf16.msra.mxu0 %v2831
    %3177 = vmatprep.subr.bf16.mxu0 %v2834
    %3178 = vmatpush1.bf16.msra.mxu0 %v2833
    %3179 = vmatprep.subr.bf16.mxu0 %v2836
    %3180 = vmatpush1.bf16.msra.mxu0 %v2835
    %3181 = vmatprep.subr.bf16.mxu0 %v2838
    %3182 = vmatpush1.bf16.msra.mxu0 %v2837
    %3183 = vmatprep.subr.bf16.mxu0 %v2840
    %3184 = vmatpush1.bf16.msra.mxu0 %v2839
    %3185 = vmatprep.subr.bf16.mxu0 %v2842
    %3186 = vmatpush1.bf16.msra.mxu0 %v2841
    %3187 = vmatprep.subr.bf16.mxu0 %v2844
    %3188 = vmatpush1.bf16.msra.mxu0 %v2843
    %3189 = vmatprep.subr.bf16.mxu0 %v2846
    %3190 = vmatpush1.bf16.msra.mxu0 %v2845
    %3191 = vmatprep.subr.bf16.mxu0 0
    %3192 = vmatpush1.bf16.msra.mxu0 0
    %3193 = vmatprep.subr.bf16.mxu0 0
    %3194 = vmatpush1.bf16.msra.mxu0 0
    %3195 = vmatprep.subr.bf16.mxu0 0
    %3196 = vmatpush1.bf16.msra.mxu0 0
    %3197 = vmatprep.subr.bf16.mxu0 0
    %3198 = vmatpush1.bf16.msra.mxu0 0
    %3199 = vmatprep.subr.bf16.mxu0 0
    %3200 = vmatpush1.bf16.msra.mxu0 0
    %3201 = vmatprep.subr.bf16.mxu0 0
    %3202 = vmatpush1.bf16.msra.mxu0 0
    %3203 = vmatprep.subr.bf16.mxu0 0
    %3204 = vmatpush1.bf16.msra.mxu0 0
    %3205 = vmatprep.subr.bf16.mxu0 0
    %3206 = vmatpush1.bf16.msra.mxu0 0
    %3207 = vmatprep.mubr.bf16.mxu0 0
    %3208 = vmatmul.mubr.bf16.gmra.mrb[0].mxu0 %v2150
    %v3209 = vpop.f32.mrb[0].mxu0
    %v3210 = vadd.f32 0.0, %v3209
    %v3211 = vpop.f32.mrb[0].mxu0
    %v3212 = vadd.f32 0.0, %v3211
    %v3213 = vpop.f32.mrb[0].mxu0
    %v3214 = vadd.f32 0.0, %v3213
    %v3215 = vpop.f32.mrb[0].mxu0
    %v3216 = vadd.f32 0.0, %v3215
    %3217 = vmatprep.mubr.bf16.mxu0 0
    %3218 = vmatmul.mubr.bf16.gmra.mrb[0].mxu0 %v3005
    %v3219 = vpop.f32.mrb[0].mxu0
    %v3220 = vadd.f32 0.0, %v3219
    %v3221 = vpop.f32.mrb[0].mxu0
    %v3222 = vadd.f32 0.0, %v3221
    %v3223 = vpop.f32.mrb[0].mxu0
    %v3224 = vadd.f32 0.0, %v3223
    %v3225 = vpop.f32.mrb[0].mxu0
    %v3226 = vadd.f32 0.0, %v3225
    %3227 = vmatprep.mubr.bf16.mxu0 0
    %3228 = vmatmul.mubr.bf16.gmra.mrb[0].mxu0 %v3006
    %v3229 = vpop.f32.mrb[0].mxu0
    %v3230 = vadd.f32 0.0, %v3229
    %v3231 = vpop.f32.mrb[0].mxu0
    %v3232 = vadd.f32 0.0, %v3231
    %v3233 = vpop.f32.mrb[0].mxu0
    %v3234 = vpop.f32.mrb[0].mxu0
    %3235 = vdwg.mxu0
    %v3236 = vadd.f32 %v2995, %v3210
    %v3237 = vadd.f32 %v2996, %v3212
    %v3238 = vadd.f32 %v2997, %v3214
    %v3239 = vadd.f32 %v2998, %v3216
    %v3240 = vadd.f32 %v2999, %v3220
    %v3241 = vadd.f32 %v3000, %v3222
    %v3242 = vadd.f32 %v3001, %v3224
    %v3243 = vadd.f32 %v3002, %v3226
    %v3244 = vadd.f32 %v3003, %v3230
    %v3245 = vadd.f32 %v3004, %v3232
    %v3246 = vpack.c.bf16 %v2146, %v2144
    %v3247 = vpack.c.bf16 %v2148, %v2148
    %3248 = vmatprep.subr.bf16.mxu0 %v3073
    %3249 = vmatpush1.bf16.msra.mxu0 %v3072
    %3250 = vmatprep.subr.bf16.mxu0 %v3075
    %3251 = vmatpush1.bf16.msra.mxu0 %v3074
    %3252 = vmatprep.subr.bf16.mxu0 %v3077
    %3253 = vmatpush1.bf16.msra.mxu0 %v3076
    %3254 = vmatprep.subr.bf16.mxu0 %v3079
    %3255 = vmatpush1.bf16.msra.mxu0 %v3078
    %3256 = vmatprep.subr.bf16.mxu0 %v3081
    %3257 = vmatpush1.bf16.msra.mxu0 %v3080
    %3258 = vmatprep.subr.bf16.mxu0 %v3083
    %3259 = vmatpush1.bf16.msra.mxu0 %v3082
    %3260 = vmatprep.subr.bf16.mxu0 %v3085
    %3261 = vmatpush1.bf16.msra.mxu0 %v3084
    %3262 = vmatprep.subr.bf16.mxu0 %v3087
    %3263 = vmatpush1.bf16.msra.mxu0 %v3086
    %3264 = vmatprep.subr.bf16.mxu0 0
    %3265 = vmatpush1.bf16.msra.mxu0 0
    %3266 = vmatprep.subr.bf16.mxu0 0
    %3267 = vmatpush1.bf16.msra.mxu0 0
    %3268 = vmatprep.subr.bf16.mxu0 0
    %3269 = vmatpush1.bf16.msra.mxu0 0
    %3270 = vmatprep.subr.bf16.mxu0 0
    %3271 = vmatpush1.bf16.msra.mxu0 0
    %3272 = vmatprep.subr.bf16.mxu0 0
    %3273 = vmatpush1.bf16.msra.mxu0 0
    %3274 = vmatprep.subr.bf16.mxu0 0
    %3275 = vmatpush1.bf16.msra.mxu0 0
    %3276 = vmatprep.subr.bf16.mxu0 0
    %3277 = vmatpush1.bf16.msra.mxu0 0
    %3278 = vmatprep.subr.bf16.mxu0 0
    %3279 = vmatpush1.bf16.msra.mxu0 0
    %3280 = vmatprep.mubr.bf16.mxu0 0
    %3281 = vmatmul.mubr.bf16.gmra.mrb[0].mxu0 %v2169
    %v3282 = vpop.f32.mrb[0].mxu0
    %v3283 = vadd.f32 0.0, %v3282
    %v3284 = vpop.f32.mrb[0].mxu0
    %v3285 = vadd.f32 0.0, %v3284
    %v3286 = vpop.f32.mrb[0].mxu0
    %v3287 = vadd.f32 0.0, %v3286
    %v3288 = vpop.f32.mrb[0].mxu0
    %v3289 = vadd.f32 0.0, %v3288
    %3290 = vmatprep.mubr.bf16.mxu0 0
    %3291 = vmatmul.mubr.bf16.gmra.mrb[0].mxu0 %v3246
    %v3292 = vpop.f32.mrb[0].mxu0
    %v3293 = vadd.f32 0.0, %v3292
    %v3294 = vpop.f32.mrb[0].mxu0
    %v3295 = vadd.f32 0.0, %v3294
    %v3296 = vpop.f32.mrb[0].mxu0
    %v3297 = vadd.f32 0.0, %v3296
    %v3298 = vpop.f32.mrb[0].mxu0
    %v3299 = vadd.f32 0.0, %v3298
    %3300 = vmatprep.mubr.bf16.mxu0 0
    %3301 = vmatmul.mubr.bf16.gmra.mrb[0].mxu0 %v3247
    %v3302 = vpop.f32.mrb[0].mxu0
    %v3303 = vadd.f32 0.0, %v3302
    %v3304 = vpop.f32.mrb[0].mxu0
    %v3305 = vadd.f32 0.0, %v3304
    %v3306 = vpop.f32.mrb[0].mxu0
    %v3307 = vpop.f32.mrb[0].mxu0
    %3308 = vdwg.mxu0
    %v3309 = vadd.f32 %v3236, %v3283
    %v3310 = vadd.f32 %v3237, %v3285
    %v3311 = vadd.f32 %v3238, %v3287
    %v3312 = vadd.f32 %v3239, %v3289
    %v3313 = vadd.f32 %v3240, %v3293
    %v3314 = vadd.f32 %v3241, %v3295
    %v3315 = vadd.f32 %v3242, %v3297
    %v3316 = vadd.f32 %v3243, %v3299
    %v3317 = vadd.f32 %v3244, %v3303
    %v3318 = vadd.f32 %v3245, %v3305
    %v3319 = vmax.f32 %v3165, %v3166
    %v3320 = vmax.f32 %v3167, %v3168
    %v3321 = vmax.f32 %v3169, %v3170
    %v3322 = vmax.f32 %v3171, %v3172
    %v3323 = vmax.f32 %v3173, %v3174
    %v3324 = vmax.f32 %v3309, %v3310
    %v3325 = vmax.f32 %v3311, %v3312
    %v3326 = vmax.f32 %v3313, %v3314
    %v3327 = vmax.f32 %v3315, %v3316
    %v3328 = vmax.f32 %v3317, %v3318
    %v3329 = vmax.f32 %v3319, %v3324
    %v3330 = vmax.f32 %v3320, %v3325
    %v3331 = vmax.f32 %v3321, %v3326
    %v3332 = vmax.f32 %v3322, %v3327
    %v3333 = vmax.f32 %v3323, %v3328
    %v3334 = vld [vmem:[%s4] sm:$0x1]
    %v3336 = vlaneseq
    %v3337 = vshrl.u32 %v3336, 7
    %v3338 = vsub.s32 0, %v3337
    %v3339 = vrot.slane %v3334, %v3338
    %v3341 = vadd.f32 %v3329, %v3339
    %v3342 = vadd.f32 %v3330, %v3339
    %v3343 = vadd.f32 %v3331, %v3339
    %v3344 = vadd.f32 %v3332, %v3339
    %v3345 = vadd.f32 %v3333, %v3339
    %v3346 = vmax.f32 %v3341, 0.0
    %v3347 = vmax.f32 %v3342, 0.0
    %v3348 = vmax.f32 %v3343, 0.0
    %v3349 = vmax.f32 %v3344, 0.0
    %v3350 = vmax.f32 %v3345, 0.0
    %v3351 = vpack.c.bf16 %v3347, %v3346
    %v3352 = vpack.c.bf16 %v3349, %v3348
    %v3353 = vpack.c.bf16 %v3350, %v3350
    %v3354 = vld [vmem:[%s5] sm:$0xf]
    %v3355 = vld [vmem:[%s5 + $0x4] sm:$0xf]
    %v3356 = vld [vmem:[%s5 + $0x8] sm:$0xf]
    %v3357 = vld [vmem:[%s5 + $0xc] sm:$0xf]
    %v3358 = vld [vmem:[%s5 + $0x10] sm:$0xf]
    %v3359 = vld [vmem:[%s5 + $0x14] sm:$0xf]
    %v3360 = vld [vmem:[%s5 + $0x18] sm:$0xf]
    %v3361 = vld [vmem:[%s5 + $0x1c] sm:$0xf]
    %v3362 = vld [vmem:[%s5 + $0x20] sm:$0xf]
    %v3363 = vld [vmem:[%s5 + $0x24] sm:$0xf]
    %v3364 = vld [vmem:[%s5 + $0x28] sm:$0xf]
    %v3365 = vld [vmem:[%s5 + $0x2c] sm:$0xf]
    %v3366 = vld [vmem:[%s5 + $0x30] sm:$0xf]
    %v3367 = vld [vmem:[%s5 + $0x34] sm:$0xf]
    %v3368 = vld [vmem:[%s5 + $0x38] sm:$0xf]
    %v3369 = vld [vmem:[%s5 + $0x3c] sm:$0xf]
    %s3370 = scalar_lea.vmem %s5, 64
    %v3371 = vld [vmem:[%s3370] sm:$0xf]
    %v3372 = vld [vmem:[%s3370 + $0x4] sm:$0xf]
    %v3373 = vld [vmem:[%s3370 + $0x8] sm:$0xf]
    %v3374 = vld [vmem:[%s3370 + $0xc] sm:$0xf]
    %v3375 = vld [vmem:[%s3370 + $0x10] sm:$0xf]
    %v3376 = vld [vmem:[%s3370 + $0x14] sm:$0xf]
    %v3377 = vld [vmem:[%s3370 + $0x18] sm:$0xf]
    %v3378 = vld [vmem:[%s3370 + $0x1c] sm:$0xf]
    %v3379 = vld [vmem:[%s3370 + $0x20] sm:$0xf]
    %v3380 = vld [vmem:[%s3370 + $0x24] sm:$0xf]
    %v3381 = vld [vmem:[%s3370 + $0x28] sm:$0xf]
    %v3382 = vld [vmem:[%s3370 + $0x2c] sm:$0xf]
    %v3383 = vld [vmem:[%s3370 + $0x30] sm:$0xf]
    %v3384 = vld [vmem:[%s3370 + $0x34] sm:$0xf]
    %v3385 = vld [vmem:[%s3370 + $0x38] sm:$0xf]
    %v3386 = vld [vmem:[%s3370 + $0x3c] sm:$0xf]
    %v3388 = vrot.slane %v3351, 4
    %v3406 = vunpack.c.l.b16 %v3371
    %v3407 = vunpack.c.l.b16 %v3372
    %v3408 = vunpack.c.l.b16 %v3373
    %v3409 = vunpack.c.l.b16 %v3374
    %v3410 = vunpack.c.l.b16 %v3375
    %v3411 = vunpack.c.l.b16 %v3376
    %v3412 = vunpack.c.l.b16 %v3377
    %v3413 = vunpack.c.l.b16 %v3378
    %v3414 = vunpack.c.l.b16 %v3379
    %v3415 = vunpack.c.l.b16 %v3380
    %v3416 = vunpack.c.l.b16 %v3381
    %v3417 = vunpack.c.l.b16 %v3382
    %v3418 = vunpack.c.l.b16 %v3383
    %v3419 = vunpack.c.l.b16 %v3384
    %v3420 = vunpack.c.l.b16 %v3385
    %v3421 = vunpack.c.l.b16 %v3386
    %v3422 = vpack.c.b16 %v3407, %v3406
    %v3423 = vpack.c.b16 %v3409, %v3408
    %v3424 = vpack.c.b16 %v3411, %v3410
    %v3425 = vpack.c.b16 %v3413, %v3412
    %v3426 = vpack.c.b16 %v3415, %v3414
    %v3427 = vpack.c.b16 %v3417, %v3416
    %v3428 = vpack.c.b16 %v3419, %v3418
    %v3429 = vpack.c.b16 %v3421, %v3420
    %3438 = vmatprep.subr.bf16.mxu0 0
    %3439 = vmatpush1.bf16.msra.mxu0 %v3422
    %3440 = vmatprep.subr.bf16.mxu0 0
    %3441 = vmatpush1.bf16.msra.mxu0 %v3423
    %3442 = vmatprep.subr.bf16.mxu0 0
    %3443 = vmatpush1.bf16.msra.mxu0 %v3424
    %3444 = vmatprep.subr.bf16.mxu0 0
    %3445 = vmatpush1.bf16.msra.mxu0 %v3425
    %3446 = vmatprep.subr.bf16.mxu0 0
    %3447 = vmatpush1.bf16.msra.mxu0 %v3426
    %3448 = vmatprep.subr.bf16.mxu0 0
    %3449 = vmatpush1.bf16.msra.mxu0 %v3427
    %3450 = vmatprep.subr.bf16.mxu0 0
    %3451 = vmatpush1.bf16.msra.mxu0 %v3428
    %3452 = vmatprep.subr.bf16.mxu0 0
    %3453 = vmatpush1.bf16.msra.mxu0 %v3429
    %3454 = vmatprep.subr.bf16.mxu0 0
    %3455 = vmatpush1.bf16.msra.mxu0 0
    %3456 = vmatprep.subr.bf16.mxu0 0
    %3457 = vmatpush1.bf16.msra.mxu0 0
    %3458 = vmatprep.subr.bf16.mxu0 0
    %3459 = vmatpush1.bf16.msra.mxu0 0
    %3460 = vmatprep.subr.bf16.mxu0 0
    %3461 = vmatpush1.bf16.msra.mxu0 0
    %3462 = vmatprep.subr.bf16.mxu0 0
    %3463 = vmatpush1.bf16.msra.mxu0 0
    %3464 = vmatprep.subr.bf16.mxu0 0
    %3465 = vmatpush1.bf16.msra.mxu0 0
    %3466 = vmatprep.subr.bf16.mxu0 0
    %3467 = vmatpush1.bf16.msra.mxu0 0
    %3468 = vmatprep.subr.bf16.mxu0 0
    %3469 = vmatpush1.bf16.msra.mxu0 0
    %3470 = vmatprep.mubr.bf16.mxu0 0
    %3471 = vmatmul.mubr.bf16.gmra.mrb[0].mxu0 %v3388
    %v3472 = vpop.f32.mrb[0].mxu0
    %v3473 = vadd.f32 0.0, %v3472
    %v3474 = vpop.f32.mrb[0].mxu0
    %v3475 = vpop.f32.mrb[0].mxu0
    %v3476 = vpop.f32.mrb[0].mxu0
    %3477 = vdwg.mxu0
    %v3494 = vunpack.c.l.b16 %v3354
    %v3495 = vunpack.c.l.b16 %v3355
    %v3496 = vunpack.c.l.b16 %v3356
    %v3497 = vunpack.c.l.b16 %v3357
    %v3498 = vunpack.c.l.b16 %v3358
    %v3499 = vunpack.c.l.b16 %v3359
    %v3500 = vunpack.c.l.b16 %v3360
    %v3501 = vunpack.c.l.b16 %v3361
    %v3502 = vunpack.c.l.b16 %v3362
    %v3503 = vunpack.c.l.b16 %v3363
    %v3504 = vunpack.c.l.b16 %v3364
    %v3505 = vunpack.c.l.b16 %v3365
    %v3506 = vunpack.c.l.b16 %v3366
    %v3507 = vunpack.c.l.b16 %v3367
    %v3508 = vunpack.c.l.b16 %v3368
    %v3509 = vunpack.c.l.b16 %v3369
    %v3510 = vpack.c.b16 %v3495, %v3494
    %v3511 = vpack.c.b16 %v3497, %v3496
    %v3512 = vpack.c.b16 %v3499, %v3498
    %v3513 = vpack.c.b16 %v3501, %v3500
    %v3514 = vpack.c.b16 %v3503, %v3502
    %v3515 = vpack.c.b16 %v3505, %v3504
    %v3516 = vpack.c.b16 %v3507, %v3506
    %v3517 = vpack.c.b16 %v3509, %v3508
    %3526 = vmatprep.subr.bf16.mxu0 0
    %3527 = vmatpush1.bf16.msra.mxu0 %v3510
    %3528 = vmatprep.subr.bf16.mxu0 0
    %3529 = vmatpush1.bf16.msra.mxu0 %v3511
    %3530 = vmatprep.subr.bf16.mxu0 0
    %3531 = vmatpush1.bf16.msra.mxu0 %v3512
    %3532 = vmatprep.subr.bf16.mxu0 0
    %3533 = vmatpush1.bf16.msra.mxu0 %v3513
    %3534 = vmatprep.subr.bf16.mxu0 0
    %3535 = vmatpush1.bf16.msra.mxu0 %v3514
    %3536 = vmatprep.subr.bf16.mxu0 0
    %3537 = vmatpush1.bf16.msra.mxu0 %v3515
    %3538 = vmatprep.subr.bf16.mxu0 0
    %3539 = vmatpush1.bf16.msra.mxu0 %v3516
    %3540 = vmatprep.subr.bf16.mxu0 0
    %3541 = vmatpush1.bf16.msra.mxu0 %v3517
    %3542 = vmatprep.subr.bf16.mxu0 0
    %3543 = vmatpush1.bf16.msra.mxu0 0
    %3544 = vmatprep.subr.bf16.mxu0 0
    %3545 = vmatpush1.bf16.msra.mxu0 0
    %3546 = vmatprep.subr.bf16.mxu0 0
    %3547 = vmatpush1.bf16.msra.mxu0 0
    %3548 = vmatprep.subr.bf16.mxu0 0
    %3549 = vmatpush1.bf16.msra.mxu0 0
    %3550 = vmatprep.subr.bf16.mxu0 0
    %3551 = vmatpush1.bf16.msra.mxu0 0
    %3552 = vmatprep.subr.bf16.mxu0 0
    %3553 = vmatpush1.bf16.msra.mxu0 0
    %3554 = vmatprep.subr.bf16.mxu0 0
    %3555 = vmatpush1.bf16.msra.mxu0 0
    %3556 = vmatprep.subr.bf16.mxu0 0
    %3557 = vmatpush1.bf16.msra.mxu0 0
    %3558 = vmatprep.mubr.bf16.mxu0 0
    %3559 = vmatmul.mubr.bf16.gmra.mrb[0].mxu0 %v3351
    %v3560 = vpop.f32.mrb[0].mxu0
    %v3561 = vadd.f32 %v3473, %v3560
    %v3562 = vpop.f32.mrb[0].mxu0
    %v3563 = vpop.f32.mrb[0].mxu0
    %v3564 = vpop.f32.mrb[0].mxu0
    %3565 = vdwg.mxu0
    %s3566 = scalar_lea.vmem %s5, 128
    %v3567 = vld [vmem:[%s3566] sm:$0xf]
    %v3568 = vld [vmem:[%s3566 + $0x4] sm:$0xf]
    %v3569 = vld [vmem:[%s3566 + $0x8] sm:$0xf]
    %v3570 = vld [vmem:[%s3566 + $0xc] sm:$0xf]
    %v3571 = vld [vmem:[%s3566 + $0x10] sm:$0xf]
    %v3572 = vld [vmem:[%s3566 + $0x14] sm:$0xf]
    %v3573 = vld [vmem:[%s3566 + $0x18] sm:$0xf]
    %v3574 = vld [vmem:[%s3566 + $0x1c] sm:$0xf]
    %v3575 = vld [vmem:[%s3566 + $0x20] sm:$0xf]
    %v3576 = vld [vmem:[%s3566 + $0x24] sm:$0xf]
    %v3577 = vld [vmem:[%s3566 + $0x28] sm:$0xf]
    %v3578 = vld [vmem:[%s3566 + $0x2c] sm:$0xf]
    %v3579 = vld [vmem:[%s3566 + $0x30] sm:$0xf]
    %v3580 = vld [vmem:[%s3566 + $0x34] sm:$0xf]
    %v3581 = vld [vmem:[%s3566 + $0x38] sm:$0xf]
    %v3582 = vld [vmem:[%s3566 + $0x3c] sm:$0xf]
    %v3599 = vunpack.c.l.b16 %v3567
    %v3600 = vunpack.c.l.b16 %v3568
    %v3601 = vunpack.c.l.b16 %v3569
    %v3602 = vunpack.c.l.b16 %v3570
    %v3603 = vunpack.c.l.b16 %v3571
    %v3604 = vunpack.c.l.b16 %v3572
    %v3605 = vunpack.c.l.b16 %v3573
    %v3606 = vunpack.c.l.b16 %v3574
    %v3607 = vunpack.c.l.b16 %v3575
    %v3608 = vunpack.c.l.b16 %v3576
    %v3609 = vunpack.c.l.b16 %v3577
    %v3610 = vunpack.c.l.b16 %v3578
    %v3611 = vunpack.c.l.b16 %v3579
    %v3612 = vunpack.c.l.b16 %v3580
    %v3613 = vunpack.c.l.b16 %v3581
    %v3614 = vunpack.c.l.b16 %v3582
    %v3615 = vpack.c.b16 %v3600, %v3599
    %v3616 = vpack.c.b16 %v3602, %v3601
    %v3617 = vpack.c.b16 %v3604, %v3603
    %v3618 = vpack.c.b16 %v3606, %v3605
    %v3619 = vpack.c.b16 %v3608, %v3607
    %v3620 = vpack.c.b16 %v3610, %v3609
    %v3621 = vpack.c.b16 %v3612, %v3611
    %v3622 = vpack.c.b16 %v3614, %v3613
    %3631 = vmatprep.subr.bf16.mxu0 0
    %3632 = vmatpush1.bf16.msra.mxu0 %v3615
    %3633 = vmatprep.subr.bf16.mxu0 0
    %3634 = vmatpush1.bf16.msra.mxu0 %v3616
    %3635 = vmatprep.subr.bf16.mxu0 0
    %3636 = vmatpush1.bf16.msra.mxu0 %v3617
    %3637 = vmatprep.subr.bf16.mxu0 0
    %3638 = vmatpush1.bf16.msra.mxu0 %v3618
    %3639 = vmatprep.subr.bf16.mxu0 0
    %3640 = vmatpush1.bf16.msra.mxu0 %v3619
    %3641 = vmatprep.subr.bf16.mxu0 0
    %3642 = vmatpush1.bf16.msra.mxu0 %v3620
    %3643 = vmatprep.subr.bf16.mxu0 0
    %3644 = vmatpush1.bf16.msra.mxu0 %v3621
    %3645 = vmatprep.subr.bf16.mxu0 0
    %3646 = vmatpush1.bf16.msra.mxu0 %v3622
    %3647 = vmatprep.subr.bf16.mxu0 0
    %3648 = vmatpush1.bf16.msra.mxu0 0
    %3649 = vmatprep.subr.bf16.mxu0 0
    %3650 = vmatpush1.bf16.msra.mxu0 0
    %3651 = vmatprep.subr.bf16.mxu0 0
    %3652 = vmatpush1.bf16.msra.mxu0 0
    %3653 = vmatprep.subr.bf16.mxu0 0
    %3654 = vmatpush1.bf16.msra.mxu0 0
    %3655 = vmatprep.subr.bf16.mxu0 0
    %3656 = vmatpush1.bf16.msra.mxu0 0
    %3657 = vmatprep.subr.bf16.mxu0 0
    %3658 = vmatpush1.bf16.msra.mxu0 0
    %3659 = vmatprep.subr.bf16.mxu0 0
    %3660 = vmatpush1.bf16.msra.mxu0 0
    %3661 = vmatprep.subr.bf16.mxu0 0
    %3662 = vmatpush1.bf16.msra.mxu0 0
    %3663 = vmatprep.mubr.bf16.mxu0 0
    %3664 = vmatmul.mubr.bf16.gmra.mrb[0].mxu0 %v3352
    %v3665 = vpop.f32.mrb[0].mxu0
    %v3666 = vadd.f32 0.0, %v3665
    %v3667 = vpop.f32.mrb[0].mxu0
    %v3668 = vpop.f32.mrb[0].mxu0
    %v3669 = vpop.f32.mrb[0].mxu0
    %3670 = vdwg.mxu0
    %v3671 = vadd.f32 %v3561, %v3666
    %s3672 = scalar_lea.vmem %s5, 192
    %v3673 = vld [vmem:[%s3672] sm:$0xf]
    %v3674 = vld [vmem:[%s3672 + $0x4] sm:$0xf]
    %v3675 = vld [vmem:[%s3672 + $0x8] sm:$0xf]
    %v3676 = vld [vmem:[%s3672 + $0xc] sm:$0xf]
    %v3677 = vld [vmem:[%s3672 + $0x10] sm:$0xf]
    %v3678 = vld [vmem:[%s3672 + $0x14] sm:$0xf]
    %v3679 = vld [vmem:[%s3672 + $0x18] sm:$0xf]
    %v3680 = vld [vmem:[%s3672 + $0x1c] sm:$0xf]
    %v3681 = vld [vmem:[%s3672 + $0x20] sm:$0xf]
    %v3682 = vld [vmem:[%s3672 + $0x24] sm:$0xf]
    %v3683 = vld [vmem:[%s3672 + $0x28] sm:$0xf]
    %v3684 = vld [vmem:[%s3672 + $0x2c] sm:$0xf]
    %v3685 = vld [vmem:[%s3672 + $0x30] sm:$0xf]
    %v3686 = vld [vmem:[%s3672 + $0x34] sm:$0xf]
    %v3687 = vld [vmem:[%s3672 + $0x38] sm:$0xf]
    %v3688 = vld [vmem:[%s3672 + $0x3c] sm:$0xf]
    %v3690 = vrot.slane %v3352, 4
    %v3708 = vunpack.c.l.b16 %v3673
    %v3709 = vunpack.c.l.b16 %v3674
    %v3710 = vunpack.c.l.b16 %v3675
    %v3711 = vunpack.c.l.b16 %v3676
    %v3712 = vunpack.c.l.b16 %v3677
    %v3713 = vunpack.c.l.b16 %v3678
    %v3714 = vunpack.c.l.b16 %v3679
    %v3715 = vunpack.c.l.b16 %v3680
    %v3716 = vunpack.c.l.b16 %v3681
    %v3717 = vunpack.c.l.b16 %v3682
    %v3718 = vunpack.c.l.b16 %v3683
    %v3719 = vunpack.c.l.b16 %v3684
    %v3720 = vunpack.c.l.b16 %v3685
    %v3721 = vunpack.c.l.b16 %v3686
    %v3722 = vunpack.c.l.b16 %v3687
    %v3723 = vunpack.c.l.b16 %v3688
    %v3724 = vpack.c.b16 %v3709, %v3708
    %v3725 = vpack.c.b16 %v3711, %v3710
    %v3726 = vpack.c.b16 %v3713, %v3712
    %v3727 = vpack.c.b16 %v3715, %v3714
    %v3728 = vpack.c.b16 %v3717, %v3716
    %v3729 = vpack.c.b16 %v3719, %v3718
    %v3730 = vpack.c.b16 %v3721, %v3720
    %v3731 = vpack.c.b16 %v3723, %v3722
    %3740 = vmatprep.subr.bf16.mxu0 0
    %3741 = vmatpush1.bf16.msra.mxu0 %v3724
    %3742 = vmatprep.subr.bf16.mxu0 0
    %3743 = vmatpush1.bf16.msra.mxu0 %v3725
    %3744 = vmatprep.subr.bf16.mxu0 0
    %3745 = vmatpush1.bf16.msra.mxu0 %v3726
    %3746 = vmatprep.subr.bf16.mxu0 0
    %3747 = vmatpush1.bf16.msra.mxu0 %v3727
    %3748 = vmatprep.subr.bf16.mxu0 0
    %3749 = vmatpush1.bf16.msra.mxu0 %v3728
    %3750 = vmatprep.subr.bf16.mxu0 0
    %3751 = vmatpush1.bf16.msra.mxu0 %v3729
    %3752 = vmatprep.subr.bf16.mxu0 0
    %3753 = vmatpush1.bf16.msra.mxu0 %v3730
    %3754 = vmatprep.subr.bf16.mxu0 0
    %3755 = vmatpush1.bf16.msra.mxu0 %v3731
    %3756 = vmatprep.subr.bf16.mxu0 0
    %3757 = vmatpush1.bf16.msra.mxu0 0
    %3758 = vmatprep.subr.bf16.mxu0 0
    %3759 = vmatpush1.bf16.msra.mxu0 0
    %3760 = vmatprep.subr.bf16.mxu0 0
    %3761 = vmatpush1.bf16.msra.mxu0 0
    %3762 = vmatprep.subr.bf16.mxu0 0
    %3763 = vmatpush1.bf16.msra.mxu0 0
    %3764 = vmatprep.subr.bf16.mxu0 0
    %3765 = vmatpush1.bf16.msra.mxu0 0
    %3766 = vmatprep.subr.bf16.mxu0 0
    %3767 = vmatpush1.bf16.msra.mxu0 0
    %3768 = vmatprep.subr.bf16.mxu0 0
    %3769 = vmatpush1.bf16.msra.mxu0 0
    %3770 = vmatprep.subr.bf16.mxu0 0
    %3771 = vmatpush1.bf16.msra.mxu0 0
    %3772 = vmatprep.mubr.bf16.mxu0 0
    %3773 = vmatmul.mubr.bf16.gmra.mrb[0].mxu0 %v3690
    %v3774 = vpop.f32.mrb[0].mxu0
    %v3775 = vadd.f32 0.0, %v3774
    %v3776 = vpop.f32.mrb[0].mxu0
    %v3777 = vpop.f32.mrb[0].mxu0
    %v3778 = vpop.f32.mrb[0].mxu0
    %3779 = vdwg.mxu0
    %v3780 = vadd.f32 %v3671, %v3775
    %s3781 = scalar_lea.vmem %s5, 256
    %v3782 = vld [vmem:[%s3781] sm:$0xf]
    %v3783 = vld [vmem:[%s3781 + $0x4] sm:$0xf]
    %v3784 = vld [vmem:[%s3781 + $0x8] sm:$0xf]
    %v3785 = vld [vmem:[%s3781 + $0xc] sm:$0xf]
    %v3786 = vld [vmem:[%s3781 + $0x10] sm:$0xf]
    %v3787 = vld [vmem:[%s3781 + $0x14] sm:$0xf]
    %v3788 = vld [vmem:[%s3781 + $0x18] sm:$0xf]
    %v3789 = vld [vmem:[%s3781 + $0x1c] sm:$0xf]
    %v3790 = vld [vmem:[%s3781 + $0x20] sm:$0xf]
    %v3791 = vld [vmem:[%s3781 + $0x24] sm:$0xf]
    %v3792 = vld [vmem:[%s3781 + $0x28] sm:$0xf]
    %v3793 = vld [vmem:[%s3781 + $0x2c] sm:$0xf]
    %v3794 = vld [vmem:[%s3781 + $0x30] sm:$0xf]
    %v3795 = vld [vmem:[%s3781 + $0x34] sm:$0xf]
    %v3796 = vld [vmem:[%s3781 + $0x38] sm:$0xf]
    %v3797 = vld [vmem:[%s3781 + $0x3c] sm:$0xf]
    %v3814 = vunpack.c.l.b16 %v3782
    %v3815 = vunpack.c.l.b16 %v3783
    %v3816 = vunpack.c.l.b16 %v3784
    %v3817 = vunpack.c.l.b16 %v3785
    %v3818 = vunpack.c.l.b16 %v3786
    %v3819 = vunpack.c.l.b16 %v3787
    %v3820 = vunpack.c.l.b16 %v3788
    %v3821 = vunpack.c.l.b16 %v3789
    %v3822 = vunpack.c.l.b16 %v3790
    %v3823 = vunpack.c.l.b16 %v3791
    %v3824 = vunpack.c.l.b16 %v3792
    %v3825 = vunpack.c.l.b16 %v3793
    %v3826 = vunpack.c.l.b16 %v3794
    %v3827 = vunpack.c.l.b16 %v3795
    %v3828 = vunpack.c.l.b16 %v3796
    %v3829 = vunpack.c.l.b16 %v3797
    %v3830 = vpack.c.b16 %v3815, %v3814
    %v3831 = vpack.c.b16 %v3817, %v3816
    %v3832 = vpack.c.b16 %v3819, %v3818
    %v3833 = vpack.c.b16 %v3821, %v3820
    %v3834 = vpack.c.b16 %v3823, %v3822
    %v3835 = vpack.c.b16 %v3825, %v3824
    %v3836 = vpack.c.b16 %v3827, %v3826
    %v3837 = vpack.c.b16 %v3829, %v3828
    %3846 = vmatprep.subr.bf16.mxu0 0
    %3847 = vmatpush1.bf16.msra.mxu0 %v3830
    %3848 = vmatprep.subr.bf16.mxu0 0
    %3849 = vmatpush1.bf16.msra.mxu0 %v3831
    %3850 = vmatprep.subr.bf16.mxu0 0
    %3851 = vmatpush1.bf16.msra.mxu0 %v3832
    %3852 = vmatprep.subr.bf16.mxu0 0
    %3853 = vmatpush1.bf16.msra.mxu0 %v3833
    %3854 = vmatprep.subr.bf16.mxu0 0
    %3855 = vmatpush1.bf16.msra.mxu0 %v3834
    %3856 = vmatprep.subr.bf16.mxu0 0
    %3857 = vmatpush1.bf16.msra.mxu0 %v3835
    %3858 = vmatprep.subr.bf16.mxu0 0
    %3859 = vmatpush1.bf16.msra.mxu0 %v3836
    %3860 = vmatprep.subr.bf16.mxu0 0
    %3861 = vmatpush1.bf16.msra.mxu0 %v3837
    %3862 = vmatprep.subr.bf16.mxu0 0
    %3863 = vmatpush1.bf16.msra.mxu0 0
    %3864 = vmatprep.subr.bf16.mxu0 0
    %3865 = vmatpush1.bf16.msra.mxu0 0
    %3866 = vmatprep.subr.bf16.mxu0 0
    %3867 = vmatpush1.bf16.msra.mxu0 0
    %3868 = vmatprep.subr.bf16.mxu0 0
    %3869 = vmatpush1.bf16.msra.mxu0 0
    %3870 = vmatprep.subr.bf16.mxu0 0
    %3871 = vmatpush1.bf16.msra.mxu0 0
    %3872 = vmatprep.subr.bf16.mxu0 0
    %3873 = vmatpush1.bf16.msra.mxu0 0
    %3874 = vmatprep.subr.bf16.mxu0 0
    %3875 = vmatpush1.bf16.msra.mxu0 0
    %3876 = vmatprep.subr.bf16.mxu0 0
    %3877 = vmatpush1.bf16.msra.mxu0 0
    %3878 = vmatprep.mubr.bf16.mxu0 0
    %3879 = vmatmul.mubr.bf16.gmra.mrb[0].mxu0 %v3353
    %v3880 = vpop.f32.mrb[0].mxu0
    %v3881 = vadd.f32 0.0, %v3880
    %v3882 = vpop.f32.mrb[0].mxu0
    %v3883 = vpop.f32.mrb[0].mxu0
    %v3884 = vpop.f32.mrb[0].mxu0
    %3885 = vdwg.mxu0
    %v3886 = vadd.f32 %v3780, %v3881
    %v3887 = vld [vmem:[%s6] sm:$0x1]
    %v3889 = vlaneseq
    %v3890 = vshrl.u32 %v3889, 7
    %v3891 = vsub.s32 0, %v3890
    %v3892 = vrot.slane %v3887, %v3891
    %v3894 = vadd.f32 %v3886, %v3892
    %v3895 = vmax.f32 %v3894, 0.0
    %v3896 = vpack.c.bf16 %v3895, %v3895
    %v3897 = vld [vmem:[%s7] sm:$0xf]
    %v3898 = vld [vmem:[%s7 + $0x4] sm:$0xf]
    %v3899 = vld [vmem:[%s7 + $0x8] sm:$0xf]
    %v3900 = vld [vmem:[%s7 + $0xc] sm:$0xf]
    %v3901 = vld [vmem:[%s7 + $0x10] sm:$0xf]
    %v3902 = vld [vmem:[%s7 + $0x14] sm:$0xf]
    %v3903 = vld [vmem:[%s7 + $0x18] sm:$0xf]
    %v3904 = vld [vmem:[%s7 + $0x1c] sm:$0xf]
    %v3905 = vld [vmem:[%s7 + $0x20] sm:$0xf]
    %v3906 = vld [vmem:[%s7 + $0x24] sm:$0xf]
    %v3907 = vld [vmem:[%s7 + $0x28] sm:$0xf]
    %v3908 = vld [vmem:[%s7 + $0x2c] sm:$0xf]
    %v3909 = vld [vmem:[%s7 + $0x30] sm:$0xf]
    %v3910 = vld [vmem:[%s7 + $0x34] sm:$0xf]
    %v3911 = vld [vmem:[%s7 + $0x38] sm:$0xf]
    %v3912 = vld [vmem:[%s7 + $0x3c] sm:$0xf]
    %v3913 = vld [vmem:[%s8] sm:$0x1]
    %v3915 = vlaneseq
    %v3916 = vshrl.u32 %v3915, 7
    %v3917 = vsub.s32 0, %v3916
    %v3918 = vrot.slane %v3913, %v3917
    %v3936 = vunpack.c.l.b16 %v3897
    %v3937 = vunpack.c.l.b16 %v3898
    %v3938 = vunpack.c.l.b16 %v3899
    %v3939 = vunpack.c.l.b16 %v3900
    %v3940 = vunpack.c.l.b16 %v3901
    %v3941 = vunpack.c.l.b16 %v3902
    %v3942 = vunpack.c.l.b16 %v3903
    %v3943 = vunpack.c.l.b16 %v3904
    %v3944 = vunpack.c.l.b16 %v3905
    %v3945 = vunpack.c.l.b16 %v3906
    %v3946 = vunpack.c.l.b16 %v3907
    %v3947 = vunpack.c.l.b16 %v3908
    %v3948 = vunpack.c.l.b16 %v3909
    %v3949 = vunpack.c.l.b16 %v3910
    %v3950 = vunpack.c.l.b16 %v3911
    %v3951 = vunpack.c.l.b16 %v3912
    %v3952 = vpack.c.b16 %v3937, %v3936
    %v3953 = vpack.c.b16 %v3939, %v3938
    %v3954 = vpack.c.b16 %v3941, %v3940
    %v3955 = vpack.c.b16 %v3943, %v3942
    %v3956 = vpack.c.b16 %v3945, %v3944
    %v3957 = vpack.c.b16 %v3947, %v3946
    %v3958 = vpack.c.b16 %v3949, %v3948
    %v3959 = vpack.c.b16 %v3951, %v3950
    %3968 = vmatprep.subr.bf16.mxu0 0
    %3969 = vmatpush1.bf16.msra.mxu0 %v3952
    %3970 = vmatprep.subr.bf16.mxu0 0
    %3971 = vmatpush1.bf16.msra.mxu0 %v3953
    %3972 = vmatprep.subr.bf16.mxu0 0
    %3973 = vmatpush1.bf16.msra.mxu0 %v3954
    %3974 = vmatprep.subr.bf16.mxu0 0
    %3975 = vmatpush1.bf16.msra.mxu0 %v3955
    %3976 = vmatprep.subr.bf16.mxu0 0
    %3977 = vmatpush1.bf16.msra.mxu0 %v3956
    %3978 = vmatprep.subr.bf16.mxu0 0
    %3979 = vmatpush1.bf16.msra.mxu0 %v3957
    %3980 = vmatprep.subr.bf16.mxu0 0
    %3981 = vmatpush1.bf16.msra.mxu0 %v3958
    %3982 = vmatprep.subr.bf16.mxu0 0
    %3983 = vmatpush1.bf16.msra.mxu0 %v3959
    %3984 = vmatprep.subr.bf16.mxu0 0
    %3985 = vmatpush1.bf16.msra.mxu0 0
    %3986 = vmatprep.subr.bf16.mxu0 0
    %3987 = vmatpush1.bf16.msra.mxu0 0
    %3988 = vmatprep.subr.bf16.mxu0 0
    %3989 = vmatpush1.bf16.msra.mxu0 0
    %3990 = vmatprep.subr.bf16.mxu0 0
    %3991 = vmatpush1.bf16.msra.mxu0 0
    %3992 = vmatprep.subr.bf16.mxu0 0
    %3993 = vmatpush1.bf16.msra.mxu0 0
    %3994 = vmatprep.subr.bf16.mxu0 0
    %3995 = vmatpush1.bf16.msra.mxu0 0
    %3996 = vmatprep.subr.bf16.mxu0 0
    %3997 = vmatpush1.bf16.msra.mxu0 0
    %3998 = vmatprep.subr.bf16.mxu0 0
    %3999 = vmatpush1.bf16.msra.mxu0 0
    %4000 = vmatprep.mubr.bf16.mxu0 0
    %4001 = vmatmul.mubr.bf16.gmra.mrb[0].mxu0 %v3896
    %v4002 = vpop.f32.mrb[0].mxu0
    %v4003 = vadd.f32 %v3918, %v4002
    %v4004 = vpop.f32.mrb[0].mxu0
    %v4005 = vpop.f32.mrb[0].mxu0
    %v4006 = vpop.f32.mrb[0].mxu0
    %4007 = vdwg.mxu0
    %v4008 = vmax.f32 %v4003, 0.0
    %v4009 = vpack.c.bf16 %v4008, %v4008
    %v4010 = vld [vmem:[#allocation2] sm:$0xf]
    %v4011 = vld [vmem:[#allocation2 + $0x4] sm:$0xf]
    %v4012 = vld [vmem:[#allocation2 + $0x8] sm:$0xf]
    %v4013 = vld [vmem:[#allocation2 + $0xc] sm:$0xf]
    %v4014 = vld [vmem:[#allocation2 + $0x10] sm:$0xf]
    %v4015 = vld [vmem:[#allocation2 + $0x14] sm:$0xf]
    %v4016 = vld [vmem:[#allocation2 + $0x18] sm:$0xf]
    %v4017 = vld [vmem:[#allocation2 + $0x1c] sm:$0xf]
    %v4018 = vld [vmem:[#allocation2 + $0x20] sm:$0xf]
    %v4019 = vld [vmem:[#allocation2 + $0x24] sm:$0xf]
    %v4020 = vld [vmem:[#allocation2 + $0x28] sm:$0xf]
    %v4021 = vld [vmem:[#allocation2 + $0x2c] sm:$0xf]
    %v4022 = vld [vmem:[#allocation2 + $0x30] sm:$0xf]
    %v4023 = vld [vmem:[#allocation2 + $0x34] sm:$0xf]
    %v4024 = vld [vmem:[#allocation2 + $0x38] sm:$0xf]
    %v4025 = vld [vmem:[#allocation2 + $0x3c] sm:$0xf]
    %v4026 = vld [vmem:[%s10] sm:$0x1]
    %v4028 = vlaneseq
    %v4029 = vshrl.u32 %v4028, 7
    %v4030 = vsub.s32 0, %v4029
    %v4031 = vrot.slane %v4026, %v4030
    %v4049 = vunpack.c.l.b16 %v4010
    %v4050 = vunpack.c.l.b16 %v4011
    %v4051 = vunpack.c.l.b16 %v4012
    %v4052 = vunpack.c.l.b16 %v4013
    %v4053 = vunpack.c.l.b16 %v4014
    %v4054 = vunpack.c.l.b16 %v4015
    %v4055 = vunpack.c.l.b16 %v4016
    %v4056 = vunpack.c.l.b16 %v4017
    %v4057 = vunpack.c.l.b16 %v4018
    %v4058 = vunpack.c.l.b16 %v4019
    %v4059 = vunpack.c.l.b16 %v4020
    %v4060 = vunpack.c.l.b16 %v4021
    %v4061 = vunpack.c.l.b16 %v4022
    %v4062 = vunpack.c.l.b16 %v4023
    %v4063 = vunpack.c.l.b16 %v4024
    %v4064 = vunpack.c.l.b16 %v4025
    %v4065 = vpack.c.b16 %v4050, %v4049
    %v4066 = vpack.c.b16 %v4052, %v4051
    %v4067 = vpack.c.b16 %v4054, %v4053
    %v4068 = vpack.c.b16 %v4056, %v4055
    %v4069 = vpack.c.b16 %v4058, %v4057
    %v4070 = vpack.c.b16 %v4060, %v4059
    %v4071 = vpack.c.b16 %v4062, %v4061
    %v4072 = vpack.c.b16 %v4064, %v4063
    %4081 = vmatprep.subr.bf16.mxu0 0
    %4082 = vmatpush1.bf16.msra.mxu0 %v4065
    %4083 = vmatprep.subr.bf16.mxu0 0
    %4084 = vmatpush1.bf16.msra.mxu0 %v4066
    %4085 = vmatprep.subr.bf16.mxu0 0
    %4086 = vmatpush1.bf16.msra.mxu0 %v4067
    %4087 = vmatprep.subr.bf16.mxu0 0
    %4088 = vmatpush1.bf16.msra.mxu0 %v4068
    %4089 = vmatprep.subr.bf16.mxu0 0
    %4090 = vmatpush1.bf16.msra.mxu0 %v4069
    %4091 = vmatprep.subr.bf16.mxu0 0
    %4092 = vmatpush1.bf16.msra.mxu0 %v4070
    %4093 = vmatprep.subr.bf16.mxu0 0
    %4094 = vmatpush1.bf16.msra.mxu0 %v4071
    %4095 = vmatprep.subr.bf16.mxu0 0
    %4096 = vmatpush1.bf16.msra.mxu0 %v4072
    %4097 = vmatprep.subr.bf16.mxu0 0
    %4098 = vmatpush1.bf16.msra.mxu0 0
    %4099 = vmatprep.subr.bf16.mxu0 0
    %4100 = vmatpush1.bf16.msra.mxu0 0
    %4101 = vmatprep.subr.bf16.mxu0 0
    %4102 = vmatpush1.bf16.msra.mxu0 0
    %4103 = vmatprep.subr.bf16.mxu0 0
    %4104 = vmatpush1.bf16.msra.mxu0 0
    %4105 = vmatprep.subr.bf16.mxu0 0
    %4106 = vmatpush1.bf16.msra.mxu0 0
    %4107 = vmatprep.subr.bf16.mxu0 0
    %4108 = vmatpush1.bf16.msra.mxu0 0
    %4109 = vmatprep.subr.bf16.mxu0 0
    %4110 = vmatpush1.bf16.msra.mxu0 0
    %4111 = vmatprep.subr.bf16.mxu0 0
    %4112 = vmatpush1.bf16.msra.mxu0 0
    %4113 = vmatprep.mubr.bf16.mxu0 0
    %4114 = vmatmul.mubr.bf16.gmra.mrb[0].mxu0 %v4009
    %v4115 = vpop.f32.mrb[0].mxu0
    %v4116 = vadd.f32 %v4031, %v4115
    %v4117 = vpop.f32.mrb[0].mxu0
    %v4118 = vpop.f32.mrb[0].mxu0
    %v4119 = vpop.f32.mrb[0].mxu0
    %4120 = vdwg.mxu0
    %4121 = vst [vmem:[%s11] sm:$0xff] %v4116
    // Predicated region
    $region50: #{lenet_forward.1} parent=1 // pred_check
      _
    $region51: #{lenet_forward.1} parent=1 // pred_check_branch
      %4123 = sbr.rel (0) target = $region53
    $region52: #{lenet_forward.1} parent=1 // pred_region
      _
    $region53: #{lenet_forward.1} parent=1 // pred_fallthru
      _
    // Predicated region
    $region54: #{lenet_forward.1} parent=1 // pred_check
      _
    $region55: #{lenet_forward.1} parent=1 // pred_check_branch
      %4125 = sbr.rel (0) target = $region57
    $region56: #{lenet_forward.1} parent=1 // pred_region
      _
    $region57: #{lenet_forward.1} parent=1 // pred_fallthru
      _
    %4126 = vsyncpa [#allocation3], 1

</llo_original>
